<compile_context>
chip_gen: v6e
topology: v6e:2x2x1
jax: 0.10.0
libtpu: 0.0.40
codegen_flags: <defaults>
</compile_context>

<pallas_src>
import functools
import math

import jax
import jax.numpy as jnp
from jax.experimental import pallas as pl
from jax.experimental.pallas import tpu as pltpu


def _round_up(n, m):
    return ((n + m - 1) // m) * m


# --------------------------------------------------------------------------
# Pallas kernel: fused 3-layer MLP + LeakyReLU(0.2) + Sigmoid.
# --------------------------------------------------------------------------
def _disc_mlp_kernel(img_ref, lab_ref, w1_ref, bias1_ref,
                     w2_ref, b2_ref, w3_ref, b3_ref, o_ref):
    # Layer 1: Linear(d_img -> 512). bf16 operands (cast in-kernel), f32 acc.
    x = img_ref[...].astype(jnp.bfloat16)
    h1 = jnp.dot(x, w1_ref[...], preferred_element_type=jnp.float32)

    # Per-row layer-1 bias = one-hot(label) @ bias_table (replaces the
    # zero-padded embedding matmul and the b1 add).
    tb = lab_ref.shape[0]
    onehot = (lab_ref[...] ==
              jax.lax.broadcasted_iota(jnp.int32, (tb, 16), 1)).astype(jnp.float32)
    h1 = h1 + jnp.dot(onehot, bias1_ref[...], preferred_element_type=jnp.float32)
    h1 = jnp.maximum(h1, 0.2 * h1)                      # LeakyReLU(0.2)

    # Layer 2: Linear(512 -> 256) + LeakyReLU(0.2)
    h2 = jnp.dot(h1.astype(jnp.bfloat16), w2_ref[...],
                 preferred_element_type=jnp.float32) + b2_ref[...]
    h2 = jnp.maximum(h2, 0.2 * h2)

    # Layer 3: Linear(256 -> 1), padded to 128 lanes for a lane-dense store.
    h3 = jnp.dot(h2.astype(jnp.bfloat16), w3_ref[...],
                 preferred_element_type=jnp.float32) + b3_ref[...]
    o_ref[...] = jax.nn.sigmoid(h3).astype(o_ref.dtype)


# --------------------------------------------------------------------------
# One-time parameter preparation (padding / folding / bf16 cast hoisted).
# --------------------------------------------------------------------------
def prepare_params(params, img_shape):
    d_img = math.prod(img_shape)
    Dpi = _round_up(d_img, 128)

    w1 = params["w1"].astype(jnp.float32)               # (d_img + 10, 512)
    w1_img = w1[:d_img].astype(jnp.bfloat16)
    if Dpi != d_img:
        w1_img = jnp.pad(w1_img, ((0, Dpi - d_img), (0, 0)))

    # Fold the label embedding + b1 into a tiny per-class bias table:
    #   bias1[c] = embed[c] @ w1[d_img:] + b1   (10 classes, padded to 16 rows)
    bias_rows = (params["embed"].astype(jnp.float32) @ w1[d_img:]
                 + params["b1"].astype(jnp.float32))
    bias1 = jnp.zeros((16, 512), jnp.float32).at[:10].set(bias_rows)

    w2 = params["w2"].astype(jnp.bfloat16)               # (512, 256)
    b2 = params["b2"].reshape(1, 256).astype(jnp.float32)
    w3 = jnp.zeros((256, 128), jnp.bfloat16).at[:, :1].set(
        params["w3"].astype(jnp.bfloat16))
    b3 = jnp.zeros((1, 128), jnp.float32).at[:, :1].set(
        params["b3"].reshape(1, 1).astype(jnp.float32))

    return {"w1_img": w1_img, "bias1": bias1,
            "w2": w2, "b2": b2, "w3": w3, "b3": b3}


# --------------------------------------------------------------------------
# VMEM budgeting helpers.
# --------------------------------------------------------------------------
def _vmem_cap_bytes():
    try:
        return int(0.75 * pltpu.get_tpu_info().vmem_capacity_bytes)
    except Exception:
        return 48 << 20            # conservative (v7x: 64 MiB / TensorCore)


def _vmem_estimate(tb, dpi, weight_buffers):
    bf16, f32 = 2, 4
    # img / labels / output tiles (double-buffered by the pipeline)
    tiles = 2 * (tb * dpi * f32 + tb * 128 * f32 + tb * 128 * bf16)
    weights = weight_buffers * ((dpi * 512 + 512 * 256 + 256 * 128) * bf16
                                + (16 * 512 + 8 * 256 + 8 * 128) * f32)
    # kernel intermediates: bf16 img cast, h1/h2 (f32 + bf16 copies), h3, onehot
    interm = tb * (dpi * bf16 + 512 * (f32 + bf16) + 256 * (f32 + bf16)
                   + 128 * f32 + 16 * f32)
    return tiles + weights + interm + (2 << 20)


# --------------------------------------------------------------------------
# Forward wrapper.
# --------------------------------------------------------------------------
@functools.partial(jax.jit, static_argnames=("img_shape", "single_buffer_weights"))
def _forward_impl(img, labels, prepared, img_shape, single_buffer_weights):
    B = img.shape[0]
    d_img = math.prod(img_shape)
    Dpi = _round_up(d_img, 128)

    # Glue: reshape only (no cast, no batch pad). Pad tail K columns only if
    # d_img is not a 128 multiple (garbage K columns would corrupt the dot).
    img_flat = img.reshape(B, d_img)
    if Dpi != d_img:
        img_flat = jnp.pad(img_flat, ((0, 0), (0, Dpi - d_img)))
    lab2d = labels.reshape(B, 1).astype(jnp.int32)

    # Batch tile: multiple of 16 (bf16 sublane packing); >= 2 grid steps when
    # B > 256 so both v7x TensorCores get work; 512 for very large batches.
    B16 = _round_up(B, 16)
    if B16 <= 256:
        TB = B16
    elif B16 < 1024:
        TB = 256
    else:
        TB = 512

    cap = _vmem_cap_bytes()
    while TB > 16 and _vmem_estimate(TB, Dpi, 2) > cap:
        TB = max(16, _round_up(TB // 2, 16))

    grid = (pl.cdiv(B, TB),)
    weight_buffers = 1 if single_buffer_weights else 2
    vmem_bytes = int(min(max(_vmem_estimate(TB, Dpi, weight_buffers), 32 << 20),
                         cap))

    batch_tile = lambda i: (i, 0)        # moves with the grid
    res_map = lambda i: (0, 0)           # weights stay resident in VMEM

    def resident(shape):
        if single_buffer_weights:
            return pl.BlockSpec(shape, res_map, pipeline_mode=pl.Buffered(1))
        return pl.BlockSpec(shape, res_map)

    flops = 2 * B * (Dpi * 512 + 16 * 512 + 512 * 256 + 256 * 128)
    bytes_accessed = (B * Dpi * img.dtype.itemsize + B * 4 + B * 128 * 2
                      + (Dpi * 512 + 512 * 256 + 256 * 128) * 2
                      + (16 * 512 + 256 + 128) * 4)
    cost = pl.CostEstimate(flops=flops, transcendentals=B * 128,
                           bytes_accessed=bytes_accessed)

    out_pad = pl.pallas_call(
        _disc_mlp_kernel,
        out_shape=jax.ShapeDtypeStruct((B, 128), jnp.bfloat16),
        grid=grid,
        in_specs=[
            pl.BlockSpec((TB, Dpi), batch_tile),    # image tile (stored dtype)
            pl.BlockSpec((TB, 1), batch_tile),      # labels tile (int32)
            resident((Dpi, 512)),                   # w1 (image part, bf16)
            resident((16, 512)),                    # per-class layer-1 bias
            resident((512, 256)),                   # w2
            resident((1, 256)),                     # b2
            resident((256, 128)),                   # w3 (padded lanes)
            resident((1, 128)),                     # b3 (padded lanes)
        ],
        out_specs=pl.BlockSpec((TB, 128), batch_tile),
        compiler_params=pltpu.CompilerParams(
            dimension_semantics=("parallel",),
            vmem_limit_bytes=vmem_bytes),
        cost_estimate=cost,
    )(img_flat, lab2d,
      prepared["w1_img"], prepared["bias1"],
      prepared["w2"], prepared["b2"], prepared["w3"], prepared["b3"])

    return out_pad[:, :1].astype(jnp.float32)               # (B, 1)


_SINGLE_BUF_OK = [True]


def discriminator_forward(img, labels, prepared, img_shape):
    """Pallas-backed equivalent of Discriminator.forward(img, labels)."""
    if _SINGLE_BUF_OK[0]:
        try:
            return _forward_impl(img, labels, prepared, img_shape, True)
        except Exception:
            _SINGLE_BUF_OK[0] = False       # Buffered(1) rejected -> fall back
    return _forward_impl(img, labels, prepared, img_shape, False)


# --------------------------------------------------------------------------
# Deterministic parameter construction (nn.Embedding / nn.Linear shapes).
# --------------------------------------------------------------------------
def init_params(key, img_shape):
    d_img = math.prod(img_shape)
    d_in = d_img + 10
    k = jax.random.split(key, 7)

    def lin_init(kw, kb, fan_in, fan_out):
        bound = 1.0 / jnp.sqrt(fan_in)
        w = jax.random.uniform(kw, (fan_in, fan_out), jnp.float32, -bound, bound)
        b = jax.random.uniform(kb, (fan_out,), jnp.float32, -bound, bound)
        return w, b

    embed = jax.random.normal(k[0], (10, 10), jnp.float32)   # nn.Embedding(10,10)
    w1, b1 = lin_init(k[1], k[2], d_in, 512)
    w2, b2 = lin_init(k[3], k[4], 512, 256)
    w3, b3 = lin_init(k[5], k[6], 256, 1)
    return {"embed": embed, "w1": w1, "b1": b1,
            "w2": w2, "b2": b2, "w3": w3, "b3": b3}


# --------------------------------------------------------------------------
# Pure-JAX f32 reference for correctness check.
# --------------------------------------------------------------------------
def reference_forward(img, labels, params):
    B = img.shape[0]
    x = jnp.concatenate(
        [img.reshape(B, -1), jnp.take(params["embed"], labels, axis=0)], axis=1)
    h = x @ params["w1"] + params["b1"]
    h = jnp.where(h >= 0, h, 0.2 * h)
    h = h @ params["w2"] + params["b2"]
    h = jnp.where(h >= 0, h, 0.2 * h)
    h = h @ params["w3"] + params["b3"]
    return jax.nn.sigmoid(h)


if __name__ == "__main__":
    img_shape = (4, 16, 16)          # (C, H, W) -> prod = 1024
    B = 2

    key = jax.random.PRNGKey(0)
    k_img, k_lab, k_par = jax.random.split(key, 3)
    img = jax.random.normal(k_img, (B,) + img_shape, jnp.float32)   # NCHW
    labels = jax.random.randint(k_lab, (B,), 0, 10, jnp.int32)
    params = init_params(k_par, img_shape)
    prepared = prepare_params(params, img_shape)                     # one-time

    out = discriminator_forward(img, labels, prepared, img_shape)
    out = jax.block_until_ready(out)

    ref = reference_forward(img, labels, params)
    assert out.shape == (B, 1)
    # bf16 matmul operands / bf16 output slab -> loose tolerance vs f32 ref.
    assert jnp.allclose(out, ref, atol=2e-2, rtol=2e-2), (out, ref)

    print("KERNEL_OK")
</pallas_src>

<mosaic_0001>
module attributes {stable_mosaic.version = 11 : i64} {
  func.func @_disc_mlp_kernel(%arg0: i32, %arg1: memref<16x1024xf32, #tpu.memory_space<vmem>>, %arg2: memref<16x1xi32, #tpu.memory_space<vmem>>, %arg3: memref<1024x512xbf16, #tpu.memory_space<vmem>>, %arg4: memref<16x512xf32, #tpu.memory_space<vmem>>, %arg5: memref<512x256xbf16, #tpu.memory_space<vmem>>, %arg6: memref<1x256xf32, #tpu.memory_space<vmem>>, %arg7: memref<256x128xbf16, #tpu.memory_space<vmem>>, %arg8: memref<1x128xf32, #tpu.memory_space<vmem>>, %arg9: memref<16x128xbf16, #tpu.memory_space<vmem>>) attributes {dimension_semantics = [#tpu.dimension_semantics<parallel>], iteration_bounds = array<i64: 1>, scalar_prefetch = 0 : i64, scratch_operands = 0 : i64, tpu.core_type = #tpu.core_type<tc>, window_params = [{transform_indices = @transform_0, window_bounds = array<i64: 16, 1024>}, {transform_indices = @transform_1, window_bounds = array<i64: 16, 1>}, {pipeline_mode = #tpu.pipeline_mode<synchronous>, transform_indices = @transform_2, window_bounds = array<i64: 1024, 512>}, {pipeline_mode = #tpu.pipeline_mode<synchronous>, transform_indices = @transform_3, window_bounds = array<i64: 16, 512>}, {pipeline_mode = #tpu.pipeline_mode<synchronous>, transform_indices = @transform_4, window_bounds = array<i64: 512, 256>}, {pipeline_mode = #tpu.pipeline_mode<synchronous>, transform_indices = @transform_5, window_bounds = array<i64: 1, 256>}, {pipeline_mode = #tpu.pipeline_mode<synchronous>, transform_indices = @transform_6, window_bounds = array<i64: 256, 128>}, {pipeline_mode = #tpu.pipeline_mode<synchronous>, transform_indices = @transform_7, window_bounds = array<i64: 1, 128>}, {transform_indices = @transform_8, window_bounds = array<i64: 16, 128>}]} {
    %c0 = arith.constant 0 : index
    %c0_0 = arith.constant 0 : index
    %0 = vector.load %arg1[%c0, %c0_0] : memref<16x1024xf32, #tpu.memory_space<vmem>>, vector<16x1024xf32>
    %1 = arith.truncf %0 : vector<16x1024xf32> to vector<16x1024xbf16>
    %c0_1 = arith.constant 0 : index
    %c0_2 = arith.constant 0 : index
    %2 = vector.load %arg3[%c0_1, %c0_2] : memref<1024x512xbf16, #tpu.memory_space<vmem>>, vector<1024x512xbf16>
    %cst = arith.constant dense<0.000000e+00> : vector<16x512xf32>
    %3 = tpu.matmul %1, %2, %cst {dimension_numbers = #tpu.dot_dimension_numbers<[1], [0], [0], [1], [0, 0, 1, 1], [], []>} : vector<16x1024xbf16>, vector<1024x512xbf16>, vector<16x512xf32> -> vector<16x512xf32>
    %c0_3 = arith.constant 0 : index
    %c0_4 = arith.constant 0 : index
    %4 = vector.load %arg2[%c0_3, %c0_4] : memref<16x1xi32, #tpu.memory_space<vmem>>, vector<16x1xi32>
    %5 = tpu.iota {dimensions = array<i32: 1>} : vector<16x16xi32>
    %6 = vector.broadcast %4 : vector<16x1xi32> to vector<16x16xi32>
    %7 = arith.cmpi eq, %6, %5 : vector<16x16xi32>
    %8 = arith.extui %7 : vector<16x16xi1> to vector<16x16xi32>
    %9 = arith.sitofp %8 : vector<16x16xi32> to vector<16x16xf32>
    %c0_5 = arith.constant 0 : index
    %c0_6 = arith.constant 0 : index
    %10 = vector.load %arg4[%c0_5, %c0_6] : memref<16x512xf32, #tpu.memory_space<vmem>>, vector<16x512xf32>
    %cst_7 = arith.constant dense<0.000000e+00> : vector<16x512xf32>
    %11 = tpu.matmul %9, %10, %cst_7 {dimension_numbers = #tpu.dot_dimension_numbers<[1], [0], [0], [1], [0, 0, 1, 1], [], []>} : vector<16x16xf32>, vector<16x512xf32>, vector<16x512xf32> -> vector<16x512xf32>
    %12 = arith.addf %3, %11 : vector<16x512xf32>
    %cst_8 = arith.constant 2.000000e-01 : f32
    %13 = vector.broadcast %cst_8 : f32 to vector<16x512xf32>
    %14 = arith.mulf %13, %12 : vector<16x512xf32>
    %15 = arith.maximumf %12, %14 : vector<16x512xf32>
    %16 = arith.truncf %15 : vector<16x512xf32> to vector<16x512xbf16>
    %c0_9 = arith.constant 0 : index
    %c0_10 = arith.constant 0 : index
    %17 = vector.load %arg5[%c0_9, %c0_10] : memref<512x256xbf16, #tpu.memory_space<vmem>>, vector<512x256xbf16>
    %cst_11 = arith.constant dense<0.000000e+00> : vector<16x256xf32>
    %18 = tpu.matmul %16, %17, %cst_11 {dimension_numbers = #tpu.dot_dimension_numbers<[1], [0], [0], [1], [0, 0, 1, 1], [], []>} : vector<16x512xbf16>, vector<512x256xbf16>, vector<16x256xf32> -> vector<16x256xf32>
    %c0_12 = arith.constant 0 : index
    %c0_13 = arith.constant 0 : index
    %19 = vector.load %arg6[%c0_12, %c0_13] : memref<1x256xf32, #tpu.memory_space<vmem>>, vector<1x256xf32>
    %20 = vector.broadcast %19 : vector<1x256xf32> to vector<16x256xf32>
    %21 = arith.addf %18, %20 : vector<16x256xf32>
    %cst_14 = arith.constant 2.000000e-01 : f32
    %22 = vector.broadcast %cst_14 : f32 to vector<16x256xf32>
    %23 = arith.mulf %22, %21 : vector<16x256xf32>
    %24 = arith.maximumf %21, %23 : vector<16x256xf32>
    %25 = arith.truncf %24 : vector<16x256xf32> to vector<16x256xbf16>
    %c0_15 = arith.constant 0 : index
    %c0_16 = arith.constant 0 : index
    %26 = vector.load %arg7[%c0_15, %c0_16] : memref<256x128xbf16, #tpu.memory_space<vmem>>, vector<256x128xbf16>
    %cst_17 = arith.constant dense<0.000000e+00> : vector<16x128xf32>
    %27 = tpu.matmul %25, %26, %cst_17 {dimension_numbers = #tpu.dot_dimension_numbers<[1], [0], [0], [1], [0, 0, 1, 1], [], []>} : vector<16x256xbf16>, vector<256x128xbf16>, vector<16x128xf32> -> vector<16x128xf32>
    %c0_18 = arith.constant 0 : index
    %c0_19 = arith.constant 0 : index
    %28 = vector.load %arg8[%c0_18, %c0_19] : memref<1x128xf32, #tpu.memory_space<vmem>>, vector<1x128xf32>
    %29 = vector.broadcast %28 : vector<1x128xf32> to vector<16x128xf32>
    %30 = arith.addf %27, %29 : vector<16x128xf32>
    %31 = arith.negf %30 : vector<16x128xf32>
    %32 = math.exp %31 : vector<16x128xf32>
    %cst_20 = arith.constant 1.000000e+00 : f32
    %33 = vector.broadcast %cst_20 : f32 to vector<16x128xf32>
    %34 = arith.addf %33, %32 : vector<16x128xf32>
    %35 = arith.divf %33, %34 : vector<16x128xf32>
    %36 = arith.truncf %35 : vector<16x128xf32> to vector<16x128xbf16>
    %c0_21 = arith.constant 0 : index
    %c0_22 = arith.constant 0 : index
    %37 = vector.load %arg9[%c0_21, %c0_22] : memref<16x128xbf16, #tpu.memory_space<vmem>>, vector<16x128xbf16>
    tpu.vector_store %arg9[%c0_21, %c0_22], %36 {strides = array<i32>} : memref<16x128xbf16, #tpu.memory_space<vmem>>, vector<16x128xbf16>,
    return
  }
  func.func @transform_0(%arg0: i32) -> (i32, i32) {
    %c0_i32 = arith.constant 0 : i32
    %c0_i32_0 = arith.constant 0 : i32
    return %arg0, %c0_i32 : i32, i32
  }
  func.func @transform_1(%arg0: i32) -> (i32, i32) {
    %c0_i32 = arith.constant 0 : i32
    %c0_i32_0 = arith.constant 0 : i32
    return %arg0, %c0_i32 : i32, i32
  }
  func.func @transform_2(%arg0: i32) -> (i32, i32) {
    %c0_i32 = arith.constant 0 : i32
    %c0_i32_0 = arith.constant 0 : i32
    %c0_i32_1 = arith.constant 0 : i32
    return %c0_i32, %c0_i32_0 : i32, i32
  }
  func.func @transform_3(%arg0: i32) -> (i32, i32) {
    %c0_i32 = arith.constant 0 : i32
    %c0_i32_0 = arith.constant 0 : i32
    %c0_i32_1 = arith.constant 0 : i32
    return %c0_i32, %c0_i32_0 : i32, i32
  }
  func.func @transform_4(%arg0: i32) -> (i32, i32) {
    %c0_i32 = arith.constant 0 : i32
    %c0_i32_0 = arith.constant 0 : i32
    %c0_i32_1 = arith.constant 0 : i32
    return %c0_i32, %c0_i32_0 : i32, i32
  }
  func.func @transform_5(%arg0: i32) -> (i32, i32) {
    %c0_i32 = arith.constant 0 : i32
    %c0_i32_0 = arith.constant 0 : i32
    %c0_i32_1 = arith.constant 0 : i32
    return %c0_i32, %c0_i32_0 : i32, i32
  }
  func.func @transform_6(%arg0: i32) -> (i32, i32) {
    %c0_i32 = arith.constant 0 : i32
    %c0_i32_0 = arith.constant 0 : i32
    %c0_i32_1 = arith.constant 0 : i32
    return %c0_i32, %c0_i32_0 : i32, i32
  }
  func.func @transform_7(%arg0: i32) -> (i32, i32) {
    %c0_i32 = arith.constant 0 : i32
    %c0_i32_0 = arith.constant 0 : i32
    %c0_i32_1 = arith.constant 0 : i32
    return %c0_i32, %c0_i32_0 : i32, i32
  }
  func.func @transform_8(%arg0: i32) -> (i32, i32) {
    %c0_i32 = arith.constant 0 : i32
    %c0_i32_0 = arith.constant 0 : i32
    return %arg0, %c0_i32 : i32, i32
  }
}

module attributes {stable_mosaic.version = 11 : i64} {
  func.func @_disc_mlp_kernel(%arg0: i32, %arg1: memref<16x1024xf32, #tpu.memory_space<vmem>>, %arg2: memref<16x1xi32, #tpu.memory_space<vmem>>, %arg3: memref<1024x512xbf16, #tpu.memory_space<vmem>>, %arg4: memref<16x512xf32, #tpu.memory_space<vmem>>, %arg5: memref<512x256xbf16, #tpu.memory_space<vmem>>, %arg6: memref<1x256xf32, #tpu.memory_space<vmem>>, %arg7: memref<256x128xbf16, #tpu.memory_space<vmem>>, %arg8: memref<1x128xf32, #tpu.memory_space<vmem>>, %arg9: memref<16x128xbf16, #tpu.memory_space<vmem>>) attributes {dimension_semantics = [#tpu.dimension_semantics<parallel>], iteration_bounds = array<i64: 1>, scalar_prefetch = 0 : i64, scratch_operands = 0 : i64, tpu.core_type = #tpu.core_type<tc>, window_params = [{transform_indices = @transform_0, window_bounds = array<i64: 16, 1024>}, {transform_indices = @transform_1, window_bounds = array<i64: 16, 1>}, {pipeline_mode = #tpu.pipeline_mode<synchronous>, transform_indices = @transform_2, window_bounds = array<i64: 1024, 512>}, {pipeline_mode = #tpu.pipeline_mode<synchronous>, transform_indices = @transform_3, window_bounds = array<i64: 16, 512>}, {pipeline_mode = #tpu.pipeline_mode<synchronous>, transform_indices = @transform_4, window_bounds = array<i64: 512, 256>}, {pipeline_mode = #tpu.pipeline_mode<synchronous>, transform_indices = @transform_5, window_bounds = array<i64: 1, 256>}, {pipeline_mode = #tpu.pipeline_mode<synchronous>, transform_indices = @transform_6, window_bounds = array<i64: 256, 128>}, {pipeline_mode = #tpu.pipeline_mode<synchronous>, transform_indices = @transform_7, window_bounds = array<i64: 1, 128>}, {transform_indices = @transform_8, window_bounds = array<i64: 16, 128>}]} {
    %c0 = arith.constant 0 : index
    %c0_0 = arith.constant 0 : index
    %0 = vector.load %arg1[%c0, %c0_0] : memref<16x1024xf32, #tpu.memory_space<vmem>>, vector<16x1024xf32>
    %1 = arith.truncf %0 : vector<16x1024xf32> to vector<16x1024xbf16>
    %c0_1 = arith.constant 0 : index
    %c0_2 = arith.constant 0 : index
    %2 = vector.load %arg3[%c0_1, %c0_2] : memref<1024x512xbf16, #tpu.memory_space<vmem>>, vector<1024x512xbf16>
    %cst = arith.constant dense<0.000000e+00> : vector<16x512xf32>
    %3 = tpu.matmul %1, %2, %cst {dimension_numbers = #tpu.dot_dimension_numbers<[1], [0], [0], [1], [0, 0, 1, 1], [], []>} : vector<16x1024xbf16>, vector<1024x512xbf16>, vector<16x512xf32> -> vector<16x512xf32>
    %c0_3 = arith.constant 0 : index
    %c0_4 = arith.constant 0 : index
    %4 = vector.load %arg2[%c0_3, %c0_4] : memref<16x1xi32, #tpu.memory_space<vmem>>, vector<16x1xi32>
    %5 = tpu.iota {dimensions = array<i32: 1>} : vector<16x16xi32>
    %6 = vector.broadcast %4 : vector<16x1xi32> to vector<16x16xi32>
    %7 = arith.cmpi eq, %6, %5 : vector<16x16xi32>
    %8 = arith.extui %7 : vector<16x16xi1> to vector<16x16xi32>
    %9 = arith.sitofp %8 : vector<16x16xi32> to vector<16x16xf32>
    %c0_5 = arith.constant 0 : index
    %c0_6 = arith.constant 0 : index
    %10 = vector.load %arg4[%c0_5, %c0_6] : memref<16x512xf32, #tpu.memory_space<vmem>>, vector<16x512xf32>
    %cst_7 = arith.constant dense<0.000000e+00> : vector<16x512xf32>
    %11 = tpu.matmul %9, %10, %cst_7 {dimension_numbers = #tpu.dot_dimension_numbers<[1], [0], [0], [1], [0, 0, 1, 1], [], []>} : vector<16x16xf32>, vector<16x512xf32>, vector<16x512xf32> -> vector<16x512xf32>
    %12 = arith.addf %3, %11 : vector<16x512xf32>
    %cst_8 = arith.constant 2.000000e-01 : f32
    %13 = vector.broadcast %cst_8 : f32 to vector<16x512xf32>
    %14 = arith.mulf %13, %12 : vector<16x512xf32>
    %15 = arith.maximumf %12, %14 : vector<16x512xf32>
    %16 = arith.truncf %15 : vector<16x512xf32> to vector<16x512xbf16>
    %c0_9 = arith.constant 0 : index
    %c0_10 = arith.constant 0 : index
    %17 = vector.load %arg5[%c0_9, %c0_10] : memref<512x256xbf16, #tpu.memory_space<vmem>>, vector<512x256xbf16>
    %cst_11 = arith.constant dense<0.000000e+00> : vector<16x256xf32>
    %18 = tpu.matmul %16, %17, %cst_11 {dimension_numbers = #tpu.dot_dimension_numbers<[1], [0], [0], [1], [0, 0, 1, 1], [], []>} : vector<16x512xbf16>, vector<512x256xbf16>, vector<16x256xf32> -> vector<16x256xf32>
    %c0_12 = arith.constant 0 : index
    %c0_13 = arith.constant 0 : index
    %19 = vector.load %arg6[%c0_12, %c0_13] : memref<1x256xf32, #tpu.memory_space<vmem>>, vector<1x256xf32>
    %20 = vector.broadcast %19 : vector<1x256xf32> to vector<16x256xf32>
    %21 = arith.addf %18, %20 : vector<16x256xf32>
    %cst_14 = arith.constant 2.000000e-01 : f32
    %22 = vector.broadcast %cst_14 : f32 to vector<16x256xf32>
    %23 = arith.mulf %22, %21 : vector<16x256xf32>
    %24 = arith.maximumf %21, %23 : vector<16x256xf32>
    %25 = arith.truncf %24 : vector<16x256xf32> to vector<16x256xbf16>
    %c0_15 = arith.constant 0 : index
    %c0_16 = arith.constant 0 : index
    %26 = vector.load %arg7[%c0_15, %c0_16] : memref<256x128xbf16, #tpu.memory_space<vmem>>, vector<256x128xbf16>
    %cst_17 = arith.constant dense<0.000000e+00> : vector<16x128xf32>
    %27 = tpu.matmul %25, %26, %cst_17 {dimension_numbers = #tpu.dot_dimension_numbers<[1], [0], [0], [1], [0, 0, 1, 1], [], []>} : vector<16x256xbf16>, vector<256x128xbf16>, vector<16x128xf32> -> vector<16x128xf32>
    %c0_18 = arith.constant 0 : index
    %c0_19 = arith.constant 0 : index
    %28 = vector.load %arg8[%c0_18, %c0_19] : memref<1x128xf32, #tpu.memory_space<vmem>>, vector<1x128xf32>
    %29 = vector.broadcast %28 : vector<1x128xf32> to vector<16x128xf32>
    %30 = arith.addf %27, %29 : vector<16x128xf32>
    %31 = arith.negf %30 : vector<16x128xf32>
    %32 = math.exp %31 : vector<16x128xf32>
    %cst_20 = arith.constant 1.000000e+00 : f32
    %33 = vector.broadcast %cst_20 : f32 to vector<16x128xf32>
    %34 = arith.addf %33, %32 : vector<16x128xf32>
    %35 = arith.divf %33, %34 : vector<16x128xf32>
    %36 = arith.truncf %35 : vector<16x128xf32> to vector<16x128xbf16>
    %c0_21 = arith.constant 0 : index
    %c0_22 = arith.constant 0 : index
    %37 = vector.load %arg9[%c0_21, %c0_22] : memref<16x128xbf16, #tpu.memory_space<vmem>>, vector<16x128xbf16>
    tpu.vector_store %arg9[%c0_21, %c0_22], %36 {strides = array<i32>} : memref<16x128xbf16, #tpu.memory_space<vmem>>, vector<16x128xbf16>,
    return
  }
  func.func @transform_0(%arg0: i32) -> (i32, i32) {
    %c0_i32 = arith.constant 0 : i32
    %c0_i32_0 = arith.constant 0 : i32
    return %arg0, %c0_i32 : i32, i32
  }
  func.func @transform_1(%arg0: i32) -> (i32, i32) {
    %c0_i32 = arith.constant 0 : i32
    %c0_i32_0 = arith.constant 0 : i32
    return %arg0, %c0_i32 : i32, i32
  }
  func.func @transform_2(%arg0: i32) -> (i32, i32) {
    %c0_i32 = arith.constant 0 : i32
    %c0_i32_0 = arith.constant 0 : i32
    %c0_i32_1 = arith.constant 0 : i32
    return %c0_i32, %c0_i32_0 : i32, i32
  }
  func.func @transform_3(%arg0: i32) -> (i32, i32) {
    %c0_i32 = arith.constant 0 : i32
    %c0_i32_0 = arith.constant 0 : i32
    %c0_i32_1 = arith.constant 0 : i32
    return %c0_i32, %c0_i32_0 : i32, i32
  }
  func.func @transform_4(%arg0: i32) -> (i32, i32) {
    %c0_i32 = arith.constant 0 : i32
    %c0_i32_0 = arith.constant 0 : i32
    %c0_i32_1 = arith.constant 0 : i32
    return %c0_i32, %c0_i32_0 : i32, i32
  }
  func.func @transform_5(%arg0: i32) -> (i32, i32) {
    %c0_i32 = arith.constant 0 : i32
    %c0_i32_0 = arith.constant 0 : i32
    %c0_i32_1 = arith.constant 0 : i32
    return %c0_i32, %c0_i32_0 : i32, i32
  }
  func.func @transform_6(%arg0: i32) -> (i32, i32) {
    %c0_i32 = arith.constant 0 : i32
    %c0_i32_0 = arith.constant 0 : i32
    %c0_i32_1 = arith.constant 0 : i32
    return %c0_i32, %c0_i32_0 : i32, i32
  }
  func.func @transform_7(%arg0: i32) -> (i32, i32) {
    %c0_i32 = arith.constant 0 : i32
    %c0_i32_0 = arith.constant 0 : i32
    %c0_i32_1 = arith.constant 0 : i32
    return %c0_i32, %c0_i32_0 : i32, i32
  }
  func.func @transform_8(%arg0: i32) -> (i32, i32) {
    %c0_i32 = arith.constant 0 : i32
    %c0_i32_0 = arith.constant 0 : i32
    return %arg0, %c0_i32 : i32, i32
  }
}

</mosaic_0001>

<llo_original>
// kernel: _forward_impl.1
$region0: #{_forward_impl.1}
  #allocation0 [shape = 'u32[]', space=smem, size = 0x4, offset = 0x4, fixed_abs, tag = 'smem constant byte address 0x4 - core index']
  #allocation1 [shape = 'u32[144,128]{1,0:T(1,128)}', space=vmem, size = 0x12000, scoped, tag = 'internal scratch']
  %s0 = inlined_call_operand.vmem [shape: f32[2,1024], index: 0, kind: input, shape index: {}]
  %s1 = inlined_call_operand.vmem [shape: s32[2,1], index: 1, kind: input, shape index: {}]
  %s2 = inlined_call_operand.hbm [shape: bf16[1024,512], index: 2, kind: input, shape index: {}]
  %s3 = inlined_call_operand.hbm [shape: f32[16,512], index: 3, kind: input, shape index: {}]
  %s4 = inlined_call_operand.hbm [shape: bf16[512,256], index: 4, kind: input, shape index: {}]
  %s5 = inlined_call_operand.vmem [shape: f32[1,256], index: 5, kind: input, shape index: {}]
  %s6 = inlined_call_operand.vmem [shape: bf16[256,128], index: 6, kind: input, shape index: {}]
  %s7 = inlined_call_operand.vmem [shape: f32[1,128], index: 7, kind: input, shape index: {}]
  %s8 = inlined_call_operand.vmem [shape: bf16[2,128], index: 8, kind: output, shape index: {}]
  %s9 = sld [smem:[#allocation0]]
  $region84: #{_forward_impl.1} parent=0
    _
  %s11 = ssub.s32 1, %s9
  %s12 = scalar_select 0, %s11, %s9
  $region1: #{_forward_impl.1} parent=0
    #allocation2 [shape = 'u8[1048576]{0}', space=vmem, size = 0x100000, scoped, tag = 'input window, operand 2, single buffered']
    #allocation3 [shape = 's32[1]{0}', space=sflag, size = 0x4, scoped, tag = 'scoped memory for _forward_impl.1']
    #allocation4 [shape = 'u8[32768]{0}', space=vmem, size = 0x8000, scoped, tag = 'input window, operand 3, single buffered']
    #allocation5 [shape = 's32[1]{0}', space=sflag, size = 0x4, scoped, tag = 'scoped memory for _forward_impl.1']
    #allocation6 [shape = 'u8[262144]{0}', space=vmem, size = 0x40000, scoped, tag = 'input window, operand 4, single buffered']
    #allocation7 [shape = 'u8[4096]{0}', space=vmem, size = 0x1000, scoped, tag = 'output window, operand 0, single buffered']
    %13 = vsyncpa [#allocation3], 0
    %14 = vsyncpa [#allocation5], 0
    // Predicated region
    $region2: #{_forward_impl.1} parent=1 // pred_check
      _
    $region3: #{_forward_impl.1} parent=1 // pred_check_branch
      %16 = sbr.rel (0) target = $region5
    $region4: #{_forward_impl.1} parent=1 // pred_region
      _
    $region5: #{_forward_impl.1} parent=1 // pred_fallthru
      _
    // Predicated region
    $region6: #{_forward_impl.1} parent=1 // pred_check
      _
    $region7: #{_forward_impl.1} parent=1 // pred_check_branch
      %18 = sbr.rel (0) target = $region9
    $region8: #{_forward_impl.1} parent=1 // pred_region
      _
    $region9: #{_forward_impl.1} parent=1 // pred_fallthru
      _
    // Predicated region
    $region10: #{_forward_impl.1} parent=1 // pred_check
      _
    $region11: #{_forward_impl.1} parent=1 // pred_check_branch
      %20 = sbr.rel (0) target = $region13
    $region12: #{_forward_impl.1} parent=1 // pred_region
      %s22 = ssub.s32 32768, 32768
      %23 = vsyncadd [#allocation3], %s22
      %s24 = sshll.u32 [#allocation2], 4
      %s25 = int_to_ptr.vmem [resolvable:$true] %s24
      %30 = dma.hbm_to_vmem [thread:$0]  %s2, 32768, %s25, [#allocation3], 256, 256, 16
    $region13: #{_forward_impl.1} parent=1 // pred_fallthru
      _
    // Predicated region
    $region14: #{_forward_impl.1} parent=1 // pred_check
      _
    $region15: #{_forward_impl.1} parent=1 // pred_check_branch
      %32 = sbr.rel (0) target = $region17
    $region16: #{_forward_impl.1} parent=1 // pred_region
      %s34 = ssub.s32 1024, 1024
      %35 = vsyncadd [#allocation5], %s34
      %s36 = sshll.u32 [#allocation4], 4
      %s37 = int_to_ptr.vmem [resolvable:$true] %s36
      %42 = dma.hbm_to_vmem [thread:$0]  %s3, 1024, %s37, [#allocation5], 512, 512, 32
    $region17: #{_forward_impl.1} parent=1 // pred_fallthru
      _
    // Predicated region
    $region18: #{_forward_impl.1} parent=1 // pred_check
      _
    $region19: #{_forward_impl.1} parent=1 // pred_check_branch
      %44 = sbr.rel (0) target = $region21
    $region20: #{_forward_impl.1} parent=1 // pred_region
      %s46 = ssub.s32 8192, 8192
      %47 = vsyncadd [#allocation5], %s46
      %s48 = sshll.u32 [#allocation6], 4
      %s49 = int_to_ptr.vmem [resolvable:$true] %s48
      %54 = dma.hbm_to_vmem [thread:$0]  %s4, 8192, %s49, [#allocation5], 128, 128, 8
    $region21: #{_forward_impl.1} parent=1 // pred_fallthru
      _
    // Predicated region
    $region22: #{_forward_impl.1} parent=1 // pred_check
      _
    $region23: #{_forward_impl.1} parent=1 // pred_check_branch
      %56 = sbr.rel (0) target = $region25
    $region24: #{_forward_impl.1} parent=1 // pred_region
      _
    $region25: #{_forward_impl.1} parent=1 // pred_fallthru
      _
    // Predicated region
    $region26: #{_forward_impl.1} parent=1 // pred_check
      _
    $region27: #{_forward_impl.1} parent=1 // pred_check_branch
      %58 = sbr.rel (0) target = $region29
    $region28: #{_forward_impl.1} parent=1 // pred_region
      _
    $region29: #{_forward_impl.1} parent=1 // pred_fallthru
      _
    // Predicated region
    $region30: #{_forward_impl.1} parent=1 // pred_check
      _
    $region31: #{_forward_impl.1} parent=1 // pred_check_branch
      %60 = sbr.rel (0) target = $region33
    $region32: #{_forward_impl.1} parent=1 // pred_region
      _
    $region33: #{_forward_impl.1} parent=1 // pred_fallthru
      _
    // Predicated region
    $region34: #{_forward_impl.1} parent=1 // pred_check
      _
    $region35: #{_forward_impl.1} parent=1 // pred_check_branch
      %62 = sbr.rel (0) target = $region37
    $region36: #{_forward_impl.1} parent=1 // pred_region
      %63 = dma.done [#allocation3], 32768
    $region37: #{_forward_impl.1} parent=1 // pred_fallthru
      _
    // Predicated region
    $region38: #{_forward_impl.1} parent=1 // pred_check
      _
    $region39: #{_forward_impl.1} parent=1 // pred_check_branch
      %65 = sbr.rel (0) target = $region41
    $region40: #{_forward_impl.1} parent=1 // pred_region
      %66 = dma.done [#allocation5], 1024
    $region41: #{_forward_impl.1} parent=1 // pred_fallthru
      _
    // Predicated region
    $region42: #{_forward_impl.1} parent=1 // pred_check
      _
    $region43: #{_forward_impl.1} parent=1 // pred_check_branch
      %68 = sbr.rel (0) target = $region45
    $region44: #{_forward_impl.1} parent=1 // pred_region
      %69 = dma.done [#allocation5], 8192
    $region45: #{_forward_impl.1} parent=1 // pred_fallthru
      _
    %v71 = vld [vmem:[%s0] sm:$0xff]
    %v72 = vld [vmem:[%s0 + $0x8] sm:$0xff]
    %v73 = vld [vmem:[%s0 + $0x10] sm:$0xff]
    %v74 = vld [vmem:[%s0 + $0x18] sm:$0xff]
    %v75 = vld [vmem:[%s0 + $0x20] sm:$0xff]
    %v76 = vld [vmem:[%s0 + $0x28] sm:$0xff]
    %v77 = vld [vmem:[%s0 + $0x30] sm:$0xff]
    %v78 = vld [vmem:[%s0 + $0x38] sm:$0xff]
    %v79 = vld [vmem:[%s0 + $0x40] sm:$0xff]
    %v80 = vld [vmem:[%s0 + $0x48] sm:$0xff]
    %v81 = vld [vmem:[%s0 + $0x50] sm:$0xff]
    %v82 = vld [vmem:[%s0 + $0x58] sm:$0xff]
    %v83 = vld [vmem:[%s0 + $0x60] sm:$0xff]
    %v84 = vld [vmem:[%s0 + $0x68] sm:$0xff]
    %v85 = vld [vmem:[%s0 + $0x70] sm:$0xff]
    %v86 = vld [vmem:[%s0 + $0x78] sm:$0xff]
    %v103 = vcombine.low %v71, %v73
    %v104 = vcombine.high %v71, %v73
    %v105 = vcombine.low %v75, %v77
    %v106 = vcombine.high %v75, %v77
    %v108 = vunpack.c.l.s4 1983009808
    %v109 = vunpack.c.0.s8 %v108
    %v110 = vlaneseq
    %v111 = vshrl.u32 %v110, 7
    %v112 = vsub.s32 %v109, %v111
    %v113 = vrot.slane %v103, %v112
    %v115 = vunpack.c.l.s4 1983009808
    %v116 = vunpack.c.0.s8 %v115
    %v117 = vlaneseq
    %v118 = vshrl.u32 %v117, 7
    %v119 = vsub.s32 %v116, %v118
    %v120 = vrot.slane %v104, %v119
    %v122 = vunpack.c.l.s4 1983009808
    %v123 = vunpack.c.0.s8 %v122
    %v124 = vlaneseq
    %v125 = vshrl.u32 %v124, 7
    %v126 = vsub.s32 %v123, %v125
    %v127 = vrot.slane %v105, %v126
    %v129 = vunpack.c.l.s4 1983009808
    %v130 = vunpack.c.0.s8 %v129
    %v131 = vlaneseq
    %v132 = vshrl.u32 %v131, 7
    %v133 = vsub.s32 %v130, %v132
    %v134 = vrot.slane %v106, %v133
    %v135 = vcombine.low %v113, %v127
    %v136 = vcombine.high %v113, %v127
    %v137 = vcombine.low %v120, %v134
    %v138 = vcombine.high %v120, %v134
    %v139 = vcombine.low %v72, %v74
    %v140 = vcombine.high %v72, %v74
    %v141 = vcombine.low %v76, %v78
    %v142 = vcombine.high %v76, %v78
    %v144 = vunpack.c.l.s4 1983009808
    %v145 = vunpack.c.0.s8 %v144
    %v146 = vlaneseq
    %v147 = vshrl.u32 %v146, 7
    %v148 = vsub.s32 %v145, %v147
    %v149 = vrot.slane %v139, %v148
    %v151 = vunpack.c.l.s4 1983009808
    %v152 = vunpack.c.0.s8 %v151
    %v153 = vlaneseq
    %v154 = vshrl.u32 %v153, 7
    %v155 = vsub.s32 %v152, %v154
    %v156 = vrot.slane %v140, %v155
    %v158 = vunpack.c.l.s4 1983009808
    %v159 = vunpack.c.0.s8 %v158
    %v160 = vlaneseq
    %v161 = vshrl.u32 %v160, 7
    %v162 = vsub.s32 %v159, %v161
    %v163 = vrot.slane %v141, %v162
    %v165 = vunpack.c.l.s4 1983009808
    %v166 = vunpack.c.0.s8 %v165
    %v167 = vlaneseq
    %v168 = vshrl.u32 %v167, 7
    %v169 = vsub.s32 %v166, %v168
    %v170 = vrot.slane %v142, %v169
    %v171 = vcombine.low %v149, %v163
    %v172 = vcombine.high %v149, %v163
    %v173 = vcombine.low %v156, %v170
    %v174 = vcombine.high %v156, %v170
    %v175 = vcombine.low %v79, %v81
    %v176 = vcombine.high %v79, %v81
    %v177 = vcombine.low %v83, %v85
    %v178 = vcombine.high %v83, %v85
    %v180 = vunpack.c.l.s4 1983009808
    %v181 = vunpack.c.0.s8 %v180
    %v182 = vlaneseq
    %v183 = vshrl.u32 %v182, 7
    %v184 = vsub.s32 %v181, %v183
    %v185 = vrot.slane %v175, %v184
    %v187 = vunpack.c.l.s4 1983009808
    %v188 = vunpack.c.0.s8 %v187
    %v189 = vlaneseq
    %v190 = vshrl.u32 %v189, 7
    %v191 = vsub.s32 %v188, %v190
    %v192 = vrot.slane %v176, %v191
    %v194 = vunpack.c.l.s4 1983009808
    %v195 = vunpack.c.0.s8 %v194
    %v196 = vlaneseq
    %v197 = vshrl.u32 %v196, 7
    %v198 = vsub.s32 %v195, %v197
    %v199 = vrot.slane %v177, %v198
    %v201 = vunpack.c.l.s4 1983009808
    %v202 = vunpack.c.0.s8 %v201
    %v203 = vlaneseq
    %v204 = vshrl.u32 %v203, 7
    %v205 = vsub.s32 %v202, %v204
    %v206 = vrot.slane %v178, %v205
    %v207 = vcombine.low %v185, %v199
    %v208 = vcombine.high %v185, %v199
    %v209 = vcombine.low %v192, %v206
    %v210 = vcombine.high %v192, %v206
    %v211 = vcombine.low %v80, %v82
    %v212 = vcombine.high %v80, %v82
    %v213 = vcombine.low %v84, %v86
    %v214 = vcombine.high %v84, %v86
    %v216 = vunpack.c.l.s4 1983009808
    %v217 = vunpack.c.0.s8 %v216
    %v218 = vlaneseq
    %v219 = vshrl.u32 %v218, 7
    %v220 = vsub.s32 %v217, %v219
    %v221 = vrot.slane %v211, %v220
    %v223 = vunpack.c.l.s4 1983009808
    %v224 = vunpack.c.0.s8 %v223
    %v225 = vlaneseq
    %v226 = vshrl.u32 %v225, 7
    %v227 = vsub.s32 %v224, %v226
    %v228 = vrot.slane %v212, %v227
    %v230 = vunpack.c.l.s4 1983009808
    %v231 = vunpack.c.0.s8 %v230
    %v232 = vlaneseq
    %v233 = vshrl.u32 %v232, 7
    %v234 = vsub.s32 %v231, %v233
    %v235 = vrot.slane %v213, %v234
    %v237 = vunpack.c.l.s4 1983009808
    %v238 = vunpack.c.0.s8 %v237
    %v239 = vlaneseq
    %v240 = vshrl.u32 %v239, 7
    %v241 = vsub.s32 %v238, %v240
    %v242 = vrot.slane %v214, %v241
    %v243 = vcombine.low %v221, %v235
    %v244 = vcombine.high %v221, %v235
    %v245 = vcombine.low %v228, %v242
    %v246 = vcombine.high %v228, %v242
    %v263 = vpack.c.bf16 %v207, %v135
    %v264 = vpack.c.bf16 %v208, %v136
    %v265 = vpack.c.bf16 %v209, %v137
    %v266 = vpack.c.bf16 %v210, %v138
    %v267 = vpack.c.bf16 %v243, %v171
    %v268 = vpack.c.bf16 %v244, %v172
    %v269 = vpack.c.bf16 %v245, %v173
    %v270 = vpack.c.bf16 %v246, %v174
    %v271 = vld [vmem:[#allocation2] sm:$0xff]
    %v272 = vld [vmem:[#allocation2 + $0x8] sm:$0xff]
    %v273 = vld [vmem:[#allocation2 + $0x10] sm:$0xff]
    %v274 = vld [vmem:[#allocation2 + $0x18] sm:$0xff]
    %v275 = vld [vmem:[#allocation2 + $0x20] sm:$0xff]
    %v276 = vld [vmem:[#allocation2 + $0x28] sm:$0xff]
    %v277 = vld [vmem:[#allocation2 + $0x30] sm:$0xff]
    %v278 = vld [vmem:[#allocation2 + $0x38] sm:$0xff]
    %v279 = vld [vmem:[#allocation2 + $0x40] sm:$0xff]
    %v280 = vld [vmem:[#allocation2 + $0x48] sm:$0xff]
    %v281 = vld [vmem:[#allocation2 + $0x50] sm:$0xff]
    %v282 = vld [vmem:[#allocation2 + $0x58] sm:$0xff]
    %v283 = vld [vmem:[#allocation2 + $0x60] sm:$0xff]
    %v284 = vld [vmem:[#allocation2 + $0x68] sm:$0xff]
    %v285 = vld [vmem:[#allocation2 + $0x70] sm:$0xff]
    %v286 = vld [vmem:[#allocation2 + $0x78] sm:$0xff]
    %v287 = vld [vmem:[#allocation2 + $0x80] sm:$0xff]
    %v288 = vld [vmem:[#allocation2 + $0x88] sm:$0xff]
    %v289 = vld [vmem:[#allocation2 + $0x90] sm:$0xff]
    %v290 = vld [vmem:[#allocation2 + $0x98] sm:$0xff]
    %v291 = vld [vmem:[#allocation2 + $0xa0] sm:$0xff]
    %v292 = vld [vmem:[#allocation2 + $0xa8] sm:$0xff]
    %v293 = vld [vmem:[#allocation2 + $0xb0] sm:$0xff]
    %v294 = vld [vmem:[#allocation2 + $0xb8] sm:$0xff]
    %v295 = vld [vmem:[#allocation2 + $0xc0] sm:$0xff]
    %v296 = vld [vmem:[#allocation2 + $0xc8] sm:$0xff]
    %v297 = vld [vmem:[#allocation2 + $0xd0] sm:$0xff]
    %v298 = vld [vmem:[#allocation2 + $0xd8] sm:$0xff]
    %v299 = vld [vmem:[#allocation2 + $0xe0] sm:$0xff]
    %v300 = vld [vmem:[#allocation2 + $0xe8] sm:$0xff]
    %v301 = vld [vmem:[#allocation2 + $0xf0] sm:$0xff]
    %v302 = vld [vmem:[#allocation2 + $0xf8] sm:$0xff]
    %v303 = vld [vmem:[#allocation2 + $0x100] sm:$0xff]
    %v304 = vld [vmem:[#allocation2 + $0x108] sm:$0xff]
    %v305 = vld [vmem:[#allocation2 + $0x110] sm:$0xff]
    %v306 = vld [vmem:[#allocation2 + $0x118] sm:$0xff]
    %v307 = vld [vmem:[#allocation2 + $0x120] sm:$0xff]
    %v308 = vld [vmem:[#allocation2 + $0x128] sm:$0xff]
    %v309 = vld [vmem:[#allocation2 + $0x130] sm:$0xff]
    %v310 = vld [vmem:[#allocation2 + $0x138] sm:$0xff]
    %v311 = vld [vmem:[#allocation2 + $0x140] sm:$0xff]
    %v312 = vld [vmem:[#allocation2 + $0x148] sm:$0xff]
    %v313 = vld [vmem:[#allocation2 + $0x150] sm:$0xff]
    %v314 = vld [vmem:[#allocation2 + $0x158] sm:$0xff]
    %v315 = vld [vmem:[#allocation2 + $0x160] sm:$0xff]
    %v316 = vld [vmem:[#allocation2 + $0x168] sm:$0xff]
    %v317 = vld [vmem:[#allocation2 + $0x170] sm:$0xff]
    %v318 = vld [vmem:[#allocation2 + $0x178] sm:$0xff]
    %v319 = vld [vmem:[#allocation2 + $0x180] sm:$0xff]
    %v320 = vld [vmem:[#allocation2 + $0x188] sm:$0xff]
    %v321 = vld [vmem:[#allocation2 + $0x190] sm:$0xff]
    %v322 = vld [vmem:[#allocation2 + $0x198] sm:$0xff]
    %v323 = vld [vmem:[#allocation2 + $0x1a0] sm:$0xff]
    %v324 = vld [vmem:[#allocation2 + $0x1a8] sm:$0xff]
    %v325 = vld [vmem:[#allocation2 + $0x1b0] sm:$0xff]
    %v326 = vld [vmem:[#allocation2 + $0x1b8] sm:$0xff]
    %v327 = vld [vmem:[#allocation2 + $0x1c0] sm:$0xff]
    %v328 = vld [vmem:[#allocation2 + $0x1c8] sm:$0xff]
    %v329 = vld [vmem:[#allocation2 + $0x1d0] sm:$0xff]
    %v330 = vld [vmem:[#allocation2 + $0x1d8] sm:$0xff]
    %v331 = vld [vmem:[#allocation2 + $0x1e0] sm:$0xff]
    %v332 = vld [vmem:[#allocation2 + $0x1e8] sm:$0xff]
    %v333 = vld [vmem:[#allocation2 + $0x1f0] sm:$0xff]
    %v334 = vld [vmem:[#allocation2 + $0x1f8] sm:$0xff]
    %v335 = vld [vmem:[#allocation2 + $0x200] sm:$0xff]
    %v336 = vld [vmem:[#allocation2 + $0x208] sm:$0xff]
    %v337 = vld [vmem:[#allocation2 + $0x210] sm:$0xff]
    %v338 = vld [vmem:[#allocation2 + $0x218] sm:$0xff]
    %v339 = vld [vmem:[#allocation2 + $0x220] sm:$0xff]
    %v340 = vld [vmem:[#allocation2 + $0x228] sm:$0xff]
    %v341 = vld [vmem:[#allocation2 + $0x230] sm:$0xff]
    %v342 = vld [vmem:[#allocation2 + $0x238] sm:$0xff]
    %v343 = vld [vmem:[#allocation2 + $0x240] sm:$0xff]
    %v344 = vld [vmem:[#allocation2 + $0x248] sm:$0xff]
    %v345 = vld [vmem:[#allocation2 + $0x250] sm:$0xff]
    %v346 = vld [vmem:[#allocation2 + $0x258] sm:$0xff]
    %v347 = vld [vmem:[#allocation2 + $0x260] sm:$0xff]
    %v348 = vld [vmem:[#allocation2 + $0x268] sm:$0xff]
    %v349 = vld [vmem:[#allocation2 + $0x270] sm:$0xff]
    %v350 = vld [vmem:[#allocation2 + $0x278] sm:$0xff]
    %v351 = vld [vmem:[#allocation2 + $0x280] sm:$0xff]
    %v352 = vld [vmem:[#allocation2 + $0x288] sm:$0xff]
    %v353 = vld [vmem:[#allocation2 + $0x290] sm:$0xff]
    %v354 = vld [vmem:[#allocation2 + $0x298] sm:$0xff]
    %v355 = vld [vmem:[#allocation2 + $0x2a0] sm:$0xff]
    %v356 = vld [vmem:[#allocation2 + $0x2a8] sm:$0xff]
    %v357 = vld [vmem:[#allocation2 + $0x2b0] sm:$0xff]
    %v358 = vld [vmem:[#allocation2 + $0x2b8] sm:$0xff]
    %v359 = vld [vmem:[#allocation2 + $0x2c0] sm:$0xff]
    %v360 = vld [vmem:[#allocation2 + $0x2c8] sm:$0xff]
    %v361 = vld [vmem:[#allocation2 + $0x2d0] sm:$0xff]
    %v362 = vld [vmem:[#allocation2 + $0x2d8] sm:$0xff]
    %v363 = vld [vmem:[#allocation2 + $0x2e0] sm:$0xff]
    %v364 = vld [vmem:[#allocation2 + $0x2e8] sm:$0xff]
    %v365 = vld [vmem:[#allocation2 + $0x2f0] sm:$0xff]
    %v366 = vld [vmem:[#allocation2 + $0x2f8] sm:$0xff]
    %v367 = vld [vmem:[#allocation2 + $0x300] sm:$0xff]
    %v368 = vld [vmem:[#allocation2 + $0x308] sm:$0xff]
    %v369 = vld [vmem:[#allocation2 + $0x310] sm:$0xff]
    %v370 = vld [vmem:[#allocation2 + $0x318] sm:$0xff]
    %v371 = vld [vmem:[#allocation2 + $0x320] sm:$0xff]
    %v372 = vld [vmem:[#allocation2 + $0x328] sm:$0xff]
    %v373 = vld [vmem:[#allocation2 + $0x330] sm:$0xff]
    %v374 = vld [vmem:[#allocation2 + $0x338] sm:$0xff]
    %v375 = vld [vmem:[#allocation2 + $0x340] sm:$0xff]
    %v376 = vld [vmem:[#allocation2 + $0x348] sm:$0xff]
    %v377 = vld [vmem:[#allocation2 + $0x350] sm:$0xff]
    %v378 = vld [vmem:[#allocation2 + $0x358] sm:$0xff]
    %v379 = vld [vmem:[#allocation2 + $0x360] sm:$0xff]
    %v380 = vld [vmem:[#allocation2 + $0x368] sm:$0xff]
    %v381 = vld [vmem:[#allocation2 + $0x370] sm:$0xff]
    %v382 = vld [vmem:[#allocation2 + $0x378] sm:$0xff]
    %v383 = vld [vmem:[#allocation2 + $0x380] sm:$0xff]
    %v384 = vld [vmem:[#allocation2 + $0x388] sm:$0xff]
    %v385 = vld [vmem:[#allocation2 + $0x390] sm:$0xff]
    %v386 = vld [vmem:[#allocation2 + $0x398] sm:$0xff]
    %v387 = vld [vmem:[#allocation2 + $0x3a0] sm:$0xff]
    %v388 = vld [vmem:[#allocation2 + $0x3a8] sm:$0xff]
    %v389 = vld [vmem:[#allocation2 + $0x3b0] sm:$0xff]
    %v390 = vld [vmem:[#allocation2 + $0x3b8] sm:$0xff]
    %v391 = vld [vmem:[#allocation2 + $0x3c0] sm:$0xff]
    %v392 = vld [vmem:[#allocation2 + $0x3c8] sm:$0xff]
    %v393 = vld [vmem:[#allocation2 + $0x3d0] sm:$0xff]
    %v394 = vld [vmem:[#allocation2 + $0x3d8] sm:$0xff]
    %v395 = vld [vmem:[#allocation2 + $0x3e0] sm:$0xff]
    %v396 = vld [vmem:[#allocation2 + $0x3e8] sm:$0xff]
    %v397 = vld [vmem:[#allocation2 + $0x3f0] sm:$0xff]
    %v398 = vld [vmem:[#allocation2 + $0x3f8] sm:$0xff]
    %v399 = vld [vmem:[#allocation2 + $0x400] sm:$0xff]
    %v400 = vld [vmem:[#allocation2 + $0x408] sm:$0xff]
    %v401 = vld [vmem:[#allocation2 + $0x410] sm:$0xff]
    %v402 = vld [vmem:[#allocation2 + $0x418] sm:$0xff]
    %v403 = vld [vmem:[#allocation2 + $0x420] sm:$0xff]
    %v404 = vld [vmem:[#allocation2 + $0x428] sm:$0xff]
    %v405 = vld [vmem:[#allocation2 + $0x430] sm:$0xff]
    %v406 = vld [vmem:[#allocation2 + $0x438] sm:$0xff]
    %v407 = vld [vmem:[#allocation2 + $0x440] sm:$0xff]
    %v408 = vld [vmem:[#allocation2 + $0x448] sm:$0xff]
    %v409 = vld [vmem:[#allocation2 + $0x450] sm:$0xff]
    %v410 = vld [vmem:[#allocation2 + $0x458] sm:$0xff]
    %v411 = vld [vmem:[#allocation2 + $0x460] sm:$0xff]
    %v412 = vld [vmem:[#allocation2 + $0x468] sm:$0xff]
    %v413 = vld [vmem:[#allocation2 + $0x470] sm:$0xff]
    %v414 = vld [vmem:[#allocation2 + $0x478] sm:$0xff]
    %v415 = vld [vmem:[#allocation2 + $0x480] sm:$0xff]
    %v416 = vld [vmem:[#allocation2 + $0x488] sm:$0xff]
    %v417 = vld [vmem:[#allocation2 + $0x490] sm:$0xff]
    %v418 = vld [vmem:[#allocation2 + $0x498] sm:$0xff]
    %v419 = vld [vmem:[#allocation2 + $0x4a0] sm:$0xff]
    %v420 = vld [vmem:[#allocation2 + $0x4a8] sm:$0xff]
    %v421 = vld [vmem:[#allocation2 + $0x4b0] sm:$0xff]
    %v422 = vld [vmem:[#allocation2 + $0x4b8] sm:$0xff]
    %v423 = vld [vmem:[#allocation2 + $0x4c0] sm:$0xff]
    %v424 = vld [vmem:[#allocation2 + $0x4c8] sm:$0xff]
    %v425 = vld [vmem:[#allocation2 + $0x4d0] sm:$0xff]
    %v426 = vld [vmem:[#allocation2 + $0x4d8] sm:$0xff]
    %v427 = vld [vmem:[#allocation2 + $0x4e0] sm:$0xff]
    %v428 = vld [vmem:[#allocation2 + $0x4e8] sm:$0xff]
    %v429 = vld [vmem:[#allocation2 + $0x4f0] sm:$0xff]
    %v430 = vld [vmem:[#allocation2 + $0x4f8] sm:$0xff]
    %v431 = vld [vmem:[#allocation2 + $0x500] sm:$0xff]
    %v432 = vld [vmem:[#allocation2 + $0x508] sm:$0xff]
    %v433 = vld [vmem:[#allocation2 + $0x510] sm:$0xff]
    %v434 = vld [vmem:[#allocation2 + $0x518] sm:$0xff]
    %v435 = vld [vmem:[#allocation2 + $0x520] sm:$0xff]
    %v436 = vld [vmem:[#allocation2 + $0x528] sm:$0xff]
    %v437 = vld [vmem:[#allocation2 + $0x530] sm:$0xff]
    %v438 = vld [vmem:[#allocation2 + $0x538] sm:$0xff]
    %v439 = vld [vmem:[#allocation2 + $0x540] sm:$0xff]
    %v440 = vld [vmem:[#allocation2 + $0x548] sm:$0xff]
    %v441 = vld [vmem:[#allocation2 + $0x550] sm:$0xff]
    %v442 = vld [vmem:[#allocation2 + $0x558] sm:$0xff]
    %v443 = vld [vmem:[#allocation2 + $0x560] sm:$0xff]
    %v444 = vld [vmem:[#allocation2 + $0x568] sm:$0xff]
    %v445 = vld [vmem:[#allocation2 + $0x570] sm:$0xff]
    %v446 = vld [vmem:[#allocation2 + $0x578] sm:$0xff]
    %v447 = vld [vmem:[#allocation2 + $0x580] sm:$0xff]
    %v448 = vld [vmem:[#allocation2 + $0x588] sm:$0xff]
    %v449 = vld [vmem:[#allocation2 + $0x590] sm:$0xff]
    %v450 = vld [vmem:[#allocation2 + $0x598] sm:$0xff]
    %v451 = vld [vmem:[#allocation2 + $0x5a0] sm:$0xff]
    %v452 = vld [vmem:[#allocation2 + $0x5a8] sm:$0xff]
    %v453 = vld [vmem:[#allocation2 + $0x5b0] sm:$0xff]
    %v454 = vld [vmem:[#allocation2 + $0x5b8] sm:$0xff]
    %v455 = vld [vmem:[#allocation2 + $0x5c0] sm:$0xff]
    %v456 = vld [vmem:[#allocation2 + $0x5c8] sm:$0xff]
    %v457 = vld [vmem:[#allocation2 + $0x5d0] sm:$0xff]
    %v458 = vld [vmem:[#allocation2 + $0x5d8] sm:$0xff]
    %v459 = vld [vmem:[#allocation2 + $0x5e0] sm:$0xff]
    %v460 = vld [vmem:[#allocation2 + $0x5e8] sm:$0xff]
    %v461 = vld [vmem:[#allocation2 + $0x5f0] sm:$0xff]
    %v462 = vld [vmem:[#allocation2 + $0x5f8] sm:$0xff]
    %v463 = vld [vmem:[#allocation2 + $0x600] sm:$0xff]
    %v464 = vld [vmem:[#allocation2 + $0x608] sm:$0xff]
    %v465 = vld [vmem:[#allocation2 + $0x610] sm:$0xff]
    %v466 = vld [vmem:[#allocation2 + $0x618] sm:$0xff]
    %v467 = vld [vmem:[#allocation2 + $0x620] sm:$0xff]
    %v468 = vld [vmem:[#allocation2 + $0x628] sm:$0xff]
    %v469 = vld [vmem:[#allocation2 + $0x630] sm:$0xff]
    %v470 = vld [vmem:[#allocation2 + $0x638] sm:$0xff]
    %v471 = vld [vmem:[#allocation2 + $0x640] sm:$0xff]
    %v472 = vld [vmem:[#allocation2 + $0x648] sm:$0xff]
    %v473 = vld [vmem:[#allocation2 + $0x650] sm:$0xff]
    %v474 = vld [vmem:[#allocation2 + $0x658] sm:$0xff]
    %v475 = vld [vmem:[#allocation2 + $0x660] sm:$0xff]
    %v476 = vld [vmem:[#allocation2 + $0x668] sm:$0xff]
    %v477 = vld [vmem:[#allocation2 + $0x670] sm:$0xff]
    %v478 = vld [vmem:[#allocation2 + $0x678] sm:$0xff]
    %v479 = vld [vmem:[#allocation2 + $0x680] sm:$0xff]
    %v480 = vld [vmem:[#allocation2 + $0x688] sm:$0xff]
    %v481 = vld [vmem:[#allocation2 + $0x690] sm:$0xff]
    %v482 = vld [vmem:[#allocation2 + $0x698] sm:$0xff]
    %v483 = vld [vmem:[#allocation2 + $0x6a0] sm:$0xff]
    %v484 = vld [vmem:[#allocation2 + $0x6a8] sm:$0xff]
    %v485 = vld [vmem:[#allocation2 + $0x6b0] sm:$0xff]
    %v486 = vld [vmem:[#allocation2 + $0x6b8] sm:$0xff]
    %v487 = vld [vmem:[#allocation2 + $0x6c0] sm:$0xff]
    %v488 = vld [vmem:[#allocation2 + $0x6c8] sm:$0xff]
    %v489 = vld [vmem:[#allocation2 + $0x6d0] sm:$0xff]
    %v490 = vld [vmem:[#allocation2 + $0x6d8] sm:$0xff]
    %v491 = vld [vmem:[#allocation2 + $0x6e0] sm:$0xff]
    %v492 = vld [vmem:[#allocation2 + $0x6e8] sm:$0xff]
    %v493 = vld [vmem:[#allocation2 + $0x6f0] sm:$0xff]
    %v494 = vld [vmem:[#allocation2 + $0x6f8] sm:$0xff]
    %v495 = vld [vmem:[#allocation2 + $0x700] sm:$0xff]
    %v496 = vld [vmem:[#allocation2 + $0x708] sm:$0xff]
    %v497 = vld [vmem:[#allocation2 + $0x710] sm:$0xff]
    %v498 = vld [vmem:[#allocation2 + $0x718] sm:$0xff]
    %v499 = vld [vmem:[#allocation2 + $0x720] sm:$0xff]
    %v500 = vld [vmem:[#allocation2 + $0x728] sm:$0xff]
    %v501 = vld [vmem:[#allocation2 + $0x730] sm:$0xff]
    %v502 = vld [vmem:[#allocation2 + $0x738] sm:$0xff]
    %v503 = vld [vmem:[#allocation2 + $0x740] sm:$0xff]
    %v504 = vld [vmem:[#allocation2 + $0x748] sm:$0xff]
    %v505 = vld [vmem:[#allocation2 + $0x750] sm:$0xff]
    %v506 = vld [vmem:[#allocation2 + $0x758] sm:$0xff]
    %v507 = vld [vmem:[#allocation2 + $0x760] sm:$0xff]
    %v508 = vld [vmem:[#allocation2 + $0x768] sm:$0xff]
    %v509 = vld [vmem:[#allocation2 + $0x770] sm:$0xff]
    %v510 = vld [vmem:[#allocation2 + $0x778] sm:$0xff]
    %v511 = vld [vmem:[#allocation2 + $0x780] sm:$0xff]
    %v512 = vld [vmem:[#allocation2 + $0x788] sm:$0xff]
    %v513 = vld [vmem:[#allocation2 + $0x790] sm:$0xff]
    %v514 = vld [vmem:[#allocation2 + $0x798] sm:$0xff]
    %v515 = vld [vmem:[#allocation2 + $0x7a0] sm:$0xff]
    %v516 = vld [vmem:[#allocation2 + $0x7a8] sm:$0xff]
    %v517 = vld [vmem:[#allocation2 + $0x7b0] sm:$0xff]
    %v518 = vld [vmem:[#allocation2 + $0x7b8] sm:$0xff]
    %v519 = vld [vmem:[#allocation2 + $0x7c0] sm:$0xff]
    %v520 = vld [vmem:[#allocation2 + $0x7c8] sm:$0xff]
    %v521 = vld [vmem:[#allocation2 + $0x7d0] sm:$0xff]
    %v522 = vld [vmem:[#allocation2 + $0x7d8] sm:$0xff]
    %v523 = vld [vmem:[#allocation2 + $0x7e0] sm:$0xff]
    %v524 = vld [vmem:[#allocation2 + $0x7e8] sm:$0xff]
    %v525 = vld [vmem:[#allocation2 + $0x7f0] sm:$0xff]
    %v526 = vld [vmem:[#allocation2 + $0x7f8] sm:$0xff]
    %v527 = vld [vmem:[%s1] sm:$0xff]
    %v528 = vld [vmem:[%s1 + $0x8] sm:$0xff]
    %v529 = vlaneseq
    %v530 = vand.u32 %v529, 127
    %531 = vset.pattern.permute.xlu0 0
    %532 = vperm.xlu0 %531, %v527
    %v533 = vpop.permute.xlu0 %532
    %534 = vset.pattern.permute.xlu0 0
    %535 = vperm.xlu0 %534, %v528
    %v536 = vpop.permute.xlu0 %535
    %vm537 = vcmp.eq.s32.totalorder %v533, %v530
    %vm538 = vcmp.eq.s32.totalorder %v536, %v530
    %v539 = vsel %vm537, 1, 0
    %v540 = vsel %vm538, 1, 0
    %v541 = vcvt.s32.f32 %v539
    %v542 = vcvt.s32.f32 %v540
    %v543 = vld [vmem:[#allocation4] sm:$0xff]
    %v544 = vld [vmem:[#allocation4 + $0x8] sm:$0xff]
    %v545 = vld [vmem:[#allocation4 + $0x10] sm:$0xff]
    %v546 = vld [vmem:[#allocation4 + $0x18] sm:$0xff]
    %v547 = vld [vmem:[#allocation4 + $0x20] sm:$0xff]
    %v548 = vld [vmem:[#allocation4 + $0x28] sm:$0xff]
    %v549 = vld [vmem:[#allocation4 + $0x30] sm:$0xff]
    %v550 = vld [vmem:[#allocation4 + $0x38] sm:$0xff]
    %vm551 = vcmask 130048
    %v553 = vsel %vm551, %v541, 0
    %v556 = vsel %vm551, %v542, 0
    %558 = vmatprep.subr.mxu0 0.0
    %559 = vmatpush1.msra.mxu0 0.0
    %560 = vmatprep.subr.mxu0 0.0
    %561 = vmatpush1.msra.mxu0 0.0
    %562 = vmatprep.subr.mxu0 0.0
    %563 = vmatpush1.msra.mxu0 0.0
    %564 = vmatprep.subr.mxu0 0.0
    %565 = vmatpush1.msra.mxu0 0.0
    %566 = vmatprep.subr.mxu0 0.0
    %567 = vmatpush1.msra.mxu0 0.0
    %568 = vmatprep.subr.mxu0 0.0
    %569 = vmatpush1.msra.mxu0 0.0
    %570 = vmatprep.subr.mxu0 0.0
    %571 = vmatpush1.msra.mxu0 0.0
    %572 = vmatprep.subr.mxu0 0.0
    %573 = vmatpush1.msra.mxu0 0.0
    %574 = vmatprep.subr.mxu0 0.0
    %575 = vmatpush1.msra.mxu0 0.0
    %576 = vmatprep.subr.mxu0 0.0
    %577 = vmatpush1.msra.mxu0 0.0
    %578 = vmatprep.subr.mxu0 0.0
    %579 = vmatpush1.msra.mxu0 0.0
    %580 = vmatprep.subr.mxu0 0.0
    %581 = vmatpush1.msra.mxu0 0.0
    %582 = vmatprep.subr.mxu0 0.0
    %583 = vmatpush1.msra.mxu0 0.0
    %584 = vmatprep.subr.mxu0 0.0
    %585 = vmatpush1.msra.mxu0 0.0
    %586 = vmatprep.subr.mxu0 %v548
    %587 = vmatpush1.msra.mxu0 %v547
    %588 = vmatprep.subr.mxu0 %v544
    %589 = vmatpush1.msra.mxu0 %v543
    %590 = vmatprep.subr.mxu0 0.0
    %591 = vmatpush2.msra.mxu0 0.0
    %592 = vmatprep.subr.mxu0 0.0
    %593 = vmatpush2.msra.mxu0 0.0
    %594 = vmatprep.subr.mxu0 0.0
    %595 = vmatpush2.msra.mxu0 0.0
    %596 = vmatprep.subr.mxu0 0.0
    %597 = vmatpush2.msra.mxu0 0.0
    %598 = vmatprep.subr.mxu0 0.0
    %599 = vmatpush2.msra.mxu0 0.0
    %600 = vmatprep.subr.mxu0 0.0
    %601 = vmatpush2.msra.mxu0 0.0
    %602 = vmatprep.subr.mxu0 0.0
    %603 = vmatpush2.msra.mxu0 0.0
    %604 = vmatprep.subr.mxu0 0.0
    %605 = vmatpush2.msra.mxu0 0.0
    %606 = vmatprep.subr.mxu0 0.0
    %607 = vmatpush2.msra.mxu0 0.0
    %608 = vmatprep.subr.mxu0 0.0
    %609 = vmatpush2.msra.mxu0 0.0
    %610 = vmatprep.subr.mxu0 0.0
    %611 = vmatpush2.msra.mxu0 0.0
    %612 = vmatprep.subr.mxu0 0.0
    %613 = vmatpush2.msra.mxu0 0.0
    %614 = vmatprep.subr.mxu0 0.0
    %615 = vmatpush2.msra.mxu0 0.0
    %616 = vmatprep.subr.mxu0 0.0
    %617 = vmatpush2.msra.mxu0 0.0
    %618 = vmatprep.subr.mxu0 0.0
    %619 = vmatpush2.msra.mxu0 0.0
    %620 = vmatprep.subr.mxu0 0.0
    %621 = vmatpush2.msra.mxu0 0.0
    %622 = vmatprep.mubr.f32.mxu0 0.0
    %623 = vmatmul.mubr.f32.gmra.mxu0 %v553
    %v624 = vpop.f32.mrf.mxu0
    %v625 = vadd.f32 0.0, %v624
    %v626 = vpop.f32.mrf.mxu0
    %v627 = vadd.f32 0.0, %v626
    %628 = vmatprep.mubr.f32.mxu0 0.0
    %629 = vmatmul.mubr.f32.gmra.mxu0 %v556
    %v630 = vpop.f32.mrf.mxu0
    %v631 = vadd.f32 0.0, %v630
    %v632 = vpop.f32.mrf.mxu0
    %v633 = vadd.f32 0.0, %v632
    %634 = vdwg.mxu0
    %635 = vmatprep.subr.mxu0 0.0
    %636 = vmatpush1.msra.mxu0 0.0
    %637 = vmatprep.subr.mxu0 0.0
    %638 = vmatpush1.msra.mxu0 0.0
    %639 = vmatprep.subr.mxu0 0.0
    %640 = vmatpush1.msra.mxu0 0.0
    %641 = vmatprep.subr.mxu0 0.0
    %642 = vmatpush1.msra.mxu0 0.0
    %643 = vmatprep.subr.mxu0 0.0
    %644 = vmatpush1.msra.mxu0 0.0
    %645 = vmatprep.subr.mxu0 0.0
    %646 = vmatpush1.msra.mxu0 0.0
    %647 = vmatprep.subr.mxu0 0.0
    %648 = vmatpush1.msra.mxu0 0.0
    %649 = vmatprep.subr.mxu0 0.0
    %650 = vmatpush1.msra.mxu0 0.0
    %651 = vmatprep.subr.mxu0 0.0
    %652 = vmatpush1.msra.mxu0 0.0
    %653 = vmatprep.subr.mxu0 0.0
    %654 = vmatpush1.msra.mxu0 0.0
    %655 = vmatprep.subr.mxu0 0.0
    %656 = vmatpush1.msra.mxu0 0.0
    %657 = vmatprep.subr.mxu0 0.0
    %658 = vmatpush1.msra.mxu0 0.0
    %659 = vmatprep.subr.mxu0 0.0
    %660 = vmatpush1.msra.mxu0 0.0
    %661 = vmatprep.subr.mxu0 0.0
    %662 = vmatpush1.msra.mxu0 0.0
    %663 = vmatprep.subr.mxu0 %v550
    %664 = vmatpush1.msra.mxu0 %v549
    %665 = vmatprep.subr.mxu0 %v546
    %666 = vmatpush1.msra.mxu0 %v545
    %667 = vmatprep.subr.mxu0 0.0
    %668 = vmatpush2.msra.mxu0 0.0
    %669 = vmatprep.subr.mxu0 0.0
    %670 = vmatpush2.msra.mxu0 0.0
    %671 = vmatprep.subr.mxu0 0.0
    %672 = vmatpush2.msra.mxu0 0.0
    %673 = vmatprep.subr.mxu0 0.0
    %674 = vmatpush2.msra.mxu0 0.0
    %675 = vmatprep.subr.mxu0 0.0
    %676 = vmatpush2.msra.mxu0 0.0
    %677 = vmatprep.subr.mxu0 0.0
    %678 = vmatpush2.msra.mxu0 0.0
    %679 = vmatprep.subr.mxu0 0.0
    %680 = vmatpush2.msra.mxu0 0.0
    %681 = vmatprep.subr.mxu0 0.0
    %682 = vmatpush2.msra.mxu0 0.0
    %683 = vmatprep.subr.mxu0 0.0
    %684 = vmatpush2.msra.mxu0 0.0
    %685 = vmatprep.subr.mxu0 0.0
    %686 = vmatpush2.msra.mxu0 0.0
    %687 = vmatprep.subr.mxu0 0.0
    %688 = vmatpush2.msra.mxu0 0.0
    %689 = vmatprep.subr.mxu0 0.0
    %690 = vmatpush2.msra.mxu0 0.0
    %691 = vmatprep.subr.mxu0 0.0
    %692 = vmatpush2.msra.mxu0 0.0
    %693 = vmatprep.subr.mxu0 0.0
    %694 = vmatpush2.msra.mxu0 0.0
    %695 = vmatprep.subr.mxu0 0.0
    %696 = vmatpush2.msra.mxu0 0.0
    %697 = vmatprep.subr.mxu0 0.0
    %698 = vmatpush2.msra.mxu0 0.0
    %699 = vmatprep.mubr.f32.mxu0 0.0
    %700 = vmatmul.mubr.f32.gmra.mxu0 %v553
    %v701 = vpop.f32.mrf.mxu0
    %v702 = vadd.f32 0.0, %v701
    %v703 = vpop.f32.mrf.mxu0
    %v704 = vadd.f32 0.0, %v703
    %705 = vmatprep.mubr.f32.mxu0 0.0
    %706 = vmatmul.mubr.f32.gmra.mxu0 %v556
    %v707 = vpop.f32.mrf.mxu0
    %v708 = vadd.f32 0.0, %v707
    %v709 = vpop.f32.mrf.mxu0
    %v710 = vadd.f32 0.0, %v709
    %711 = vdwg.mxu0
    %v968 = vunpack.c.l.b16 %v271
    %v969 = vunpack.c.h.b16 %v271
    %v970 = vunpack.c.l.b16 %v272
    %v971 = vunpack.c.h.b16 %v272
    %v972 = vunpack.c.l.b16 %v273
    %v973 = vunpack.c.h.b16 %v273
    %v974 = vunpack.c.l.b16 %v274
    %v975 = vunpack.c.h.b16 %v274
    %v976 = vunpack.c.l.b16 %v275
    %v977 = vunpack.c.h.b16 %v275
    %v978 = vunpack.c.l.b16 %v276
    %v979 = vunpack.c.h.b16 %v276
    %v980 = vunpack.c.l.b16 %v277
    %v981 = vunpack.c.h.b16 %v277
    %v982 = vunpack.c.l.b16 %v278
    %v983 = vunpack.c.h.b16 %v278
    %v984 = vunpack.c.l.b16 %v279
    %v985 = vunpack.c.h.b16 %v279
    %v986 = vunpack.c.l.b16 %v280
    %v987 = vunpack.c.h.b16 %v280
    %v988 = vunpack.c.l.b16 %v281
    %v989 = vunpack.c.h.b16 %v281
    %v990 = vunpack.c.l.b16 %v282
    %v991 = vunpack.c.h.b16 %v282
    %v992 = vunpack.c.l.b16 %v283
    %v993 = vunpack.c.h.b16 %v283
    %v994 = vunpack.c.l.b16 %v284
    %v995 = vunpack.c.h.b16 %v284
    %v996 = vunpack.c.l.b16 %v285
    %v997 = vunpack.c.h.b16 %v285
    %v998 = vunpack.c.l.b16 %v286
    %v999 = vunpack.c.h.b16 %v286
    %v1000 = vunpack.c.l.b16 %v287
    %v1001 = vunpack.c.h.b16 %v287
    %v1002 = vunpack.c.l.b16 %v288
    %v1003 = vunpack.c.h.b16 %v288
    %v1004 = vunpack.c.l.b16 %v289
    %v1005 = vunpack.c.h.b16 %v289
    %v1006 = vunpack.c.l.b16 %v290
    %v1007 = vunpack.c.h.b16 %v290
    %v1008 = vunpack.c.l.b16 %v291
    %v1009 = vunpack.c.h.b16 %v291
    %v1010 = vunpack.c.l.b16 %v292
    %v1011 = vunpack.c.h.b16 %v292
    %v1012 = vunpack.c.l.b16 %v293
    %v1013 = vunpack.c.h.b16 %v293
    %v1014 = vunpack.c.l.b16 %v294
    %v1015 = vunpack.c.h.b16 %v294
    %v1016 = vunpack.c.l.b16 %v295
    %v1017 = vunpack.c.h.b16 %v295
    %v1018 = vunpack.c.l.b16 %v296
    %v1019 = vunpack.c.h.b16 %v296
    %v1020 = vunpack.c.l.b16 %v297
    %v1021 = vunpack.c.h.b16 %v297
    %v1022 = vunpack.c.l.b16 %v298
    %v1023 = vunpack.c.h.b16 %v298
    %v1024 = vunpack.c.l.b16 %v299
    %v1025 = vunpack.c.h.b16 %v299
    %v1026 = vunpack.c.l.b16 %v300
    %v1027 = vunpack.c.h.b16 %v300
    %v1028 = vunpack.c.l.b16 %v301
    %v1029 = vunpack.c.h.b16 %v301
    %v1030 = vunpack.c.l.b16 %v302
    %v1031 = vunpack.c.h.b16 %v302
    %v1032 = vunpack.c.l.b16 %v303
    %v1033 = vunpack.c.h.b16 %v303
    %v1034 = vunpack.c.l.b16 %v304
    %v1035 = vunpack.c.h.b16 %v304
    %v1036 = vunpack.c.l.b16 %v305
    %v1037 = vunpack.c.h.b16 %v305
    %v1038 = vunpack.c.l.b16 %v306
    %v1039 = vunpack.c.h.b16 %v306
    %v1040 = vunpack.c.l.b16 %v307
    %v1041 = vunpack.c.h.b16 %v307
    %v1042 = vunpack.c.l.b16 %v308
    %v1043 = vunpack.c.h.b16 %v308
    %v1044 = vunpack.c.l.b16 %v309
    %v1045 = vunpack.c.h.b16 %v309
    %v1046 = vunpack.c.l.b16 %v310
    %v1047 = vunpack.c.h.b16 %v310
    %v1048 = vunpack.c.l.b16 %v311
    %v1049 = vunpack.c.h.b16 %v311
    %v1050 = vunpack.c.l.b16 %v312
    %v1051 = vunpack.c.h.b16 %v312
    %v1052 = vunpack.c.l.b16 %v313
    %v1053 = vunpack.c.h.b16 %v313
    %v1054 = vunpack.c.l.b16 %v314
    %v1055 = vunpack.c.h.b16 %v314
    %v1056 = vunpack.c.l.b16 %v315
    %v1057 = vunpack.c.h.b16 %v315
    %v1058 = vunpack.c.l.b16 %v316
    %v1059 = vunpack.c.h.b16 %v316
    %v1060 = vunpack.c.l.b16 %v317
    %v1061 = vunpack.c.h.b16 %v317
    %v1062 = vunpack.c.l.b16 %v318
    %v1063 = vunpack.c.h.b16 %v318
    %v1064 = vunpack.c.l.b16 %v319
    %v1065 = vunpack.c.h.b16 %v319
    %v1066 = vunpack.c.l.b16 %v320
    %v1067 = vunpack.c.h.b16 %v320
    %v1068 = vunpack.c.l.b16 %v321
    %v1069 = vunpack.c.h.b16 %v321
    %v1070 = vunpack.c.l.b16 %v322
    %v1071 = vunpack.c.h.b16 %v322
    %v1072 = vunpack.c.l.b16 %v323
    %v1073 = vunpack.c.h.b16 %v323
    %v1074 = vunpack.c.l.b16 %v324
    %v1075 = vunpack.c.h.b16 %v324
    %v1076 = vunpack.c.l.b16 %v325
    %v1077 = vunpack.c.h.b16 %v325
    %v1078 = vunpack.c.l.b16 %v326
    %v1079 = vunpack.c.h.b16 %v326
    %v1080 = vunpack.c.l.b16 %v327
    %v1081 = vunpack.c.h.b16 %v327
    %v1082 = vunpack.c.l.b16 %v328
    %v1083 = vunpack.c.h.b16 %v328
    %v1084 = vunpack.c.l.b16 %v329
    %v1085 = vunpack.c.h.b16 %v329
    %v1086 = vunpack.c.l.b16 %v330
    %v1087 = vunpack.c.h.b16 %v330
    %v1088 = vunpack.c.l.b16 %v331
    %v1089 = vunpack.c.h.b16 %v331
    %v1090 = vunpack.c.l.b16 %v332
    %v1091 = vunpack.c.h.b16 %v332
    %v1092 = vunpack.c.l.b16 %v333
    %v1093 = vunpack.c.h.b16 %v333
    %v1094 = vunpack.c.l.b16 %v334
    %v1095 = vunpack.c.h.b16 %v334
    %v1096 = vunpack.c.l.b16 %v335
    %v1097 = vunpack.c.h.b16 %v335
    %v1098 = vunpack.c.l.b16 %v336
    %v1099 = vunpack.c.h.b16 %v336
    %v1100 = vunpack.c.l.b16 %v337
    %v1101 = vunpack.c.h.b16 %v337
    %v1102 = vunpack.c.l.b16 %v338
    %v1103 = vunpack.c.h.b16 %v338
    %v1104 = vunpack.c.l.b16 %v339
    %v1105 = vunpack.c.h.b16 %v339
    %v1106 = vunpack.c.l.b16 %v340
    %v1107 = vunpack.c.h.b16 %v340
    %v1108 = vunpack.c.l.b16 %v341
    %v1109 = vunpack.c.h.b16 %v341
    %v1110 = vunpack.c.l.b16 %v342
    %v1111 = vunpack.c.h.b16 %v342
    %v1112 = vunpack.c.l.b16 %v343
    %v1113 = vunpack.c.h.b16 %v343
    %v1114 = vunpack.c.l.b16 %v344
    %v1115 = vunpack.c.h.b16 %v344
    %v1116 = vunpack.c.l.b16 %v345
    %v1117 = vunpack.c.h.b16 %v345
    %v1118 = vunpack.c.l.b16 %v346
    %v1119 = vunpack.c.h.b16 %v346
    %v1120 = vunpack.c.l.b16 %v347
    %v1121 = vunpack.c.h.b16 %v347
    %v1122 = vunpack.c.l.b16 %v348
    %v1123 = vunpack.c.h.b16 %v348
    %v1124 = vunpack.c.l.b16 %v349
    %v1125 = vunpack.c.h.b16 %v349
    %v1126 = vunpack.c.l.b16 %v350
    %v1127 = vunpack.c.h.b16 %v350
    %v1128 = vunpack.c.l.b16 %v351
    %v1129 = vunpack.c.h.b16 %v351
    %v1130 = vunpack.c.l.b16 %v352
    %v1131 = vunpack.c.h.b16 %v352
    %v1132 = vunpack.c.l.b16 %v353
    %v1133 = vunpack.c.h.b16 %v353
    %v1134 = vunpack.c.l.b16 %v354
    %v1135 = vunpack.c.h.b16 %v354
    %v1136 = vunpack.c.l.b16 %v355
    %v1137 = vunpack.c.h.b16 %v355
    %v1138 = vunpack.c.l.b16 %v356
    %v1139 = vunpack.c.h.b16 %v356
    %v1140 = vunpack.c.l.b16 %v357
    %v1141 = vunpack.c.h.b16 %v357
    %v1142 = vunpack.c.l.b16 %v358
    %v1143 = vunpack.c.h.b16 %v358
    %v1144 = vunpack.c.l.b16 %v359
    %v1145 = vunpack.c.h.b16 %v359
    %v1146 = vunpack.c.l.b16 %v360
    %v1147 = vunpack.c.h.b16 %v360
    %v1148 = vunpack.c.l.b16 %v361
    %v1149 = vunpack.c.h.b16 %v361
    %v1150 = vunpack.c.l.b16 %v362
    %v1151 = vunpack.c.h.b16 %v362
    %v1152 = vunpack.c.l.b16 %v363
    %v1153 = vunpack.c.h.b16 %v363
    %v1154 = vunpack.c.l.b16 %v364
    %v1155 = vunpack.c.h.b16 %v364
    %v1156 = vunpack.c.l.b16 %v365
    %v1157 = vunpack.c.h.b16 %v365
    %v1158 = vunpack.c.l.b16 %v366
    %v1159 = vunpack.c.h.b16 %v366
    %v1160 = vunpack.c.l.b16 %v367
    %v1161 = vunpack.c.h.b16 %v367
    %v1162 = vunpack.c.l.b16 %v368
    %v1163 = vunpack.c.h.b16 %v368
    %v1164 = vunpack.c.l.b16 %v369
    %v1165 = vunpack.c.h.b16 %v369
    %v1166 = vunpack.c.l.b16 %v370
    %v1167 = vunpack.c.h.b16 %v370
    %v1168 = vunpack.c.l.b16 %v371
    %v1169 = vunpack.c.h.b16 %v371
    %v1170 = vunpack.c.l.b16 %v372
    %v1171 = vunpack.c.h.b16 %v372
    %v1172 = vunpack.c.l.b16 %v373
    %v1173 = vunpack.c.h.b16 %v373
    %v1174 = vunpack.c.l.b16 %v374
    %v1175 = vunpack.c.h.b16 %v374
    %v1176 = vunpack.c.l.b16 %v375
    %v1177 = vunpack.c.h.b16 %v375
    %v1178 = vunpack.c.l.b16 %v376
    %v1179 = vunpack.c.h.b16 %v376
    %v1180 = vunpack.c.l.b16 %v377
    %v1181 = vunpack.c.h.b16 %v377
    %v1182 = vunpack.c.l.b16 %v378
    %v1183 = vunpack.c.h.b16 %v378
    %v1184 = vunpack.c.l.b16 %v379
    %v1185 = vunpack.c.h.b16 %v379
    %v1186 = vunpack.c.l.b16 %v380
    %v1187 = vunpack.c.h.b16 %v380
    %v1188 = vunpack.c.l.b16 %v381
    %v1189 = vunpack.c.h.b16 %v381
    %v1190 = vunpack.c.l.b16 %v382
    %v1191 = vunpack.c.h.b16 %v382
    %v1192 = vunpack.c.l.b16 %v383
    %v1193 = vunpack.c.h.b16 %v383
    %v1194 = vunpack.c.l.b16 %v384
    %v1195 = vunpack.c.h.b16 %v384
    %v1196 = vunpack.c.l.b16 %v385
    %v1197 = vunpack.c.h.b16 %v385
    %v1198 = vunpack.c.l.b16 %v386
    %v1199 = vunpack.c.h.b16 %v386
    %v1200 = vunpack.c.l.b16 %v387
    %v1201 = vunpack.c.h.b16 %v387
    %v1202 = vunpack.c.l.b16 %v388
    %v1203 = vunpack.c.h.b16 %v388
    %v1204 = vunpack.c.l.b16 %v389
    %v1205 = vunpack.c.h.b16 %v389
    %v1206 = vunpack.c.l.b16 %v390
    %v1207 = vunpack.c.h.b16 %v390
    %v1208 = vunpack.c.l.b16 %v391
    %v1209 = vunpack.c.h.b16 %v391
    %v1210 = vunpack.c.l.b16 %v392
    %v1211 = vunpack.c.h.b16 %v392
    %v1212 = vunpack.c.l.b16 %v393
    %v1213 = vunpack.c.h.b16 %v393
    %v1214 = vunpack.c.l.b16 %v394
    %v1215 = vunpack.c.h.b16 %v394
    %v1216 = vunpack.c.l.b16 %v395
    %v1217 = vunpack.c.h.b16 %v395
    %v1218 = vunpack.c.l.b16 %v396
    %v1219 = vunpack.c.h.b16 %v396
    %v1220 = vunpack.c.l.b16 %v397
    %v1221 = vunpack.c.h.b16 %v397
    %v1222 = vunpack.c.l.b16 %v398
    %v1223 = vunpack.c.h.b16 %v398
    %v1224 = vunpack.c.l.b16 %v399
    %v1225 = vunpack.c.h.b16 %v399
    %v1226 = vunpack.c.l.b16 %v400
    %v1227 = vunpack.c.h.b16 %v400
    %v1228 = vunpack.c.l.b16 %v401
    %v1229 = vunpack.c.h.b16 %v401
    %v1230 = vunpack.c.l.b16 %v402
    %v1231 = vunpack.c.h.b16 %v402
    %v1232 = vunpack.c.l.b16 %v403
    %v1233 = vunpack.c.h.b16 %v403
    %v1234 = vunpack.c.l.b16 %v404
    %v1235 = vunpack.c.h.b16 %v404
    %v1236 = vunpack.c.l.b16 %v405
    %v1237 = vunpack.c.h.b16 %v405
    %v1238 = vunpack.c.l.b16 %v406
    %v1239 = vunpack.c.h.b16 %v406
    %v1240 = vunpack.c.l.b16 %v407
    %v1241 = vunpack.c.h.b16 %v407
    %v1242 = vunpack.c.l.b16 %v408
    %v1243 = vunpack.c.h.b16 %v408
    %v1244 = vunpack.c.l.b16 %v409
    %v1245 = vunpack.c.h.b16 %v409
    %v1246 = vunpack.c.l.b16 %v410
    %v1247 = vunpack.c.h.b16 %v410
    %v1248 = vunpack.c.l.b16 %v411
    %v1249 = vunpack.c.h.b16 %v411
    %v1250 = vunpack.c.l.b16 %v412
    %v1251 = vunpack.c.h.b16 %v412
    %v1252 = vunpack.c.l.b16 %v413
    %v1253 = vunpack.c.h.b16 %v413
    %v1254 = vunpack.c.l.b16 %v414
    %v1255 = vunpack.c.h.b16 %v414
    %v1256 = vunpack.c.l.b16 %v415
    %v1257 = vunpack.c.h.b16 %v415
    %v1258 = vunpack.c.l.b16 %v416
    %v1259 = vunpack.c.h.b16 %v416
    %v1260 = vunpack.c.l.b16 %v417
    %v1261 = vunpack.c.h.b16 %v417
    %v1262 = vunpack.c.l.b16 %v418
    %v1263 = vunpack.c.h.b16 %v418
    %v1264 = vunpack.c.l.b16 %v419
    %v1265 = vunpack.c.h.b16 %v419
    %v1266 = vunpack.c.l.b16 %v420
    %v1267 = vunpack.c.h.b16 %v420
    %v1268 = vunpack.c.l.b16 %v421
    %v1269 = vunpack.c.h.b16 %v421
    %v1270 = vunpack.c.l.b16 %v422
    %v1271 = vunpack.c.h.b16 %v422
    %v1272 = vunpack.c.l.b16 %v423
    %v1273 = vunpack.c.h.b16 %v423
    %v1274 = vunpack.c.l.b16 %v424
    %v1275 = vunpack.c.h.b16 %v424
    %v1276 = vunpack.c.l.b16 %v425
    %v1277 = vunpack.c.h.b16 %v425
    %v1278 = vunpack.c.l.b16 %v426
    %v1279 = vunpack.c.h.b16 %v426
    %v1280 = vunpack.c.l.b16 %v427
    %v1281 = vunpack.c.h.b16 %v427
    %v1282 = vunpack.c.l.b16 %v428
    %v1283 = vunpack.c.h.b16 %v428
    %v1284 = vunpack.c.l.b16 %v429
    %v1285 = vunpack.c.h.b16 %v429
    %v1286 = vunpack.c.l.b16 %v430
    %v1287 = vunpack.c.h.b16 %v430
    %v1288 = vunpack.c.l.b16 %v431
    %v1289 = vunpack.c.h.b16 %v431
    %v1290 = vunpack.c.l.b16 %v432
    %v1291 = vunpack.c.h.b16 %v432
    %v1292 = vunpack.c.l.b16 %v433
    %v1293 = vunpack.c.h.b16 %v433
    %v1294 = vunpack.c.l.b16 %v434
    %v1295 = vunpack.c.h.b16 %v434
    %v1296 = vunpack.c.l.b16 %v435
    %v1297 = vunpack.c.h.b16 %v435
    %v1298 = vunpack.c.l.b16 %v436
    %v1299 = vunpack.c.h.b16 %v436
    %v1300 = vunpack.c.l.b16 %v437
    %v1301 = vunpack.c.h.b16 %v437
    %v1302 = vunpack.c.l.b16 %v438
    %v1303 = vunpack.c.h.b16 %v438
    %v1304 = vunpack.c.l.b16 %v439
    %v1305 = vunpack.c.h.b16 %v439
    %v1306 = vunpack.c.l.b16 %v440
    %v1307 = vunpack.c.h.b16 %v440
    %v1308 = vunpack.c.l.b16 %v441
    %v1309 = vunpack.c.h.b16 %v441
    %v1310 = vunpack.c.l.b16 %v442
    %v1311 = vunpack.c.h.b16 %v442
    %v1312 = vunpack.c.l.b16 %v443
    %v1313 = vunpack.c.h.b16 %v443
    %v1314 = vunpack.c.l.b16 %v444
    %v1315 = vunpack.c.h.b16 %v444
    %v1316 = vunpack.c.l.b16 %v445
    %v1317 = vunpack.c.h.b16 %v445
    %v1318 = vunpack.c.l.b16 %v446
    %v1319 = vunpack.c.h.b16 %v446
    %v1320 = vunpack.c.l.b16 %v447
    %v1321 = vunpack.c.h.b16 %v447
    %v1322 = vunpack.c.l.b16 %v448
    %v1323 = vunpack.c.h.b16 %v448
    %v1324 = vunpack.c.l.b16 %v449
    %v1325 = vunpack.c.h.b16 %v449
    %v1326 = vunpack.c.l.b16 %v450
    %v1327 = vunpack.c.h.b16 %v450
    %v1328 = vunpack.c.l.b16 %v451
    %v1329 = vunpack.c.h.b16 %v451
    %v1330 = vunpack.c.l.b16 %v452
    %v1331 = vunpack.c.h.b16 %v452
    %v1332 = vunpack.c.l.b16 %v453
    %v1333 = vunpack.c.h.b16 %v453
    %v1334 = vunpack.c.l.b16 %v454
    %v1335 = vunpack.c.h.b16 %v454
    %v1336 = vunpack.c.l.b16 %v455
    %v1337 = vunpack.c.h.b16 %v455
    %v1338 = vunpack.c.l.b16 %v456
    %v1339 = vunpack.c.h.b16 %v456
    %v1340 = vunpack.c.l.b16 %v457
    %v1341 = vunpack.c.h.b16 %v457
    %v1342 = vunpack.c.l.b16 %v458
    %v1343 = vunpack.c.h.b16 %v458
    %v1344 = vunpack.c.l.b16 %v459
    %v1345 = vunpack.c.h.b16 %v459
    %v1346 = vunpack.c.l.b16 %v460
    %v1347 = vunpack.c.h.b16 %v460
    %v1348 = vunpack.c.l.b16 %v461
    %v1349 = vunpack.c.h.b16 %v461
    %v1350 = vunpack.c.l.b16 %v462
    %v1351 = vunpack.c.h.b16 %v462
    %v1352 = vunpack.c.l.b16 %v463
    %v1353 = vunpack.c.h.b16 %v463
    %v1354 = vunpack.c.l.b16 %v464
    %v1355 = vunpack.c.h.b16 %v464
    %v1356 = vunpack.c.l.b16 %v465
    %v1357 = vunpack.c.h.b16 %v465
    %v1358 = vunpack.c.l.b16 %v466
    %v1359 = vunpack.c.h.b16 %v466
    %v1360 = vunpack.c.l.b16 %v467
    %v1361 = vunpack.c.h.b16 %v467
    %v1362 = vunpack.c.l.b16 %v468
    %v1363 = vunpack.c.h.b16 %v468
    %v1364 = vunpack.c.l.b16 %v469
    %v1365 = vunpack.c.h.b16 %v469
    %v1366 = vunpack.c.l.b16 %v470
    %v1367 = vunpack.c.h.b16 %v470
    %v1368 = vunpack.c.l.b16 %v471
    %v1369 = vunpack.c.h.b16 %v471
    %v1370 = vunpack.c.l.b16 %v472
    %v1371 = vunpack.c.h.b16 %v472
    %v1372 = vunpack.c.l.b16 %v473
    %v1373 = vunpack.c.h.b16 %v473
    %v1374 = vunpack.c.l.b16 %v474
    %v1375 = vunpack.c.h.b16 %v474
    %v1376 = vunpack.c.l.b16 %v475
    %v1377 = vunpack.c.h.b16 %v475
    %v1378 = vunpack.c.l.b16 %v476
    %v1379 = vunpack.c.h.b16 %v476
    %v1380 = vunpack.c.l.b16 %v477
    %v1381 = vunpack.c.h.b16 %v477
    %v1382 = vunpack.c.l.b16 %v478
    %v1383 = vunpack.c.h.b16 %v478
    %v1384 = vunpack.c.l.b16 %v479
    %v1385 = vunpack.c.h.b16 %v479
    %v1386 = vunpack.c.l.b16 %v480
    %v1387 = vunpack.c.h.b16 %v480
    %v1388 = vunpack.c.l.b16 %v481
    %v1389 = vunpack.c.h.b16 %v481
    %v1390 = vunpack.c.l.b16 %v482
    %v1391 = vunpack.c.h.b16 %v482
    %v1392 = vunpack.c.l.b16 %v483
    %v1393 = vunpack.c.h.b16 %v483
    %v1394 = vunpack.c.l.b16 %v484
    %v1395 = vunpack.c.h.b16 %v484
    %v1396 = vunpack.c.l.b16 %v485
    %v1397 = vunpack.c.h.b16 %v485
    %v1398 = vunpack.c.l.b16 %v486
    %v1399 = vunpack.c.h.b16 %v486
    %v1400 = vunpack.c.l.b16 %v487
    %v1401 = vunpack.c.h.b16 %v487
    %v1402 = vunpack.c.l.b16 %v488
    %v1403 = vunpack.c.h.b16 %v488
    %v1404 = vunpack.c.l.b16 %v489
    %v1405 = vunpack.c.h.b16 %v489
    %v1406 = vunpack.c.l.b16 %v490
    %v1407 = vunpack.c.h.b16 %v490
    %v1408 = vunpack.c.l.b16 %v491
    %v1409 = vunpack.c.h.b16 %v491
    %v1410 = vunpack.c.l.b16 %v492
    %v1411 = vunpack.c.h.b16 %v492
    %v1412 = vunpack.c.l.b16 %v493
    %v1413 = vunpack.c.h.b16 %v493
    %v1414 = vunpack.c.l.b16 %v494
    %v1415 = vunpack.c.h.b16 %v494
    %v1416 = vunpack.c.l.b16 %v495
    %v1417 = vunpack.c.h.b16 %v495
    %v1418 = vunpack.c.l.b16 %v496
    %v1419 = vunpack.c.h.b16 %v496
    %v1420 = vunpack.c.l.b16 %v497
    %v1421 = vunpack.c.h.b16 %v497
    %v1422 = vunpack.c.l.b16 %v498
    %v1423 = vunpack.c.h.b16 %v498
    %v1424 = vunpack.c.l.b16 %v499
    %v1425 = vunpack.c.h.b16 %v499
    %v1426 = vunpack.c.l.b16 %v500
    %v1427 = vunpack.c.h.b16 %v500
    %v1428 = vunpack.c.l.b16 %v501
    %v1429 = vunpack.c.h.b16 %v501
    %v1430 = vunpack.c.l.b16 %v502
    %v1431 = vunpack.c.h.b16 %v502
    %v1432 = vunpack.c.l.b16 %v503
    %v1433 = vunpack.c.h.b16 %v503
    %v1434 = vunpack.c.l.b16 %v504
    %v1435 = vunpack.c.h.b16 %v504
    %v1436 = vunpack.c.l.b16 %v505
    %v1437 = vunpack.c.h.b16 %v505
    %v1438 = vunpack.c.l.b16 %v506
    %v1439 = vunpack.c.h.b16 %v506
    %v1440 = vunpack.c.l.b16 %v507
    %v1441 = vunpack.c.h.b16 %v507
    %v1442 = vunpack.c.l.b16 %v508
    %v1443 = vunpack.c.h.b16 %v508
    %v1444 = vunpack.c.l.b16 %v509
    %v1445 = vunpack.c.h.b16 %v509
    %v1446 = vunpack.c.l.b16 %v510
    %v1447 = vunpack.c.h.b16 %v510
    %v1448 = vunpack.c.l.b16 %v511
    %v1449 = vunpack.c.h.b16 %v511
    %v1450 = vunpack.c.l.b16 %v512
    %v1451 = vunpack.c.h.b16 %v512
    %v1452 = vunpack.c.l.b16 %v513
    %v1453 = vunpack.c.h.b16 %v513
    %v1454 = vunpack.c.l.b16 %v514
    %v1455 = vunpack.c.h.b16 %v514
    %v1456 = vunpack.c.l.b16 %v515
    %v1457 = vunpack.c.h.b16 %v515
    %v1458 = vunpack.c.l.b16 %v516
    %v1459 = vunpack.c.h.b16 %v516
    %v1460 = vunpack.c.l.b16 %v517
    %v1461 = vunpack.c.h.b16 %v517
    %v1462 = vunpack.c.l.b16 %v518
    %v1463 = vunpack.c.h.b16 %v518
    %v1464 = vunpack.c.l.b16 %v519
    %v1465 = vunpack.c.h.b16 %v519
    %v1466 = vunpack.c.l.b16 %v520
    %v1467 = vunpack.c.h.b16 %v520
    %v1468 = vunpack.c.l.b16 %v521
    %v1469 = vunpack.c.h.b16 %v521
    %v1470 = vunpack.c.l.b16 %v522
    %v1471 = vunpack.c.h.b16 %v522
    %v1472 = vunpack.c.l.b16 %v523
    %v1473 = vunpack.c.h.b16 %v523
    %v1474 = vunpack.c.l.b16 %v524
    %v1475 = vunpack.c.h.b16 %v524
    %v1476 = vunpack.c.l.b16 %v525
    %v1477 = vunpack.c.h.b16 %v525
    %v1478 = vunpack.c.l.b16 %v526
    %v1479 = vunpack.c.h.b16 %v526
    %v1480 = vpack.c.b16 %v972, %v968
    %v1481 = vpack.c.b16 %v973, %v969
    %v1482 = vpack.c.b16 %v974, %v970
    %v1483 = vpack.c.b16 %v975, %v971
    %v1484 = vpack.c.b16 %v980, %v976
    %v1485 = vpack.c.b16 %v981, %v977
    %v1486 = vpack.c.b16 %v982, %v978
    %v1487 = vpack.c.b16 %v983, %v979
    %v1488 = vpack.c.b16 %v988, %v984
    %v1489 = vpack.c.b16 %v989, %v985
    %v1490 = vpack.c.b16 %v990, %v986
    %v1491 = vpack.c.b16 %v991, %v987
    %v1492 = vpack.c.b16 %v996, %v992
    %v1493 = vpack.c.b16 %v997, %v993
    %v1494 = vpack.c.b16 %v998, %v994
    %v1495 = vpack.c.b16 %v999, %v995
    %v1496 = vpack.c.b16 %v1004, %v1000
    %v1497 = vpack.c.b16 %v1005, %v1001
    %v1498 = vpack.c.b16 %v1006, %v1002
    %v1499 = vpack.c.b16 %v1007, %v1003
    %v1500 = vpack.c.b16 %v1012, %v1008
    %v1501 = vpack.c.b16 %v1013, %v1009
    %v1502 = vpack.c.b16 %v1014, %v1010
    %v1503 = vpack.c.b16 %v1015, %v1011
    %v1504 = vpack.c.b16 %v1020, %v1016
    %v1505 = vpack.c.b16 %v1021, %v1017
    %v1506 = vpack.c.b16 %v1022, %v1018
    %v1507 = vpack.c.b16 %v1023, %v1019
    %v1508 = vpack.c.b16 %v1028, %v1024
    %v1509 = vpack.c.b16 %v1029, %v1025
    %v1510 = vpack.c.b16 %v1030, %v1026
    %v1511 = vpack.c.b16 %v1031, %v1027
    %v1512 = vpack.c.b16 %v1036, %v1032
    %v1513 = vpack.c.b16 %v1037, %v1033
    %v1514 = vpack.c.b16 %v1038, %v1034
    %v1515 = vpack.c.b16 %v1039, %v1035
    %v1516 = vpack.c.b16 %v1044, %v1040
    %v1517 = vpack.c.b16 %v1045, %v1041
    %v1518 = vpack.c.b16 %v1046, %v1042
    %v1519 = vpack.c.b16 %v1047, %v1043
    %v1520 = vpack.c.b16 %v1052, %v1048
    %v1521 = vpack.c.b16 %v1053, %v1049
    %v1522 = vpack.c.b16 %v1054, %v1050
    %v1523 = vpack.c.b16 %v1055, %v1051
    %v1524 = vpack.c.b16 %v1060, %v1056
    %v1525 = vpack.c.b16 %v1061, %v1057
    %v1526 = vpack.c.b16 %v1062, %v1058
    %v1527 = vpack.c.b16 %v1063, %v1059
    %v1528 = vpack.c.b16 %v1068, %v1064
    %v1529 = vpack.c.b16 %v1069, %v1065
    %v1530 = vpack.c.b16 %v1070, %v1066
    %v1531 = vpack.c.b16 %v1071, %v1067
    %v1532 = vpack.c.b16 %v1076, %v1072
    %v1533 = vpack.c.b16 %v1077, %v1073
    %v1534 = vpack.c.b16 %v1078, %v1074
    %v1535 = vpack.c.b16 %v1079, %v1075
    %v1536 = vpack.c.b16 %v1084, %v1080
    %v1537 = vpack.c.b16 %v1085, %v1081
    %v1538 = vpack.c.b16 %v1086, %v1082
    %v1539 = vpack.c.b16 %v1087, %v1083
    %v1540 = vpack.c.b16 %v1092, %v1088
    %v1541 = vpack.c.b16 %v1093, %v1089
    %v1542 = vpack.c.b16 %v1094, %v1090
    %v1543 = vpack.c.b16 %v1095, %v1091
    %v1544 = vpack.c.b16 %v1100, %v1096
    %v1545 = vpack.c.b16 %v1101, %v1097
    %v1546 = vpack.c.b16 %v1102, %v1098
    %v1547 = vpack.c.b16 %v1103, %v1099
    %v1548 = vpack.c.b16 %v1108, %v1104
    %v1549 = vpack.c.b16 %v1109, %v1105
    %v1550 = vpack.c.b16 %v1110, %v1106
    %v1551 = vpack.c.b16 %v1111, %v1107
    %v1552 = vpack.c.b16 %v1116, %v1112
    %v1553 = vpack.c.b16 %v1117, %v1113
    %v1554 = vpack.c.b16 %v1118, %v1114
    %v1555 = vpack.c.b16 %v1119, %v1115
    %v1556 = vpack.c.b16 %v1124, %v1120
    %v1557 = vpack.c.b16 %v1125, %v1121
    %v1558 = vpack.c.b16 %v1126, %v1122
    %v1559 = vpack.c.b16 %v1127, %v1123
    %v1560 = vpack.c.b16 %v1132, %v1128
    %v1561 = vpack.c.b16 %v1133, %v1129
    %v1562 = vpack.c.b16 %v1134, %v1130
    %v1563 = vpack.c.b16 %v1135, %v1131
    %v1564 = vpack.c.b16 %v1140, %v1136
    %v1565 = vpack.c.b16 %v1141, %v1137
    %v1566 = vpack.c.b16 %v1142, %v1138
    %v1567 = vpack.c.b16 %v1143, %v1139
    %v1568 = vpack.c.b16 %v1148, %v1144
    %v1569 = vpack.c.b16 %v1149, %v1145
    %v1570 = vpack.c.b16 %v1150, %v1146
    %v1571 = vpack.c.b16 %v1151, %v1147
    %v1572 = vpack.c.b16 %v1156, %v1152
    %v1573 = vpack.c.b16 %v1157, %v1153
    %v1574 = vpack.c.b16 %v1158, %v1154
    %v1575 = vpack.c.b16 %v1159, %v1155
    %v1576 = vpack.c.b16 %v1164, %v1160
    %v1577 = vpack.c.b16 %v1165, %v1161
    %v1578 = vpack.c.b16 %v1166, %v1162
    %v1579 = vpack.c.b16 %v1167, %v1163
    %v1580 = vpack.c.b16 %v1172, %v1168
    %v1581 = vpack.c.b16 %v1173, %v1169
    %v1582 = vpack.c.b16 %v1174, %v1170
    %v1583 = vpack.c.b16 %v1175, %v1171
    %v1584 = vpack.c.b16 %v1180, %v1176
    %v1585 = vpack.c.b16 %v1181, %v1177
    %v1586 = vpack.c.b16 %v1182, %v1178
    %v1587 = vpack.c.b16 %v1183, %v1179
    %v1588 = vpack.c.b16 %v1188, %v1184
    %v1589 = vpack.c.b16 %v1189, %v1185
    %v1590 = vpack.c.b16 %v1190, %v1186
    %v1591 = vpack.c.b16 %v1191, %v1187
    %v1592 = vpack.c.b16 %v1196, %v1192
    %v1593 = vpack.c.b16 %v1197, %v1193
    %v1594 = vpack.c.b16 %v1198, %v1194
    %v1595 = vpack.c.b16 %v1199, %v1195
    %v1596 = vpack.c.b16 %v1204, %v1200
    %v1597 = vpack.c.b16 %v1205, %v1201
    %v1598 = vpack.c.b16 %v1206, %v1202
    %v1599 = vpack.c.b16 %v1207, %v1203
    %v1600 = vpack.c.b16 %v1212, %v1208
    %v1601 = vpack.c.b16 %v1213, %v1209
    %v1602 = vpack.c.b16 %v1214, %v1210
    %v1603 = vpack.c.b16 %v1215, %v1211
    %v1604 = vpack.c.b16 %v1220, %v1216
    %v1605 = vpack.c.b16 %v1221, %v1217
    %v1606 = vpack.c.b16 %v1222, %v1218
    %v1607 = vpack.c.b16 %v1223, %v1219
    %v1608 = vpack.c.b16 %v1228, %v1224
    %v1609 = vpack.c.b16 %v1229, %v1225
    %v1610 = vpack.c.b16 %v1230, %v1226
    %v1611 = vpack.c.b16 %v1231, %v1227
    %v1612 = vpack.c.b16 %v1236, %v1232
    %v1613 = vpack.c.b16 %v1237, %v1233
    %v1614 = vpack.c.b16 %v1238, %v1234
    %v1615 = vpack.c.b16 %v1239, %v1235
    %v1616 = vpack.c.b16 %v1244, %v1240
    %v1617 = vpack.c.b16 %v1245, %v1241
    %v1618 = vpack.c.b16 %v1246, %v1242
    %v1619 = vpack.c.b16 %v1247, %v1243
    %v1620 = vpack.c.b16 %v1252, %v1248
    %v1621 = vpack.c.b16 %v1253, %v1249
    %v1622 = vpack.c.b16 %v1254, %v1250
    %v1623 = vpack.c.b16 %v1255, %v1251
    %v1624 = vpack.c.b16 %v1260, %v1256
    %v1625 = vpack.c.b16 %v1261, %v1257
    %v1626 = vpack.c.b16 %v1262, %v1258
    %v1627 = vpack.c.b16 %v1263, %v1259
    %v1628 = vpack.c.b16 %v1268, %v1264
    %v1629 = vpack.c.b16 %v1269, %v1265
    %v1630 = vpack.c.b16 %v1270, %v1266
    %v1631 = vpack.c.b16 %v1271, %v1267
    %v1632 = vpack.c.b16 %v1276, %v1272
    %v1633 = vpack.c.b16 %v1277, %v1273
    %v1634 = vpack.c.b16 %v1278, %v1274
    %v1635 = vpack.c.b16 %v1279, %v1275
    %v1636 = vpack.c.b16 %v1284, %v1280
    %v1637 = vpack.c.b16 %v1285, %v1281
    %v1638 = vpack.c.b16 %v1286, %v1282
    %v1639 = vpack.c.b16 %v1287, %v1283
    %v1640 = vpack.c.b16 %v1292, %v1288
    %v1641 = vpack.c.b16 %v1293, %v1289
    %v1642 = vpack.c.b16 %v1294, %v1290
    %v1643 = vpack.c.b16 %v1295, %v1291
    %v1644 = vpack.c.b16 %v1300, %v1296
    %v1645 = vpack.c.b16 %v1301, %v1297
    %v1646 = vpack.c.b16 %v1302, %v1298
    %v1647 = vpack.c.b16 %v1303, %v1299
    %v1648 = vpack.c.b16 %v1308, %v1304
    %v1649 = vpack.c.b16 %v1309, %v1305
    %v1650 = vpack.c.b16 %v1310, %v1306
    %v1651 = vpack.c.b16 %v1311, %v1307
    %v1652 = vpack.c.b16 %v1316, %v1312
    %v1653 = vpack.c.b16 %v1317, %v1313
    %v1654 = vpack.c.b16 %v1318, %v1314
    %v1655 = vpack.c.b16 %v1319, %v1315
    %v1656 = vpack.c.b16 %v1324, %v1320
    %v1657 = vpack.c.b16 %v1325, %v1321
    %v1658 = vpack.c.b16 %v1326, %v1322
    %v1659 = vpack.c.b16 %v1327, %v1323
    %v1660 = vpack.c.b16 %v1332, %v1328
    %v1661 = vpack.c.b16 %v1333, %v1329
    %v1662 = vpack.c.b16 %v1334, %v1330
    %v1663 = vpack.c.b16 %v1335, %v1331
    %v1664 = vpack.c.b16 %v1340, %v1336
    %v1665 = vpack.c.b16 %v1341, %v1337
    %v1666 = vpack.c.b16 %v1342, %v1338
    %v1667 = vpack.c.b16 %v1343, %v1339
    %v1668 = vpack.c.b16 %v1348, %v1344
    %v1669 = vpack.c.b16 %v1349, %v1345
    %v1670 = vpack.c.b16 %v1350, %v1346
    %v1671 = vpack.c.b16 %v1351, %v1347
    %v1672 = vpack.c.b16 %v1356, %v1352
    %v1673 = vpack.c.b16 %v1357, %v1353
    %v1674 = vpack.c.b16 %v1358, %v1354
    %v1675 = vpack.c.b16 %v1359, %v1355
    %v1676 = vpack.c.b16 %v1364, %v1360
    %v1677 = vpack.c.b16 %v1365, %v1361
    %v1678 = vpack.c.b16 %v1366, %v1362
    %v1679 = vpack.c.b16 %v1367, %v1363
    %v1680 = vpack.c.b16 %v1372, %v1368
    %v1681 = vpack.c.b16 %v1373, %v1369
    %v1682 = vpack.c.b16 %v1374, %v1370
    %v1683 = vpack.c.b16 %v1375, %v1371
    %v1684 = vpack.c.b16 %v1380, %v1376
    %v1685 = vpack.c.b16 %v1381, %v1377
    %v1686 = vpack.c.b16 %v1382, %v1378
    %v1687 = vpack.c.b16 %v1383, %v1379
    %v1688 = vpack.c.b16 %v1388, %v1384
    %v1689 = vpack.c.b16 %v1389, %v1385
    %v1690 = vpack.c.b16 %v1390, %v1386
    %v1691 = vpack.c.b16 %v1391, %v1387
    %v1692 = vpack.c.b16 %v1396, %v1392
    %v1693 = vpack.c.b16 %v1397, %v1393
    %v1694 = vpack.c.b16 %v1398, %v1394
    %v1695 = vpack.c.b16 %v1399, %v1395
    %v1696 = vpack.c.b16 %v1404, %v1400
    %v1697 = vpack.c.b16 %v1405, %v1401
    %v1698 = vpack.c.b16 %v1406, %v1402
    %v1699 = vpack.c.b16 %v1407, %v1403
    %v1700 = vpack.c.b16 %v1412, %v1408
    %v1701 = vpack.c.b16 %v1413, %v1409
    %v1702 = vpack.c.b16 %v1414, %v1410
    %v1703 = vpack.c.b16 %v1415, %v1411
    %v1704 = vpack.c.b16 %v1420, %v1416
    %v1705 = vpack.c.b16 %v1421, %v1417
    %v1706 = vpack.c.b16 %v1422, %v1418
    %v1707 = vpack.c.b16 %v1423, %v1419
    %v1708 = vpack.c.b16 %v1428, %v1424
    %v1709 = vpack.c.b16 %v1429, %v1425
    %v1710 = vpack.c.b16 %v1430, %v1426
    %v1711 = vpack.c.b16 %v1431, %v1427
    %v1712 = vpack.c.b16 %v1436, %v1432
    %v1713 = vpack.c.b16 %v1437, %v1433
    %v1714 = vpack.c.b16 %v1438, %v1434
    %v1715 = vpack.c.b16 %v1439, %v1435
    %v1716 = vpack.c.b16 %v1444, %v1440
    %v1717 = vpack.c.b16 %v1445, %v1441
    %v1718 = vpack.c.b16 %v1446, %v1442
    %v1719 = vpack.c.b16 %v1447, %v1443
    %v1720 = vpack.c.b16 %v1452, %v1448
    %v1721 = vpack.c.b16 %v1453, %v1449
    %v1722 = vpack.c.b16 %v1454, %v1450
    %v1723 = vpack.c.b16 %v1455, %v1451
    %v1724 = vpack.c.b16 %v1460, %v1456
    %v1725 = vpack.c.b16 %v1461, %v1457
    %v1726 = vpack.c.b16 %v1462, %v1458
    %v1727 = vpack.c.b16 %v1463, %v1459
    %v1728 = vpack.c.b16 %v1468, %v1464
    %v1729 = vpack.c.b16 %v1469, %v1465
    %v1730 = vpack.c.b16 %v1470, %v1466
    %v1731 = vpack.c.b16 %v1471, %v1467
    %v1732 = vpack.c.b16 %v1476, %v1472
    %v1733 = vpack.c.b16 %v1477, %v1473
    %v1734 = vpack.c.b16 %v1478, %v1474
    %v1735 = vpack.c.b16 %v1479, %v1475
    %1992 = vmatprep.subr.bf16.mxu0 %v1509
    %1993 = vmatpush1.bf16.msra.mxu0 %v1508
    %1994 = vmatprep.subr.bf16.mxu0 %v1505
    %1995 = vmatpush1.bf16.msra.mxu0 %v1504
    %1996 = vmatprep.subr.bf16.mxu0 %v1501
    %1997 = vmatpush1.bf16.msra.mxu0 %v1500
    %1998 = vmatprep.subr.bf16.mxu0 %v1497
    %1999 = vmatpush1.bf16.msra.mxu0 %v1496
    %2000 = vmatprep.subr.bf16.mxu0 %v1493
    %2001 = vmatpush1.bf16.msra.mxu0 %v1492
    %2002 = vmatprep.subr.bf16.mxu0 %v1489
    %2003 = vmatpush1.bf16.msra.mxu0 %v1488
    %2004 = vmatprep.subr.bf16.mxu0 %v1485
    %2005 = vmatpush1.bf16.msra.mxu0 %v1484
    %2006 = vmatprep.subr.bf16.mxu0 %v1481
    %2007 = vmatpush1.bf16.msra.mxu0 %v1480
    %2008 = vmatprep.subr.bf16.mxu0 %v1541
    %2009 = vmatpush2.bf16.msra.mxu0 %v1540
    %2010 = vmatprep.subr.bf16.mxu0 %v1537
    %2011 = vmatpush2.bf16.msra.mxu0 %v1536
    %2012 = vmatprep.subr.bf16.mxu0 %v1533
    %2013 = vmatpush2.bf16.msra.mxu0 %v1532
    %2014 = vmatprep.subr.bf16.mxu0 %v1529
    %2015 = vmatpush2.bf16.msra.mxu0 %v1528
    %2016 = vmatprep.subr.bf16.mxu0 %v1525
    %2017 = vmatpush2.bf16.msra.mxu0 %v1524
    %2018 = vmatprep.subr.bf16.mxu0 %v1521
    %2019 = vmatpush2.bf16.msra.mxu0 %v1520
    %2020 = vmatprep.subr.bf16.mxu0 %v1517
    %2021 = vmatpush2.bf16.msra.mxu0 %v1516
    %2022 = vmatprep.subr.bf16.mxu0 %v1513
    %2023 = vmatpush2.bf16.msra.mxu0 %v1512
    %2024 = vmatprep.mubr.bf16.mxu0 %v264
    %2025 = vmatmul.mubr.bf16.gmra.mxu0 %v263
    %v2026 = vpop.f32.mrf.mxu0
    %v2027 = vadd.f32 %v625, %v2026
    %v2028 = vpop.f32.mrf.mxu0
    %v2029 = vadd.f32 %v627, %v2028
    %v2030 = vpop.f32.mrf.mxu0
    %v2031 = vadd.f32 %v631, %v2030
    %v2032 = vpop.f32.mrf.mxu0
    %v2033 = vadd.f32 %v633, %v2032
    %2034 = vdwg.mxu0
    %2035 = vmatprep.subr.bf16.mxu0 %v1573
    %2036 = vmatpush1.bf16.msra.mxu0 %v1572
    %2037 = vmatprep.subr.bf16.mxu0 %v1569
    %2038 = vmatpush1.bf16.msra.mxu0 %v1568
    %2039 = vmatprep.subr.bf16.mxu0 %v1565
    %2040 = vmatpush1.bf16.msra.mxu0 %v1564
    %2041 = vmatprep.subr.bf16.mxu0 %v1561
    %2042 = vmatpush1.bf16.msra.mxu0 %v1560
    %2043 = vmatprep.subr.bf16.mxu0 %v1557
    %2044 = vmatpush1.bf16.msra.mxu0 %v1556
    %2045 = vmatprep.subr.bf16.mxu0 %v1553
    %2046 = vmatpush1.bf16.msra.mxu0 %v1552
    %2047 = vmatprep.subr.bf16.mxu0 %v1549
    %2048 = vmatpush1.bf16.msra.mxu0 %v1548
    %2049 = vmatprep.subr.bf16.mxu0 %v1545
    %2050 = vmatpush1.bf16.msra.mxu0 %v1544
    %2051 = vmatprep.subr.bf16.mxu0 %v1605
    %2052 = vmatpush2.bf16.msra.mxu0 %v1604
    %2053 = vmatprep.subr.bf16.mxu0 %v1601
    %2054 = vmatpush2.bf16.msra.mxu0 %v1600
    %2055 = vmatprep.subr.bf16.mxu0 %v1597
    %2056 = vmatpush2.bf16.msra.mxu0 %v1596
    %2057 = vmatprep.subr.bf16.mxu0 %v1593
    %2058 = vmatpush2.bf16.msra.mxu0 %v1592
    %2059 = vmatprep.subr.bf16.mxu0 %v1589
    %2060 = vmatpush2.bf16.msra.mxu0 %v1588
    %2061 = vmatprep.subr.bf16.mxu0 %v1585
    %2062 = vmatpush2.bf16.msra.mxu0 %v1584
    %2063 = vmatprep.subr.bf16.mxu0 %v1581
    %2064 = vmatpush2.bf16.msra.mxu0 %v1580
    %2065 = vmatprep.subr.bf16.mxu0 %v1577
    %2066 = vmatpush2.bf16.msra.mxu0 %v1576
    %2067 = vmatprep.mubr.bf16.mxu0 %v266
    %2068 = vmatmul.mubr.bf16.gmra.mxu0 %v265
    %v2069 = vpop.f32.mrf.mxu0
    %v2070 = vadd.f32 %v2027, %v2069
    %v2071 = vpop.f32.mrf.mxu0
    %v2072 = vadd.f32 %v2029, %v2071
    %v2073 = vpop.f32.mrf.mxu0
    %v2074 = vadd.f32 %v2031, %v2073
    %v2075 = vpop.f32.mrf.mxu0
    %v2076 = vadd.f32 %v2033, %v2075
    %2077 = vdwg.mxu0
    %2078 = vmatprep.subr.bf16.mxu0 %v1637
    %2079 = vmatpush1.bf16.msra.mxu0 %v1636
    %2080 = vmatprep.subr.bf16.mxu0 %v1633
    %2081 = vmatpush1.bf16.msra.mxu0 %v1632
    %2082 = vmatprep.subr.bf16.mxu0 %v1629
    %2083 = vmatpush1.bf16.msra.mxu0 %v1628
    %2084 = vmatprep.subr.bf16.mxu0 %v1625
    %2085 = vmatpush1.bf16.msra.mxu0 %v1624
    %2086 = vmatprep.subr.bf16.mxu0 %v1621
    %2087 = vmatpush1.bf16.msra.mxu0 %v1620
    %2088 = vmatprep.subr.bf16.mxu0 %v1617
    %2089 = vmatpush1.bf16.msra.mxu0 %v1616
    %2090 = vmatprep.subr.bf16.mxu0 %v1613
    %2091 = vmatpush1.bf16.msra.mxu0 %v1612
    %2092 = vmatprep.subr.bf16.mxu0 %v1609
    %2093 = vmatpush1.bf16.msra.mxu0 %v1608
    %2094 = vmatprep.subr.bf16.mxu0 %v1669
    %2095 = vmatpush2.bf16.msra.mxu0 %v1668
    %2096 = vmatprep.subr.bf16.mxu0 %v1665
    %2097 = vmatpush2.bf16.msra.mxu0 %v1664
    %2098 = vmatprep.subr.bf16.mxu0 %v1661
    %2099 = vmatpush2.bf16.msra.mxu0 %v1660
    %2100 = vmatprep.subr.bf16.mxu0 %v1657
    %2101 = vmatpush2.bf16.msra.mxu0 %v1656
    %2102 = vmatprep.subr.bf16.mxu0 %v1653
    %2103 = vmatpush2.bf16.msra.mxu0 %v1652
    %2104 = vmatprep.subr.bf16.mxu0 %v1649
    %2105 = vmatpush2.bf16.msra.mxu0 %v1648
    %2106 = vmatprep.subr.bf16.mxu0 %v1645
    %2107 = vmatpush2.bf16.msra.mxu0 %v1644
    %2108 = vmatprep.subr.bf16.mxu0 %v1641
    %2109 = vmatpush2.bf16.msra.mxu0 %v1640
    %2110 = vmatprep.mubr.bf16.mxu0 %v268
    %2111 = vmatmul.mubr.bf16.gmra.mxu0 %v267
    %v2112 = vpop.f32.mrf.mxu0
    %v2113 = vadd.f32 %v2070, %v2112
    %v2114 = vpop.f32.mrf.mxu0
    %v2115 = vadd.f32 %v2072, %v2114
    %v2116 = vpop.f32.mrf.mxu0
    %v2117 = vadd.f32 %v2074, %v2116
    %v2118 = vpop.f32.mrf.mxu0
    %v2119 = vadd.f32 %v2076, %v2118
    %2120 = vdwg.mxu0
    %2121 = vmatprep.subr.bf16.mxu0 %v1701
    %2122 = vmatpush1.bf16.msra.mxu0 %v1700
    %2123 = vmatprep.subr.bf16.mxu0 %v1697
    %2124 = vmatpush1.bf16.msra.mxu0 %v1696
    %2125 = vmatprep.subr.bf16.mxu0 %v1693
    %2126 = vmatpush1.bf16.msra.mxu0 %v1692
    %2127 = vmatprep.subr.bf16.mxu0 %v1689
    %2128 = vmatpush1.bf16.msra.mxu0 %v1688
    %2129 = vmatprep.subr.bf16.mxu0 %v1685
    %2130 = vmatpush1.bf16.msra.mxu0 %v1684
    %2131 = vmatprep.subr.bf16.mxu0 %v1681
    %2132 = vmatpush1.bf16.msra.mxu0 %v1680
    %2133 = vmatprep.subr.bf16.mxu0 %v1677
    %2134 = vmatpush1.bf16.msra.mxu0 %v1676
    %2135 = vmatprep.subr.bf16.mxu0 %v1673
    %2136 = vmatpush1.bf16.msra.mxu0 %v1672
    %2137 = vmatprep.subr.bf16.mxu0 %v1733
    %2138 = vmatpush2.bf16.msra.mxu0 %v1732
    %2139 = vmatprep.subr.bf16.mxu0 %v1729
    %2140 = vmatpush2.bf16.msra.mxu0 %v1728
    %2141 = vmatprep.subr.bf16.mxu0 %v1725
    %2142 = vmatpush2.bf16.msra.mxu0 %v1724
    %2143 = vmatprep.subr.bf16.mxu0 %v1721
    %2144 = vmatpush2.bf16.msra.mxu0 %v1720
    %2145 = vmatprep.subr.bf16.mxu0 %v1717
    %2146 = vmatpush2.bf16.msra.mxu0 %v1716
    %2147 = vmatprep.subr.bf16.mxu0 %v1713
    %2148 = vmatpush2.bf16.msra.mxu0 %v1712
    %2149 = vmatprep.subr.bf16.mxu0 %v1709
    %2150 = vmatpush2.bf16.msra.mxu0 %v1708
    %2151 = vmatprep.subr.bf16.mxu0 %v1705
    %2152 = vmatpush2.bf16.msra.mxu0 %v1704
    %2153 = vmatprep.mubr.bf16.mxu0 %v270
    %2154 = vmatmul.mubr.bf16.gmra.mxu0 %v269
    %v2155 = vpop.f32.mrf.mxu0
    %v2156 = vadd.f32 %v2113, %v2155
    %v2157 = vpop.f32.mrf.mxu0
    %v2158 = vadd.f32 %v2115, %v2157
    %v2159 = vpop.f32.mrf.mxu0
    %v2160 = vadd.f32 %v2117, %v2159
    %v2161 = vpop.f32.mrf.mxu0
    %v2162 = vadd.f32 %v2119, %v2161
    %2163 = vdwg.mxu0
    %2164 = vmatprep.subr.bf16.mxu0 %v1511
    %2165 = vmatpush1.bf16.msra.mxu0 %v1510
    %2166 = vmatprep.subr.bf16.mxu0 %v1507
    %2167 = vmatpush1.bf16.msra.mxu0 %v1506
    %2168 = vmatprep.subr.bf16.mxu0 %v1503
    %2169 = vmatpush1.bf16.msra.mxu0 %v1502
    %2170 = vmatprep.subr.bf16.mxu0 %v1499
    %2171 = vmatpush1.bf16.msra.mxu0 %v1498
    %2172 = vmatprep.subr.bf16.mxu0 %v1495
    %2173 = vmatpush1.bf16.msra.mxu0 %v1494
    %2174 = vmatprep.subr.bf16.mxu0 %v1491
    %2175 = vmatpush1.bf16.msra.mxu0 %v1490
    %2176 = vmatprep.subr.bf16.mxu0 %v1487
    %2177 = vmatpush1.bf16.msra.mxu0 %v1486
    %2178 = vmatprep.subr.bf16.mxu0 %v1483
    %2179 = vmatpush1.bf16.msra.mxu0 %v1482
    %2180 = vmatprep.subr.bf16.mxu0 %v1543
    %2181 = vmatpush2.bf16.msra.mxu0 %v1542
    %2182 = vmatprep.subr.bf16.mxu0 %v1539
    %2183 = vmatpush2.bf16.msra.mxu0 %v1538
    %2184 = vmatprep.subr.bf16.mxu0 %v1535
    %2185 = vmatpush2.bf16.msra.mxu0 %v1534
    %2186 = vmatprep.subr.bf16.mxu0 %v1531
    %2187 = vmatpush2.bf16.msra.mxu0 %v1530
    %2188 = vmatprep.subr.bf16.mxu0 %v1527
    %2189 = vmatpush2.bf16.msra.mxu0 %v1526
    %2190 = vmatprep.subr.bf16.mxu0 %v1523
    %2191 = vmatpush2.bf16.msra.mxu0 %v1522
    %2192 = vmatprep.subr.bf16.mxu0 %v1519
    %2193 = vmatpush2.bf16.msra.mxu0 %v1518
    %2194 = vmatprep.subr.bf16.mxu0 %v1515
    %2195 = vmatpush2.bf16.msra.mxu0 %v1514
    %2196 = vmatprep.mubr.bf16.mxu0 %v264
    %2197 = vmatmul.mubr.bf16.gmra.mxu0 %v263
    %v2198 = vpop.f32.mrf.mxu0
    %v2199 = vadd.f32 %v702, %v2198
    %v2200 = vpop.f32.mrf.mxu0
    %v2201 = vadd.f32 %v704, %v2200
    %v2202 = vpop.f32.mrf.mxu0
    %v2203 = vadd.f32 %v708, %v2202
    %v2204 = vpop.f32.mrf.mxu0
    %v2205 = vadd.f32 %v710, %v2204
    %2206 = vdwg.mxu0
    %2207 = vmatprep.subr.bf16.mxu0 %v1575
    %2208 = vmatpush1.bf16.msra.mxu0 %v1574
    %2209 = vmatprep.subr.bf16.mxu0 %v1571
    %2210 = vmatpush1.bf16.msra.mxu0 %v1570
    %2211 = vmatprep.subr.bf16.mxu0 %v1567
    %2212 = vmatpush1.bf16.msra.mxu0 %v1566
    %2213 = vmatprep.subr.bf16.mxu0 %v1563
    %2214 = vmatpush1.bf16.msra.mxu0 %v1562
    %2215 = vmatprep.subr.bf16.mxu0 %v1559
    %2216 = vmatpush1.bf16.msra.mxu0 %v1558
    %2217 = vmatprep.subr.bf16.mxu0 %v1555
    %2218 = vmatpush1.bf16.msra.mxu0 %v1554
    %2219 = vmatprep.subr.bf16.mxu0 %v1551
    %2220 = vmatpush1.bf16.msra.mxu0 %v1550
    %2221 = vmatprep.subr.bf16.mxu0 %v1547
    %2222 = vmatpush1.bf16.msra.mxu0 %v1546
    %2223 = vmatprep.subr.bf16.mxu0 %v1607
    %2224 = vmatpush2.bf16.msra.mxu0 %v1606
    %2225 = vmatprep.subr.bf16.mxu0 %v1603
    %2226 = vmatpush2.bf16.msra.mxu0 %v1602
    %2227 = vmatprep.subr.bf16.mxu0 %v1599
    %2228 = vmatpush2.bf16.msra.mxu0 %v1598
    %2229 = vmatprep.subr.bf16.mxu0 %v1595
    %2230 = vmatpush2.bf16.msra.mxu0 %v1594
    %2231 = vmatprep.subr.bf16.mxu0 %v1591
    %2232 = vmatpush2.bf16.msra.mxu0 %v1590
    %2233 = vmatprep.subr.bf16.mxu0 %v1587
    %2234 = vmatpush2.bf16.msra.mxu0 %v1586
    %2235 = vmatprep.subr.bf16.mxu0 %v1583
    %2236 = vmatpush2.bf16.msra.mxu0 %v1582
    %2237 = vmatprep.subr.bf16.mxu0 %v1579
    %2238 = vmatpush2.bf16.msra.mxu0 %v1578
    %2239 = vmatprep.mubr.bf16.mxu0 %v266
    %2240 = vmatmul.mubr.bf16.gmra.mxu0 %v265
    %v2241 = vpop.f32.mrf.mxu0
    %v2242 = vadd.f32 %v2199, %v2241
    %v2243 = vpop.f32.mrf.mxu0
    %v2244 = vadd.f32 %v2201, %v2243
    %v2245 = vpop.f32.mrf.mxu0
    %v2246 = vadd.f32 %v2203, %v2245
    %v2247 = vpop.f32.mrf.mxu0
    %v2248 = vadd.f32 %v2205, %v2247
    %2249 = vdwg.mxu0
    %2250 = vmatprep.subr.bf16.mxu0 %v1639
    %2251 = vmatpush1.bf16.msra.mxu0 %v1638
    %2252 = vmatprep.subr.bf16.mxu0 %v1635
    %2253 = vmatpush1.bf16.msra.mxu0 %v1634
    %2254 = vmatprep.subr.bf16.mxu0 %v1631
    %2255 = vmatpush1.bf16.msra.mxu0 %v1630
    %2256 = vmatprep.subr.bf16.mxu0 %v1627
    %2257 = vmatpush1.bf16.msra.mxu0 %v1626
    %2258 = vmatprep.subr.bf16.mxu0 %v1623
    %2259 = vmatpush1.bf16.msra.mxu0 %v1622
    %2260 = vmatprep.subr.bf16.mxu0 %v1619
    %2261 = vmatpush1.bf16.msra.mxu0 %v1618
    %2262 = vmatprep.subr.bf16.mxu0 %v1615
    %2263 = vmatpush1.bf16.msra.mxu0 %v1614
    %2264 = vmatprep.subr.bf16.mxu0 %v1611
    %2265 = vmatpush1.bf16.msra.mxu0 %v1610
    %2266 = vmatprep.subr.bf16.mxu0 %v1671
    %2267 = vmatpush2.bf16.msra.mxu0 %v1670
    %2268 = vmatprep.subr.bf16.mxu0 %v1667
    %2269 = vmatpush2.bf16.msra.mxu0 %v1666
    %2270 = vmatprep.subr.bf16.mxu0 %v1663
    %2271 = vmatpush2.bf16.msra.mxu0 %v1662
    %2272 = vmatprep.subr.bf16.mxu0 %v1659
    %2273 = vmatpush2.bf16.msra.mxu0 %v1658
    %2274 = vmatprep.subr.bf16.mxu0 %v1655
    %2275 = vmatpush2.bf16.msra.mxu0 %v1654
    %2276 = vmatprep.subr.bf16.mxu0 %v1651
    %2277 = vmatpush2.bf16.msra.mxu0 %v1650
    %2278 = vmatprep.subr.bf16.mxu0 %v1647
    %2279 = vmatpush2.bf16.msra.mxu0 %v1646
    %2280 = vmatprep.subr.bf16.mxu0 %v1643
    %2281 = vmatpush2.bf16.msra.mxu0 %v1642
    %2282 = vmatprep.mubr.bf16.mxu0 %v268
    %2283 = vmatmul.mubr.bf16.gmra.mxu0 %v267
    %v2284 = vpop.f32.mrf.mxu0
    %v2285 = vadd.f32 %v2242, %v2284
    %v2286 = vpop.f32.mrf.mxu0
    %v2287 = vadd.f32 %v2244, %v2286
    %v2288 = vpop.f32.mrf.mxu0
    %v2289 = vadd.f32 %v2246, %v2288
    %v2290 = vpop.f32.mrf.mxu0
    %v2291 = vadd.f32 %v2248, %v2290
    %2292 = vdwg.mxu0
    %2293 = vmatprep.subr.bf16.mxu0 %v1703
    %2294 = vmatpush1.bf16.msra.mxu0 %v1702
    %2295 = vmatprep.subr.bf16.mxu0 %v1699
    %2296 = vmatpush1.bf16.msra.mxu0 %v1698
    %2297 = vmatprep.subr.bf16.mxu0 %v1695
    %2298 = vmatpush1.bf16.msra.mxu0 %v1694
    %2299 = vmatprep.subr.bf16.mxu0 %v1691
    %2300 = vmatpush1.bf16.msra.mxu0 %v1690
    %2301 = vmatprep.subr.bf16.mxu0 %v1687
    %2302 = vmatpush1.bf16.msra.mxu0 %v1686
    %2303 = vmatprep.subr.bf16.mxu0 %v1683
    %2304 = vmatpush1.bf16.msra.mxu0 %v1682
    %2305 = vmatprep.subr.bf16.mxu0 %v1679
    %2306 = vmatpush1.bf16.msra.mxu0 %v1678
    %2307 = vmatprep.subr.bf16.mxu0 %v1675
    %2308 = vmatpush1.bf16.msra.mxu0 %v1674
    %2309 = vmatprep.subr.bf16.mxu0 %v1735
    %2310 = vmatpush2.bf16.msra.mxu0 %v1734
    %2311 = vmatprep.subr.bf16.mxu0 %v1731
    %2312 = vmatpush2.bf16.msra.mxu0 %v1730
    %2313 = vmatprep.subr.bf16.mxu0 %v1727
    %2314 = vmatpush2.bf16.msra.mxu0 %v1726
    %2315 = vmatprep.subr.bf16.mxu0 %v1723
    %2316 = vmatpush2.bf16.msra.mxu0 %v1722
    %2317 = vmatprep.subr.bf16.mxu0 %v1719
    %2318 = vmatpush2.bf16.msra.mxu0 %v1718
    %2319 = vmatprep.subr.bf16.mxu0 %v1715
    %2320 = vmatpush2.bf16.msra.mxu0 %v1714
    %2321 = vmatprep.subr.bf16.mxu0 %v1711
    %2322 = vmatpush2.bf16.msra.mxu0 %v1710
    %2323 = vmatprep.subr.bf16.mxu0 %v1707
    %2324 = vmatpush2.bf16.msra.mxu0 %v1706
    %2325 = vmatprep.mubr.bf16.mxu0 %v270
    %2326 = vmatmul.mubr.bf16.gmra.mxu0 %v269
    %v2327 = vpop.f32.mrf.mxu0
    %v2328 = vadd.f32 %v2285, %v2327
    %v2329 = vpop.f32.mrf.mxu0
    %v2330 = vadd.f32 %v2287, %v2329
    %v2331 = vpop.f32.mrf.mxu0
    %v2332 = vadd.f32 %v2289, %v2331
    %v2333 = vpop.f32.mrf.mxu0
    %v2334 = vadd.f32 %v2291, %v2333
    %2335 = vdwg.mxu0
    %v2336 = vmul.f32 %v2156, 0.2
    %v2337 = vmul.f32 %v2158, 0.2
    %v2338 = vmul.f32 %v2328, 0.2
    %v2339 = vmul.f32 %v2330, 0.2
    %v2340 = vmul.f32 %v2160, 0.2
    %v2341 = vmul.f32 %v2162, 0.2
    %v2342 = vmul.f32 %v2332, 0.2
    %v2343 = vmul.f32 %v2334, 0.2
    %v2344 = vmax.f32 %v2156, %v2336
    %v2345 = vmax.f32 %v2158, %v2337
    %v2346 = vmax.f32 %v2328, %v2338
    %v2347 = vmax.f32 %v2330, %v2339
    %v2348 = vmax.f32 %v2160, %v2340
    %v2349 = vmax.f32 %v2162, %v2341
    %v2350 = vmax.f32 %v2332, %v2342
    %v2351 = vmax.f32 %v2334, %v2343
    %v2352 = vpack.c.bf16 %v2348, %v2344
    %v2353 = vpack.c.bf16 %v2349, %v2345
    %v2354 = vpack.c.bf16 %v2350, %v2346
    %v2355 = vpack.c.bf16 %v2351, %v2347
    %v2356 = vld [vmem:[#allocation6] sm:$0xff]
    %v2357 = vld [vmem:[#allocation6 + $0x8] sm:$0xff]
    %v2358 = vld [vmem:[#allocation6 + $0x10] sm:$0xff]
    %v2359 = vld [vmem:[#allocation6 + $0x18] sm:$0xff]
    %v2360 = vld [vmem:[#allocation6 + $0x20] sm:$0xff]
    %v2361 = vld [vmem:[#allocation6 + $0x28] sm:$0xff]
    %v2362 = vld [vmem:[#allocation6 + $0x30] sm:$0xff]
    %v2363 = vld [vmem:[#allocation6 + $0x38] sm:$0xff]
    %v2364 = vld [vmem:[#allocation6 + $0x40] sm:$0xff]
    %v2365 = vld [vmem:[#allocation6 + $0x48] sm:$0xff]
    %v2366 = vld [vmem:[#allocation6 + $0x50] sm:$0xff]
    %v2367 = vld [vmem:[#allocation6 + $0x58] sm:$0xff]
    %v2368 = vld [vmem:[#allocation6 + $0x60] sm:$0xff]
    %v2369 = vld [vmem:[#allocation6 + $0x68] sm:$0xff]
    %v2370 = vld [vmem:[#allocation6 + $0x70] sm:$0xff]
    %v2371 = vld [vmem:[#allocation6 + $0x78] sm:$0xff]
    %v2372 = vld [vmem:[#allocation6 + $0x80] sm:$0xff]
    %v2373 = vld [vmem:[#allocation6 + $0x88] sm:$0xff]
    %v2374 = vld [vmem:[#allocation6 + $0x90] sm:$0xff]
    %v2375 = vld [vmem:[#allocation6 + $0x98] sm:$0xff]
    %v2376 = vld [vmem:[#allocation6 + $0xa0] sm:$0xff]
    %v2377 = vld [vmem:[#allocation6 + $0xa8] sm:$0xff]
    %v2378 = vld [vmem:[#allocation6 + $0xb0] sm:$0xff]
    %v2379 = vld [vmem:[#allocation6 + $0xb8] sm:$0xff]
    %v2380 = vld [vmem:[#allocation6 + $0xc0] sm:$0xff]
    %v2381 = vld [vmem:[#allocation6 + $0xc8] sm:$0xff]
    %v2382 = vld [vmem:[#allocation6 + $0xd0] sm:$0xff]
    %v2383 = vld [vmem:[#allocation6 + $0xd8] sm:$0xff]
    %v2384 = vld [vmem:[#allocation6 + $0xe0] sm:$0xff]
    %v2385 = vld [vmem:[#allocation6 + $0xe8] sm:$0xff]
    %v2386 = vld [vmem:[#allocation6 + $0xf0] sm:$0xff]
    %v2387 = vld [vmem:[#allocation6 + $0xf8] sm:$0xff]
    %v2388 = vld [vmem:[#allocation6 + $0x100] sm:$0xff]
    %v2389 = vld [vmem:[#allocation6 + $0x108] sm:$0xff]
    %v2390 = vld [vmem:[#allocation6 + $0x110] sm:$0xff]
    %v2391 = vld [vmem:[#allocation6 + $0x118] sm:$0xff]
    %v2392 = vld [vmem:[#allocation6 + $0x120] sm:$0xff]
    %v2393 = vld [vmem:[#allocation6 + $0x128] sm:$0xff]
    %v2394 = vld [vmem:[#allocation6 + $0x130] sm:$0xff]
    %v2395 = vld [vmem:[#allocation6 + $0x138] sm:$0xff]
    %v2396 = vld [vmem:[#allocation6 + $0x140] sm:$0xff]
    %v2397 = vld [vmem:[#allocation6 + $0x148] sm:$0xff]
    %v2398 = vld [vmem:[#allocation6 + $0x150] sm:$0xff]
    %v2399 = vld [vmem:[#allocation6 + $0x158] sm:$0xff]
    %v2400 = vld [vmem:[#allocation6 + $0x160] sm:$0xff]
    %v2401 = vld [vmem:[#allocation6 + $0x168] sm:$0xff]
    %v2402 = vld [vmem:[#allocation6 + $0x170] sm:$0xff]
    %v2403 = vld [vmem:[#allocation6 + $0x178] sm:$0xff]
    %v2404 = vld [vmem:[#allocation6 + $0x180] sm:$0xff]
    %v2405 = vld [vmem:[#allocation6 + $0x188] sm:$0xff]
    %v2406 = vld [vmem:[#allocation6 + $0x190] sm:$0xff]
    %v2407 = vld [vmem:[#allocation6 + $0x198] sm:$0xff]
    %v2408 = vld [vmem:[#allocation6 + $0x1a0] sm:$0xff]
    %v2409 = vld [vmem:[#allocation6 + $0x1a8] sm:$0xff]
    %v2410 = vld [vmem:[#allocation6 + $0x1b0] sm:$0xff]
    %v2411 = vld [vmem:[#allocation6 + $0x1b8] sm:$0xff]
    %v2412 = vld [vmem:[#allocation6 + $0x1c0] sm:$0xff]
    %v2413 = vld [vmem:[#allocation6 + $0x1c8] sm:$0xff]
    %v2414 = vld [vmem:[#allocation6 + $0x1d0] sm:$0xff]
    %v2415 = vld [vmem:[#allocation6 + $0x1d8] sm:$0xff]
    %v2416 = vld [vmem:[#allocation6 + $0x1e0] sm:$0xff]
    %v2417 = vld [vmem:[#allocation6 + $0x1e8] sm:$0xff]
    %v2418 = vld [vmem:[#allocation6 + $0x1f0] sm:$0xff]
    %v2419 = vld [vmem:[#allocation6 + $0x1f8] sm:$0xff]
    %v2420 = vld [vmem:[%s5] sm:$0x3]
    %v2422 = vlaneseq
    %v2423 = vshrl.u32 %v2422, 7
    %v2424 = vsub.s32 0, %v2423
    %v2425 = vrot.slane %v2420, %v2424
    %v2426 = vlaneseq
    %v2427 = vshrl.u32 %v2426, 7
    %v2428 = vsub.s32 1, %v2427
    %v2429 = vrot.slane %v2420, %v2428
    %v2496 = vunpack.c.l.b16 %v2356
    %v2497 = vunpack.c.h.b16 %v2356
    %v2498 = vunpack.c.l.b16 %v2357
    %v2499 = vunpack.c.h.b16 %v2357
    %v2500 = vunpack.c.l.b16 %v2358
    %v2501 = vunpack.c.h.b16 %v2358
    %v2502 = vunpack.c.l.b16 %v2359
    %v2503 = vunpack.c.h.b16 %v2359
    %v2504 = vunpack.c.l.b16 %v2360
    %v2505 = vunpack.c.h.b16 %v2360
    %v2506 = vunpack.c.l.b16 %v2361
    %v2507 = vunpack.c.h.b16 %v2361
    %v2508 = vunpack.c.l.b16 %v2362
    %v2509 = vunpack.c.h.b16 %v2362
    %v2510 = vunpack.c.l.b16 %v2363
    %v2511 = vunpack.c.h.b16 %v2363
    %v2512 = vunpack.c.l.b16 %v2364
    %v2513 = vunpack.c.h.b16 %v2364
    %v2514 = vunpack.c.l.b16 %v2365
    %v2515 = vunpack.c.h.b16 %v2365
    %v2516 = vunpack.c.l.b16 %v2366
    %v2517 = vunpack.c.h.b16 %v2366
    %v2518 = vunpack.c.l.b16 %v2367
    %v2519 = vunpack.c.h.b16 %v2367
    %v2520 = vunpack.c.l.b16 %v2368
    %v2521 = vunpack.c.h.b16 %v2368
    %v2522 = vunpack.c.l.b16 %v2369
    %v2523 = vunpack.c.h.b16 %v2369
    %v2524 = vunpack.c.l.b16 %v2370
    %v2525 = vunpack.c.h.b16 %v2370
    %v2526 = vunpack.c.l.b16 %v2371
    %v2527 = vunpack.c.h.b16 %v2371
    %v2528 = vunpack.c.l.b16 %v2372
    %v2529 = vunpack.c.h.b16 %v2372
    %v2530 = vunpack.c.l.b16 %v2373
    %v2531 = vunpack.c.h.b16 %v2373
    %v2532 = vunpack.c.l.b16 %v2374
    %v2533 = vunpack.c.h.b16 %v2374
    %v2534 = vunpack.c.l.b16 %v2375
    %v2535 = vunpack.c.h.b16 %v2375
    %v2536 = vunpack.c.l.b16 %v2376
    %v2537 = vunpack.c.h.b16 %v2376
    %v2538 = vunpack.c.l.b16 %v2377
    %v2539 = vunpack.c.h.b16 %v2377
    %v2540 = vunpack.c.l.b16 %v2378
    %v2541 = vunpack.c.h.b16 %v2378
    %v2542 = vunpack.c.l.b16 %v2379
    %v2543 = vunpack.c.h.b16 %v2379
    %v2544 = vunpack.c.l.b16 %v2380
    %v2545 = vunpack.c.h.b16 %v2380
    %v2546 = vunpack.c.l.b16 %v2381
    %v2547 = vunpack.c.h.b16 %v2381
    %v2548 = vunpack.c.l.b16 %v2382
    %v2549 = vunpack.c.h.b16 %v2382
    %v2550 = vunpack.c.l.b16 %v2383
    %v2551 = vunpack.c.h.b16 %v2383
    %v2552 = vunpack.c.l.b16 %v2384
    %v2553 = vunpack.c.h.b16 %v2384
    %v2554 = vunpack.c.l.b16 %v2385
    %v2555 = vunpack.c.h.b16 %v2385
    %v2556 = vunpack.c.l.b16 %v2386
    %v2557 = vunpack.c.h.b16 %v2386
    %v2558 = vunpack.c.l.b16 %v2387
    %v2559 = vunpack.c.h.b16 %v2387
    %v2560 = vunpack.c.l.b16 %v2388
    %v2561 = vunpack.c.h.b16 %v2388
    %v2562 = vunpack.c.l.b16 %v2389
    %v2563 = vunpack.c.h.b16 %v2389
    %v2564 = vunpack.c.l.b16 %v2390
    %v2565 = vunpack.c.h.b16 %v2390
    %v2566 = vunpack.c.l.b16 %v2391
    %v2567 = vunpack.c.h.b16 %v2391
    %v2568 = vunpack.c.l.b16 %v2392
    %v2569 = vunpack.c.h.b16 %v2392
    %v2570 = vunpack.c.l.b16 %v2393
    %v2571 = vunpack.c.h.b16 %v2393
    %v2572 = vunpack.c.l.b16 %v2394
    %v2573 = vunpack.c.h.b16 %v2394
    %v2574 = vunpack.c.l.b16 %v2395
    %v2575 = vunpack.c.h.b16 %v2395
    %v2576 = vunpack.c.l.b16 %v2396
    %v2577 = vunpack.c.h.b16 %v2396
    %v2578 = vunpack.c.l.b16 %v2397
    %v2579 = vunpack.c.h.b16 %v2397
    %v2580 = vunpack.c.l.b16 %v2398
    %v2581 = vunpack.c.h.b16 %v2398
    %v2582 = vunpack.c.l.b16 %v2399
    %v2583 = vunpack.c.h.b16 %v2399
    %v2584 = vunpack.c.l.b16 %v2400
    %v2585 = vunpack.c.h.b16 %v2400
    %v2586 = vunpack.c.l.b16 %v2401
    %v2587 = vunpack.c.h.b16 %v2401
    %v2588 = vunpack.c.l.b16 %v2402
    %v2589 = vunpack.c.h.b16 %v2402
    %v2590 = vunpack.c.l.b16 %v2403
    %v2591 = vunpack.c.h.b16 %v2403
    %v2592 = vunpack.c.l.b16 %v2404
    %v2593 = vunpack.c.h.b16 %v2404
    %v2594 = vunpack.c.l.b16 %v2405
    %v2595 = vunpack.c.h.b16 %v2405
    %v2596 = vunpack.c.l.b16 %v2406
    %v2597 = vunpack.c.h.b16 %v2406
    %v2598 = vunpack.c.l.b16 %v2407
    %v2599 = vunpack.c.h.b16 %v2407
    %v2600 = vunpack.c.l.b16 %v2408
    %v2601 = vunpack.c.h.b16 %v2408
    %v2602 = vunpack.c.l.b16 %v2409
    %v2603 = vunpack.c.h.b16 %v2409
    %v2604 = vunpack.c.l.b16 %v2410
    %v2605 = vunpack.c.h.b16 %v2410
    %v2606 = vunpack.c.l.b16 %v2411
    %v2607 = vunpack.c.h.b16 %v2411
    %v2608 = vunpack.c.l.b16 %v2412
    %v2609 = vunpack.c.h.b16 %v2412
    %v2610 = vunpack.c.l.b16 %v2413
    %v2611 = vunpack.c.h.b16 %v2413
    %v2612 = vunpack.c.l.b16 %v2414
    %v2613 = vunpack.c.h.b16 %v2414
    %v2614 = vunpack.c.l.b16 %v2415
    %v2615 = vunpack.c.h.b16 %v2415
    %v2616 = vunpack.c.l.b16 %v2416
    %v2617 = vunpack.c.h.b16 %v2416
    %v2618 = vunpack.c.l.b16 %v2417
    %v2619 = vunpack.c.h.b16 %v2417
    %v2620 = vunpack.c.l.b16 %v2418
    %v2621 = vunpack.c.h.b16 %v2418
    %v2622 = vunpack.c.l.b16 %v2419
    %v2623 = vunpack.c.h.b16 %v2419
    %v2624 = vpack.c.b16 %v2498, %v2496
    %v2625 = vpack.c.b16 %v2499, %v2497
    %v2626 = vpack.c.b16 %v2502, %v2500
    %v2627 = vpack.c.b16 %v2503, %v2501
    %v2628 = vpack.c.b16 %v2506, %v2504
    %v2629 = vpack.c.b16 %v2507, %v2505
    %v2630 = vpack.c.b16 %v2510, %v2508
    %v2631 = vpack.c.b16 %v2511, %v2509
    %v2632 = vpack.c.b16 %v2514, %v2512
    %v2633 = vpack.c.b16 %v2515, %v2513
    %v2634 = vpack.c.b16 %v2518, %v2516
    %v2635 = vpack.c.b16 %v2519, %v2517
    %v2636 = vpack.c.b16 %v2522, %v2520
    %v2637 = vpack.c.b16 %v2523, %v2521
    %v2638 = vpack.c.b16 %v2526, %v2524
    %v2639 = vpack.c.b16 %v2527, %v2525
    %v2640 = vpack.c.b16 %v2530, %v2528
    %v2641 = vpack.c.b16 %v2531, %v2529
    %v2642 = vpack.c.b16 %v2534, %v2532
    %v2643 = vpack.c.b16 %v2535, %v2533
    %v2644 = vpack.c.b16 %v2538, %v2536
    %v2645 = vpack.c.b16 %v2539, %v2537
    %v2646 = vpack.c.b16 %v2542, %v2540
    %v2647 = vpack.c.b16 %v2543, %v2541
    %v2648 = vpack.c.b16 %v2546, %v2544
    %v2649 = vpack.c.b16 %v2547, %v2545
    %v2650 = vpack.c.b16 %v2550, %v2548
    %v2651 = vpack.c.b16 %v2551, %v2549
    %v2652 = vpack.c.b16 %v2554, %v2552
    %v2653 = vpack.c.b16 %v2555, %v2553
    %v2654 = vpack.c.b16 %v2558, %v2556
    %v2655 = vpack.c.b16 %v2559, %v2557
    %v2656 = vpack.c.b16 %v2562, %v2560
    %v2657 = vpack.c.b16 %v2563, %v2561
    %v2658 = vpack.c.b16 %v2566, %v2564
    %v2659 = vpack.c.b16 %v2567, %v2565
    %v2660 = vpack.c.b16 %v2570, %v2568
    %v2661 = vpack.c.b16 %v2571, %v2569
    %v2662 = vpack.c.b16 %v2574, %v2572
    %v2663 = vpack.c.b16 %v2575, %v2573
    %v2664 = vpack.c.b16 %v2578, %v2576
    %v2665 = vpack.c.b16 %v2579, %v2577
    %v2666 = vpack.c.b16 %v2582, %v2580
    %v2667 = vpack.c.b16 %v2583, %v2581
    %v2668 = vpack.c.b16 %v2586, %v2584
    %v2669 = vpack.c.b16 %v2587, %v2585
    %v2670 = vpack.c.b16 %v2590, %v2588
    %v2671 = vpack.c.b16 %v2591, %v2589
    %v2672 = vpack.c.b16 %v2594, %v2592
    %v2673 = vpack.c.b16 %v2595, %v2593
    %v2674 = vpack.c.b16 %v2598, %v2596
    %v2675 = vpack.c.b16 %v2599, %v2597
    %v2676 = vpack.c.b16 %v2602, %v2600
    %v2677 = vpack.c.b16 %v2603, %v2601
    %v2678 = vpack.c.b16 %v2606, %v2604
    %v2679 = vpack.c.b16 %v2607, %v2605
    %v2680 = vpack.c.b16 %v2610, %v2608
    %v2681 = vpack.c.b16 %v2611, %v2609
    %v2682 = vpack.c.b16 %v2614, %v2612
    %v2683 = vpack.c.b16 %v2615, %v2613
    %v2684 = vpack.c.b16 %v2618, %v2616
    %v2685 = vpack.c.b16 %v2619, %v2617
    %v2686 = vpack.c.b16 %v2622, %v2620
    %v2687 = vpack.c.b16 %v2623, %v2621
    %2752 = vmatprep.subr.bf16.mxu0 %v2639
    %2753 = vmatpush1.bf16.msra.mxu0 %v2638
    %2754 = vmatprep.subr.bf16.mxu0 %v2637
    %2755 = vmatpush1.bf16.msra.mxu0 %v2636
    %2756 = vmatprep.subr.bf16.mxu0 %v2635
    %2757 = vmatpush1.bf16.msra.mxu0 %v2634
    %2758 = vmatprep.subr.bf16.mxu0 %v2633
    %2759 = vmatpush1.bf16.msra.mxu0 %v2632
    %2760 = vmatprep.subr.bf16.mxu0 %v2631
    %2761 = vmatpush1.bf16.msra.mxu0 %v2630
    %2762 = vmatprep.subr.bf16.mxu0 %v2629
    %2763 = vmatpush1.bf16.msra.mxu0 %v2628
    %2764 = vmatprep.subr.bf16.mxu0 %v2627
    %2765 = vmatpush1.bf16.msra.mxu0 %v2626
    %2766 = vmatprep.subr.bf16.mxu0 %v2625
    %2767 = vmatpush1.bf16.msra.mxu0 %v2624
    %2768 = vmatprep.subr.bf16.mxu0 %v2655
    %2769 = vmatpush2.bf16.msra.mxu0 %v2654
    %2770 = vmatprep.subr.bf16.mxu0 %v2653
    %2771 = vmatpush2.bf16.msra.mxu0 %v2652
    %2772 = vmatprep.subr.bf16.mxu0 %v2651
    %2773 = vmatpush2.bf16.msra.mxu0 %v2650
    %2774 = vmatprep.subr.bf16.mxu0 %v2649
    %2775 = vmatpush2.bf16.msra.mxu0 %v2648
    %2776 = vmatprep.subr.bf16.mxu0 %v2647
    %2777 = vmatpush2.bf16.msra.mxu0 %v2646
    %2778 = vmatprep.subr.bf16.mxu0 %v2645
    %2779 = vmatpush2.bf16.msra.mxu0 %v2644
    %2780 = vmatprep.subr.bf16.mxu0 %v2643
    %2781 = vmatpush2.bf16.msra.mxu0 %v2642
    %2782 = vmatprep.subr.bf16.mxu0 %v2641
    %2783 = vmatpush2.bf16.msra.mxu0 %v2640
    %2784 = vmatprep.mubr.bf16.mxu0 %v2353
    %2785 = vmatmul.mubr.bf16.gmra.mxu0 %v2352
    %v2786 = vpop.f32.mrf.mxu0
    %v2787 = vadd.f32 %v2425, %v2786
    %v2788 = vpop.f32.mrf.mxu0
    %v2789 = vadd.f32 %v2429, %v2788
    %v2790 = vpop.f32.mrf.mxu0
    %v2791 = vadd.f32 %v2425, %v2790
    %v2792 = vpop.f32.mrf.mxu0
    %v2793 = vadd.f32 %v2429, %v2792
    %2794 = vdwg.mxu0
    %2795 = vmatprep.subr.bf16.mxu0 %v2671
    %2796 = vmatpush1.bf16.msra.mxu0 %v2670
    %2797 = vmatprep.subr.bf16.mxu0 %v2669
    %2798 = vmatpush1.bf16.msra.mxu0 %v2668
    %2799 = vmatprep.subr.bf16.mxu0 %v2667
    %2800 = vmatpush1.bf16.msra.mxu0 %v2666
    %2801 = vmatprep.subr.bf16.mxu0 %v2665
    %2802 = vmatpush1.bf16.msra.mxu0 %v2664
    %2803 = vmatprep.subr.bf16.mxu0 %v2663
    %2804 = vmatpush1.bf16.msra.mxu0 %v2662
    %2805 = vmatprep.subr.bf16.mxu0 %v2661
    %2806 = vmatpush1.bf16.msra.mxu0 %v2660
    %2807 = vmatprep.subr.bf16.mxu0 %v2659
    %2808 = vmatpush1.bf16.msra.mxu0 %v2658
    %2809 = vmatprep.subr.bf16.mxu0 %v2657
    %2810 = vmatpush1.bf16.msra.mxu0 %v2656
    %2811 = vmatprep.subr.bf16.mxu0 %v2687
    %2812 = vmatpush2.bf16.msra.mxu0 %v2686
    %2813 = vmatprep.subr.bf16.mxu0 %v2685
    %2814 = vmatpush2.bf16.msra.mxu0 %v2684
    %2815 = vmatprep.subr.bf16.mxu0 %v2683
    %2816 = vmatpush2.bf16.msra.mxu0 %v2682
    %2817 = vmatprep.subr.bf16.mxu0 %v2681
    %2818 = vmatpush2.bf16.msra.mxu0 %v2680
    %2819 = vmatprep.subr.bf16.mxu0 %v2679
    %2820 = vmatpush2.bf16.msra.mxu0 %v2678
    %2821 = vmatprep.subr.bf16.mxu0 %v2677
    %2822 = vmatpush2.bf16.msra.mxu0 %v2676
    %2823 = vmatprep.subr.bf16.mxu0 %v2675
    %2824 = vmatpush2.bf16.msra.mxu0 %v2674
    %2825 = vmatprep.subr.bf16.mxu0 %v2673
    %2826 = vmatpush2.bf16.msra.mxu0 %v2672
    %2827 = vmatprep.mubr.bf16.mxu0 %v2355
    %2828 = vmatmul.mubr.bf16.gmra.mxu0 %v2354
    %v2829 = vpop.f32.mrf.mxu0
    %v2830 = vadd.f32 %v2787, %v2829
    %v2831 = vpop.f32.mrf.mxu0
    %v2832 = vadd.f32 %v2789, %v2831
    %v2833 = vpop.f32.mrf.mxu0
    %v2834 = vadd.f32 %v2791, %v2833
    %v2835 = vpop.f32.mrf.mxu0
    %v2836 = vadd.f32 %v2793, %v2835
    %2837 = vdwg.mxu0
    %v2838 = vmul.f32 %v2830, 0.2
    %v2839 = vmul.f32 %v2832, 0.2
    %v2840 = vmul.f32 %v2834, 0.2
    %v2841 = vmul.f32 %v2836, 0.2
    %v2842 = vmax.f32 %v2830, %v2838
    %v2843 = vmax.f32 %v2832, %v2839
    %v2844 = vmax.f32 %v2834, %v2840
    %v2845 = vmax.f32 %v2836, %v2841
    %v2846 = vpack.c.bf16 %v2844, %v2842
    %v2847 = vpack.c.bf16 %v2845, %v2843
    %v2848 = vld [vmem:[%s6] sm:$0xf]
    %v2849 = vld [vmem:[%s6 + $0x4] sm:$0xf]
    %v2850 = vld [vmem:[%s6 + $0x8] sm:$0xf]
    %v2851 = vld [vmem:[%s6 + $0xc] sm:$0xf]
    %v2852 = vld [vmem:[%s6 + $0x10] sm:$0xf]
    %v2853 = vld [vmem:[%s6 + $0x14] sm:$0xf]
    %v2854 = vld [vmem:[%s6 + $0x18] sm:$0xf]
    %v2855 = vld [vmem:[%s6 + $0x1c] sm:$0xf]
    %v2856 = vld [vmem:[%s6 + $0x20] sm:$0xf]
    %v2857 = vld [vmem:[%s6 + $0x24] sm:$0xf]
    %v2858 = vld [vmem:[%s6 + $0x28] sm:$0xf]
    %v2859 = vld [vmem:[%s6 + $0x2c] sm:$0xf]
    %v2860 = vld [vmem:[%s6 + $0x30] sm:$0xf]
    %v2861 = vld [vmem:[%s6 + $0x34] sm:$0xf]
    %v2862 = vld [vmem:[%s6 + $0x38] sm:$0xf]
    %v2863 = vld [vmem:[%s6 + $0x3c] sm:$0xf]
    %v2864 = vld [vmem:[%s6 + $0x40] sm:$0xf]
    %v2865 = vld [vmem:[%s6 + $0x44] sm:$0xf]
    %v2866 = vld [vmem:[%s6 + $0x48] sm:$0xf]
    %v2867 = vld [vmem:[%s6 + $0x4c] sm:$0xf]
    %v2868 = vld [vmem:[%s6 + $0x50] sm:$0xf]
    %v2869 = vld [vmem:[%s6 + $0x54] sm:$0xf]
    %v2870 = vld [vmem:[%s6 + $0x58] sm:$0xf]
    %v2871 = vld [vmem:[%s6 + $0x5c] sm:$0xf]
    %v2872 = vld [vmem:[%s6 + $0x60] sm:$0xf]
    %v2873 = vld [vmem:[%s6 + $0x64] sm:$0xf]
    %v2874 = vld [vmem:[%s6 + $0x68] sm:$0xf]
    %v2875 = vld [vmem:[%s6 + $0x6c] sm:$0xf]
    %v2876 = vld [vmem:[%s6 + $0x70] sm:$0xf]
    %v2877 = vld [vmem:[%s6 + $0x74] sm:$0xf]
    %v2878 = vld [vmem:[%s6 + $0x78] sm:$0xf]
    %v2879 = vld [vmem:[%s6 + $0x7c] sm:$0xf]
    %v2880 = vld [vmem:[%s7] sm:$0x1]
    %v2882 = vlaneseq
    %v2883 = vshrl.u32 %v2882, 7
    %v2884 = vsub.s32 0, %v2883
    %v2885 = vrot.slane %v2880, %v2884
    %v2919 = vunpack.c.l.b16 %v2848
    %v2920 = vunpack.c.l.b16 %v2849
    %v2921 = vunpack.c.l.b16 %v2850
    %v2922 = vunpack.c.l.b16 %v2851
    %v2923 = vunpack.c.l.b16 %v2852
    %v2924 = vunpack.c.l.b16 %v2853
    %v2925 = vunpack.c.l.b16 %v2854
    %v2926 = vunpack.c.l.b16 %v2855
    %v2927 = vunpack.c.l.b16 %v2856
    %v2928 = vunpack.c.l.b16 %v2857
    %v2929 = vunpack.c.l.b16 %v2858
    %v2930 = vunpack.c.l.b16 %v2859
    %v2931 = vunpack.c.l.b16 %v2860
    %v2932 = vunpack.c.l.b16 %v2861
    %v2933 = vunpack.c.l.b16 %v2862
    %v2934 = vunpack.c.l.b16 %v2863
    %v2935 = vunpack.c.l.b16 %v2864
    %v2936 = vunpack.c.l.b16 %v2865
    %v2937 = vunpack.c.l.b16 %v2866
    %v2938 = vunpack.c.l.b16 %v2867
    %v2939 = vunpack.c.l.b16 %v2868
    %v2940 = vunpack.c.l.b16 %v2869
    %v2941 = vunpack.c.l.b16 %v2870
    %v2942 = vunpack.c.l.b16 %v2871
    %v2943 = vunpack.c.l.b16 %v2872
    %v2944 = vunpack.c.l.b16 %v2873
    %v2945 = vunpack.c.l.b16 %v2874
    %v2946 = vunpack.c.l.b16 %v2875
    %v2947 = vunpack.c.l.b16 %v2876
    %v2948 = vunpack.c.l.b16 %v2877
    %v2949 = vunpack.c.l.b16 %v2878
    %v2950 = vunpack.c.l.b16 %v2879
    %v2951 = vpack.c.b16 %v2920, %v2919
    %v2952 = vpack.c.b16 %v2922, %v2921
    %v2953 = vpack.c.b16 %v2924, %v2923
    %v2954 = vpack.c.b16 %v2926, %v2925
    %v2955 = vpack.c.b16 %v2928, %v2927
    %v2956 = vpack.c.b16 %v2930, %v2929
    %v2957 = vpack.c.b16 %v2932, %v2931
    %v2958 = vpack.c.b16 %v2934, %v2933
    %v2959 = vpack.c.b16 %v2936, %v2935
    %v2960 = vpack.c.b16 %v2938, %v2937
    %v2961 = vpack.c.b16 %v2940, %v2939
    %v2962 = vpack.c.b16 %v2942, %v2941
    %v2963 = vpack.c.b16 %v2944, %v2943
    %v2964 = vpack.c.b16 %v2946, %v2945
    %v2965 = vpack.c.b16 %v2948, %v2947
    %v2966 = vpack.c.b16 %v2950, %v2949
    %2983 = vmatprep.subr.bf16.mxu0 0
    %2984 = vmatpush1.bf16.msra.mxu0 %v2958
    %2985 = vmatprep.subr.bf16.mxu0 0
    %2986 = vmatpush1.bf16.msra.mxu0 %v2957
    %2987 = vmatprep.subr.bf16.mxu0 0
    %2988 = vmatpush1.bf16.msra.mxu0 %v2956
    %2989 = vmatprep.subr.bf16.mxu0 0
    %2990 = vmatpush1.bf16.msra.mxu0 %v2955
    %2991 = vmatprep.subr.bf16.mxu0 0
    %2992 = vmatpush1.bf16.msra.mxu0 %v2954
    %2993 = vmatprep.subr.bf16.mxu0 0
    %2994 = vmatpush1.bf16.msra.mxu0 %v2953
    %2995 = vmatprep.subr.bf16.mxu0 0
    %2996 = vmatpush1.bf16.msra.mxu0 %v2952
    %2997 = vmatprep.subr.bf16.mxu0 0
    %2998 = vmatpush1.bf16.msra.mxu0 %v2951
    %2999 = vmatprep.subr.bf16.mxu0 0
    %3000 = vmatpush2.bf16.msra.mxu0 %v2966
    %3001 = vmatprep.subr.bf16.mxu0 0
    %3002 = vmatpush2.bf16.msra.mxu0 %v2965
    %3003 = vmatprep.subr.bf16.mxu0 0
    %3004 = vmatpush2.bf16.msra.mxu0 %v2964
    %3005 = vmatprep.subr.bf16.mxu0 0
    %3006 = vmatpush2.bf16.msra.mxu0 %v2963
    %3007 = vmatprep.subr.bf16.mxu0 0
    %3008 = vmatpush2.bf16.msra.mxu0 %v2962
    %3009 = vmatprep.subr.bf16.mxu0 0
    %3010 = vmatpush2.bf16.msra.mxu0 %v2961
    %3011 = vmatprep.subr.bf16.mxu0 0
    %3012 = vmatpush2.bf16.msra.mxu0 %v2960
    %3013 = vmatprep.subr.bf16.mxu0 0
    %3014 = vmatpush2.bf16.msra.mxu0 %v2959
    %3015 = vmatprep.mubr.bf16.mxu0 %v2847
    %3016 = vmatmul.mubr.bf16.gmra.mxu0 %v2846
    %v3017 = vpop.f32.mrf.mxu0
    %v3018 = vadd.f32 %v2885, %v3017
    %v3019 = vpop.f32.mrf.mxu0
    %v3020 = vpop.f32.mrf.mxu0
    %v3021 = vadd.f32 %v2885, %v3020
    %v3022 = vpop.f32.mrf.mxu0
    %3023 = vdwg.mxu0
    %v3024 = vxor.u32 %v3018, 2147483648
    %v3025 = vxor.u32 %v3021, 2147483648
    %v3026 = vmul.f32 %v3024, 1.442695
    %v3027 = vpow.pop %v3026
    %v3028 = vmul.f32 %v3025, 1.442695
    %v3029 = vpow.pop %v3028
    %v3030 = vadd.f32 %v3027, 1.0
    %v3031 = vadd.f32 %v3029, 1.0
    %v3032 = vrcp.pop %v3030
    %v3033 = vmul.f32 1.0, %v3032
    %v3034 = vrcp.pop %v3031
    %v3035 = vmul.f32 1.0, %v3034
    %v3036 = vpack.c.bf16 %v3035, %v3033
    %v3038 = vcombine.high %v3036, %v3036
    %v3040 = vunpack.c.l.s4 1966171168
    %v3041 = vunpack.c.0.s8 %v3040
    %v3042 = vlaneseq
    %v3043 = vshrl.u32 %v3042, 7
    %v3044 = vsub.s32 %v3041, %v3043
    %v3045 = vrot.slane %v3036, %v3044
    %v3047 = vunpack.c.l.s4 1966171168
    %v3048 = vunpack.c.0.s8 %v3047
    %v3049 = vlaneseq
    %v3050 = vshrl.u32 %v3049, 7
    %v3051 = vsub.s32 %v3048, %v3050
    %v3052 = vrot.slane %v3038, %v3051
    %v3053 = vcombine.high %v3045, %v3045
    %v3054 = vcombine.high %v3052, %v3052
    %v3056 = vunpack.c.l.s4 1966171168
    %v3057 = vunpack.c.0.s8 %v3056
    %v3058 = vlaneseq
    %v3059 = vshrl.u32 %v3058, 7
    %v3060 = vsub.s32 %v3057, %v3059
    %v3061 = vrot.slane %v3045, %v3060
    %v3063 = vunpack.c.l.s4 1966171168
    %v3064 = vunpack.c.0.s8 %v3063
    %v3065 = vlaneseq
    %v3066 = vshrl.u32 %v3065, 7
    %v3067 = vsub.s32 %v3064, %v3066
    %v3068 = vrot.slane %v3052, %v3067
    %v3070 = vunpack.c.l.s4 1966171168
    %v3071 = vunpack.c.0.s8 %v3070
    %v3072 = vlaneseq
    %v3073 = vshrl.u32 %v3072, 7
    %v3074 = vsub.s32 %v3071, %v3073
    %v3075 = vrot.slane %v3053, %v3074
    %v3077 = vunpack.c.l.s4 1966171168
    %v3078 = vunpack.c.0.s8 %v3077
    %v3079 = vlaneseq
    %v3080 = vshrl.u32 %v3079, 7
    %v3081 = vsub.s32 %v3078, %v3080
    %v3082 = vrot.slane %v3054, %v3081
    %v3083 = vcombine.high %v3061, %v3061
    %v3084 = vcombine.high %v3068, %v3068
    %v3085 = vcombine.high %v3075, %v3075
    %v3086 = vcombine.high %v3082, %v3082
    %3095 = vst [vmem:[#allocation7] sm:$0x1] %v3061
    %3096 = vst [vmem:[#allocation7 + $0x1] sm:$0x1] %v3075
    %3097 = vst [vmem:[#allocation7 + $0x2] sm:$0x1] %v3083
    %3098 = vst [vmem:[#allocation7 + $0x3] sm:$0x1] %v3085
    %3099 = vst [vmem:[#allocation7 + $0x4] sm:$0x1] %v3068
    %3100 = vst [vmem:[#allocation7 + $0x5] sm:$0x1] %v3082
    %3101 = vst [vmem:[#allocation7 + $0x6] sm:$0x1] %v3084
    %3102 = vst [vmem:[#allocation7 + $0x7] sm:$0x1] %v3086
    // Predicated region
    $region46: #{_forward_impl.1} parent=1 // pred_check
      _
    $region47: #{_forward_impl.1} parent=1 // pred_check_branch
      %3104 = sbr.rel (0) target = $region49
    $region48: #{_forward_impl.1} parent=1 // pred_region
      // Predicated region
      $region50: #{_forward_impl.1} parent=48 // pred_check
        _
      $region51: #{_forward_impl.1} parent=48 // pred_check_branch
        %3106 = sbr.rel (0) target = $region53
      $region52: #{_forward_impl.1} parent=48 // pred_region
        // Predicated region
        $region54: #{_forward_impl.1} parent=52 // pred_check
          _
        $region55: #{_forward_impl.1} parent=52 // pred_check_branch
          %3108 = sbr.rel target = $region57
        $region56: #{_forward_impl.1} parent=52 // pred_region
          // Predicated region
          $region69: #{_forward_impl.1} parent=56 // pred_check
            _
          $region70: #{_forward_impl.1} parent=56 // pred_check_branch
            %3124 = sbr.rel (0) target = $region72
          $region71: #{_forward_impl.1} parent=56 // pred_region
            %s3126 = ssub.s32 2, 1
            loop: start=0, step=1, limit=1
            $region73: #{_forward_impl.1} parent=71 // loop_pre_header
              _
            $region74: #{_forward_impl.1} parent=71 // loop_header
              %s3128 = sphi 0, %s3132
              %p3129 = scmp.ge.s32.totalorder %s3128, 1
              %s3133 = sphi [#allocation7], [#allocation7]
              %s3134 = sphi %s8, %s8
            $region75: #{_forward_impl.1} parent=71 // loop_header_branch
              %3131 = sbr.rel (%p3129) target = $region79
            $region76: #{_forward_impl.1} parent=71 // loop_body
              %v3135 = vld [vmem:[%s3133] sm:%s3126]
              %3136 = vst [vmem:[%s3134] sm:%s3126] %v3135
            $region77: #{_forward_impl.1} parent=71 // loop_footer
              %s3132 = sadd.s32 1, %s3128
            $region78: #{_forward_impl.1} parent=71 // loop_footer_branch
              %3127 = sbr.rel target = $region74
            $region79: #{_forward_impl.1} parent=71 // loop_exit
              _
          $region72: #{_forward_impl.1} parent=56 // pred_fallthru
            _
        $region57: #{_forward_impl.1} parent=52 // pred_fallthru
          _
        // Predicated region
        $region58: #{_forward_impl.1} parent=52 // pred_check
          _
        $region59: #{_forward_impl.1} parent=52 // pred_check_branch
          %3110 = sbr.rel (0) target = $region61
        $region60: #{_forward_impl.1} parent=52 // pred_region
          %s3112 = ssub.s32 2, 1
          loop: start=0, step=1, limit=1
          $region62: #{_forward_impl.1} parent=60 // loop_pre_header
            _
          $region63: #{_forward_impl.1} parent=60 // loop_header
            %s3114 = sphi 0, %s3118
            %p3115 = scmp.ge.s32.totalorder %s3114, 1
            %s3119 = sphi [#allocation7], [#allocation7]
            %s3120 = sphi %s8, %s8
          $region64: #{_forward_impl.1} parent=60 // loop_header_branch
            %3117 = sbr.rel (%p3115) target = $region68
          $region65: #{_forward_impl.1} parent=60 // loop_body
            %v3121 = vld [vmem:[%s3119] sm:%s3112]
            %3122 = vst [vmem:[%s3120] sm:%s3112] %v3121
          $region66: #{_forward_impl.1} parent=60 // loop_footer
            %s3118 = sadd.s32 1, %s3114
          $region67: #{_forward_impl.1} parent=60 // loop_footer_branch
            %3113 = sbr.rel target = $region63
          $region68: #{_forward_impl.1} parent=60 // loop_exit
            _
        $region61: #{_forward_impl.1} parent=52 // pred_fallthru
          _
      $region53: #{_forward_impl.1} parent=48 // pred_fallthru
        _
      %3137 = vnop
    $region49: #{_forward_impl.1} parent=1 // pred_fallthru
      _
    // Predicated region
    $region80: #{_forward_impl.1} parent=1 // pred_check
      _
    $region81: #{_forward_impl.1} parent=1 // pred_check_branch
      %3139 = sbr.rel (0) target = $region83
    $region82: #{_forward_impl.1} parent=1 // pred_region
      _
    $region83: #{_forward_impl.1} parent=1 // pred_fallthru
      _
    %3140 = vsyncpa [#allocation3], 1
    %3141 = vsyncpa [#allocation5], 1

// kernel: _forward_impl.1
$region0: #{_forward_impl.1}
  #allocation0 [shape = 'u32[]', space=smem, size = 0x4, offset = 0x4, fixed_abs, tag = 'smem constant byte address 0x4 - core index']
  #allocation1 [shape = 'u32[144,128]{1,0:T(1,128)}', space=vmem, size = 0x12000, scoped, tag = 'internal scratch']
  %s0 = inlined_call_operand.vmem [shape: f32[2,1024], index: 0, kind: input, shape index: {}]
  %s1 = inlined_call_operand.vmem [shape: s32[2,1], index: 1, kind: input, shape index: {}]
  %s2 = inlined_call_operand.hbm [shape: bf16[1024,512], index: 2, kind: input, shape index: {}]
  %s3 = inlined_call_operand.hbm [shape: f32[16,512], index: 3, kind: input, shape index: {}]
  %s4 = inlined_call_operand.hbm [shape: bf16[512,256], index: 4, kind: input, shape index: {}]
  %s5 = inlined_call_operand.vmem [shape: f32[1,256], index: 5, kind: input, shape index: {}]
  %s6 = inlined_call_operand.vmem [shape: bf16[256,128], index: 6, kind: input, shape index: {}]
  %s7 = inlined_call_operand.vmem [shape: f32[1,128], index: 7, kind: input, shape index: {}]
  %s8 = inlined_call_operand.vmem [shape: bf16[2,128], index: 8, kind: output, shape index: {}]
  %s9 = sld [smem:[#allocation0]]
  $region84: #{_forward_impl.1} parent=0
    _
  %s11 = ssub.s32 1, %s9
  %s12 = scalar_select 0, %s11, %s9
  $region1: #{_forward_impl.1} parent=0
    #allocation2 [shape = 'u8[1048576]{0}', space=vmem, size = 0x100000, scoped, tag = 'input window, operand 2, single buffered']
    #allocation3 [shape = 's32[1]{0}', space=sflag, size = 0x4, scoped, tag = 'scoped memory for _forward_impl.1']
    #allocation4 [shape = 'u8[32768]{0}', space=vmem, size = 0x8000, scoped, tag = 'input window, operand 3, single buffered']
    #allocation5 [shape = 's32[1]{0}', space=sflag, size = 0x4, scoped, tag = 'scoped memory for _forward_impl.1']
    #allocation6 [shape = 'u8[262144]{0}', space=vmem, size = 0x40000, scoped, tag = 'input window, operand 4, single buffered']
    #allocation7 [shape = 'u8[4096]{0}', space=vmem, size = 0x1000, scoped, tag = 'output window, operand 0, single buffered']
    %13 = vsyncpa [#allocation3], 0
    %14 = vsyncpa [#allocation5], 0
    // Predicated region
    $region2: #{_forward_impl.1} parent=1 // pred_check
      _
    $region3: #{_forward_impl.1} parent=1 // pred_check_branch
      %16 = sbr.rel (0) target = $region5
    $region4: #{_forward_impl.1} parent=1 // pred_region
      _
    $region5: #{_forward_impl.1} parent=1 // pred_fallthru
      _
    // Predicated region
    $region6: #{_forward_impl.1} parent=1 // pred_check
      _
    $region7: #{_forward_impl.1} parent=1 // pred_check_branch
      %18 = sbr.rel (0) target = $region9
    $region8: #{_forward_impl.1} parent=1 // pred_region
      _
    $region9: #{_forward_impl.1} parent=1 // pred_fallthru
      _
    // Predicated region
    $region10: #{_forward_impl.1} parent=1 // pred_check
      _
    $region11: #{_forward_impl.1} parent=1 // pred_check_branch
      %20 = sbr.rel (0) target = $region13
    $region12: #{_forward_impl.1} parent=1 // pred_region
      %s22 = ssub.s32 32768, 32768
      %23 = vsyncadd [#allocation3], %s22
      %s24 = sshll.u32 [#allocation2], 4
      %s25 = int_to_ptr.vmem [resolvable:$true] %s24
      %30 = dma.hbm_to_vmem [thread:$0]  %s2, 32768, %s25, [#allocation3], 256, 256, 16
    $region13: #{_forward_impl.1} parent=1 // pred_fallthru
      _
    // Predicated region
    $region14: #{_forward_impl.1} parent=1 // pred_check
      _
    $region15: #{_forward_impl.1} parent=1 // pred_check_branch
      %32 = sbr.rel (0) target = $region17
    $region16: #{_forward_impl.1} parent=1 // pred_region
      %s34 = ssub.s32 1024, 1024
      %35 = vsyncadd [#allocation5], %s34
      %s36 = sshll.u32 [#allocation4], 4
      %s37 = int_to_ptr.vmem [resolvable:$true] %s36
      %42 = dma.hbm_to_vmem [thread:$0]  %s3, 1024, %s37, [#allocation5], 512, 512, 32
    $region17: #{_forward_impl.1} parent=1 // pred_fallthru
      _
    // Predicated region
    $region18: #{_forward_impl.1} parent=1 // pred_check
      _
    $region19: #{_forward_impl.1} parent=1 // pred_check_branch
      %44 = sbr.rel (0) target = $region21
    $region20: #{_forward_impl.1} parent=1 // pred_region
      %s46 = ssub.s32 8192, 8192
      %47 = vsyncadd [#allocation5], %s46
      %s48 = sshll.u32 [#allocation6], 4
      %s49 = int_to_ptr.vmem [resolvable:$true] %s48
      %54 = dma.hbm_to_vmem [thread:$0]  %s4, 8192, %s49, [#allocation5], 128, 128, 8
    $region21: #{_forward_impl.1} parent=1 // pred_fallthru
      _
    // Predicated region
    $region22: #{_forward_impl.1} parent=1 // pred_check
      _
    $region23: #{_forward_impl.1} parent=1 // pred_check_branch
      %56 = sbr.rel (0) target = $region25
    $region24: #{_forward_impl.1} parent=1 // pred_region
      _
    $region25: #{_forward_impl.1} parent=1 // pred_fallthru
      _
    // Predicated region
    $region26: #{_forward_impl.1} parent=1 // pred_check
      _
    $region27: #{_forward_impl.1} parent=1 // pred_check_branch
      %58 = sbr.rel (0) target = $region29
    $region28: #{_forward_impl.1} parent=1 // pred_region
      _
    $region29: #{_forward_impl.1} parent=1 // pred_fallthru
      _
    // Predicated region
    $region30: #{_forward_impl.1} parent=1 // pred_check
      _
    $region31: #{_forward_impl.1} parent=1 // pred_check_branch
      %60 = sbr.rel (0) target = $region33
    $region32: #{_forward_impl.1} parent=1 // pred_region
      _
    $region33: #{_forward_impl.1} parent=1 // pred_fallthru
      _
    // Predicated region
    $region34: #{_forward_impl.1} parent=1 // pred_check
      _
    $region35: #{_forward_impl.1} parent=1 // pred_check_branch
      %62 = sbr.rel (0) target = $region37
    $region36: #{_forward_impl.1} parent=1 // pred_region
      %63 = dma.done [#allocation3], 32768
    $region37: #{_forward_impl.1} parent=1 // pred_fallthru
      _
    // Predicated region
    $region38: #{_forward_impl.1} parent=1 // pred_check
      _
    $region39: #{_forward_impl.1} parent=1 // pred_check_branch
      %65 = sbr.rel (0) target = $region41
    $region40: #{_forward_impl.1} parent=1 // pred_region
      %66 = dma.done [#allocation5], 1024
    $region41: #{_forward_impl.1} parent=1 // pred_fallthru
      _
    // Predicated region
    $region42: #{_forward_impl.1} parent=1 // pred_check
      _
    $region43: #{_forward_impl.1} parent=1 // pred_check_branch
      %68 = sbr.rel (0) target = $region45
    $region44: #{_forward_impl.1} parent=1 // pred_region
      %69 = dma.done [#allocation5], 8192
    $region45: #{_forward_impl.1} parent=1 // pred_fallthru
      _
    %v71 = vld [vmem:[%s0] sm:$0xff]
    %v72 = vld [vmem:[%s0 + $0x8] sm:$0xff]
    %v73 = vld [vmem:[%s0 + $0x10] sm:$0xff]
    %v74 = vld [vmem:[%s0 + $0x18] sm:$0xff]
    %v75 = vld [vmem:[%s0 + $0x20] sm:$0xff]
    %v76 = vld [vmem:[%s0 + $0x28] sm:$0xff]
    %v77 = vld [vmem:[%s0 + $0x30] sm:$0xff]
    %v78 = vld [vmem:[%s0 + $0x38] sm:$0xff]
    %v79 = vld [vmem:[%s0 + $0x40] sm:$0xff]
    %v80 = vld [vmem:[%s0 + $0x48] sm:$0xff]
    %v81 = vld [vmem:[%s0 + $0x50] sm:$0xff]
    %v82 = vld [vmem:[%s0 + $0x58] sm:$0xff]
    %v83 = vld [vmem:[%s0 + $0x60] sm:$0xff]
    %v84 = vld [vmem:[%s0 + $0x68] sm:$0xff]
    %v85 = vld [vmem:[%s0 + $0x70] sm:$0xff]
    %v86 = vld [vmem:[%s0 + $0x78] sm:$0xff]
    %v103 = vcombine.low %v71, %v73
    %v104 = vcombine.high %v71, %v73
    %v105 = vcombine.low %v75, %v77
    %v106 = vcombine.high %v75, %v77
    %v108 = vunpack.c.l.s4 1983009808
    %v109 = vunpack.c.0.s8 %v108
    %v110 = vlaneseq
    %v111 = vshrl.u32 %v110, 7
    %v112 = vsub.s32 %v109, %v111
    %v113 = vrot.slane %v103, %v112
    %v115 = vunpack.c.l.s4 1983009808
    %v116 = vunpack.c.0.s8 %v115
    %v117 = vlaneseq
    %v118 = vshrl.u32 %v117, 7
    %v119 = vsub.s32 %v116, %v118
    %v120 = vrot.slane %v104, %v119
    %v122 = vunpack.c.l.s4 1983009808
    %v123 = vunpack.c.0.s8 %v122
    %v124 = vlaneseq
    %v125 = vshrl.u32 %v124, 7
    %v126 = vsub.s32 %v123, %v125
    %v127 = vrot.slane %v105, %v126
    %v129 = vunpack.c.l.s4 1983009808
    %v130 = vunpack.c.0.s8 %v129
    %v131 = vlaneseq
    %v132 = vshrl.u32 %v131, 7
    %v133 = vsub.s32 %v130, %v132
    %v134 = vrot.slane %v106, %v133
    %v135 = vcombine.low %v113, %v127
    %v136 = vcombine.high %v113, %v127
    %v137 = vcombine.low %v120, %v134
    %v138 = vcombine.high %v120, %v134
    %v139 = vcombine.low %v72, %v74
    %v140 = vcombine.high %v72, %v74
    %v141 = vcombine.low %v76, %v78
    %v142 = vcombine.high %v76, %v78
    %v144 = vunpack.c.l.s4 1983009808
    %v145 = vunpack.c.0.s8 %v144
    %v146 = vlaneseq
    %v147 = vshrl.u32 %v146, 7
    %v148 = vsub.s32 %v145, %v147
    %v149 = vrot.slane %v139, %v148
    %v151 = vunpack.c.l.s4 1983009808
    %v152 = vunpack.c.0.s8 %v151
    %v153 = vlaneseq
    %v154 = vshrl.u32 %v153, 7
    %v155 = vsub.s32 %v152, %v154
    %v156 = vrot.slane %v140, %v155
    %v158 = vunpack.c.l.s4 1983009808
    %v159 = vunpack.c.0.s8 %v158
    %v160 = vlaneseq
    %v161 = vshrl.u32 %v160, 7
    %v162 = vsub.s32 %v159, %v161
    %v163 = vrot.slane %v141, %v162
    %v165 = vunpack.c.l.s4 1983009808
    %v166 = vunpack.c.0.s8 %v165
    %v167 = vlaneseq
    %v168 = vshrl.u32 %v167, 7
    %v169 = vsub.s32 %v166, %v168
    %v170 = vrot.slane %v142, %v169
    %v171 = vcombine.low %v149, %v163
    %v172 = vcombine.high %v149, %v163
    %v173 = vcombine.low %v156, %v170
    %v174 = vcombine.high %v156, %v170
    %v175 = vcombine.low %v79, %v81
    %v176 = vcombine.high %v79, %v81
    %v177 = vcombine.low %v83, %v85
    %v178 = vcombine.high %v83, %v85
    %v180 = vunpack.c.l.s4 1983009808
    %v181 = vunpack.c.0.s8 %v180
    %v182 = vlaneseq
    %v183 = vshrl.u32 %v182, 7
    %v184 = vsub.s32 %v181, %v183
    %v185 = vrot.slane %v175, %v184
    %v187 = vunpack.c.l.s4 1983009808
    %v188 = vunpack.c.0.s8 %v187
    %v189 = vlaneseq
    %v190 = vshrl.u32 %v189, 7
    %v191 = vsub.s32 %v188, %v190
    %v192 = vrot.slane %v176, %v191
    %v194 = vunpack.c.l.s4 1983009808
    %v195 = vunpack.c.0.s8 %v194
    %v196 = vlaneseq
    %v197 = vshrl.u32 %v196, 7
    %v198 = vsub.s32 %v195, %v197
    %v199 = vrot.slane %v177, %v198
    %v201 = vunpack.c.l.s4 1983009808
    %v202 = vunpack.c.0.s8 %v201
    %v203 = vlaneseq
    %v204 = vshrl.u32 %v203, 7
    %v205 = vsub.s32 %v202, %v204
    %v206 = vrot.slane %v178, %v205
    %v207 = vcombine.low %v185, %v199
    %v208 = vcombine.high %v185, %v199
    %v209 = vcombine.low %v192, %v206
    %v210 = vcombine.high %v192, %v206
    %v211 = vcombine.low %v80, %v82
    %v212 = vcombine.high %v80, %v82
    %v213 = vcombine.low %v84, %v86
    %v214 = vcombine.high %v84, %v86
    %v216 = vunpack.c.l.s4 1983009808
    %v217 = vunpack.c.0.s8 %v216
    %v218 = vlaneseq
    %v219 = vshrl.u32 %v218, 7
    %v220 = vsub.s32 %v217, %v219
    %v221 = vrot.slane %v211, %v220
    %v223 = vunpack.c.l.s4 1983009808
    %v224 = vunpack.c.0.s8 %v223
    %v225 = vlaneseq
    %v226 = vshrl.u32 %v225, 7
    %v227 = vsub.s32 %v224, %v226
    %v228 = vrot.slane %v212, %v227
    %v230 = vunpack.c.l.s4 1983009808
    %v231 = vunpack.c.0.s8 %v230
    %v232 = vlaneseq
    %v233 = vshrl.u32 %v232, 7
    %v234 = vsub.s32 %v231, %v233
    %v235 = vrot.slane %v213, %v234
    %v237 = vunpack.c.l.s4 1983009808
    %v238 = vunpack.c.0.s8 %v237
    %v239 = vlaneseq
    %v240 = vshrl.u32 %v239, 7
    %v241 = vsub.s32 %v238, %v240
    %v242 = vrot.slane %v214, %v241
    %v243 = vcombine.low %v221, %v235
    %v244 = vcombine.high %v221, %v235
    %v245 = vcombine.low %v228, %v242
    %v246 = vcombine.high %v228, %v242
    %v263 = vpack.c.bf16 %v207, %v135
    %v264 = vpack.c.bf16 %v208, %v136
    %v265 = vpack.c.bf16 %v209, %v137
    %v266 = vpack.c.bf16 %v210, %v138
    %v267 = vpack.c.bf16 %v243, %v171
    %v268 = vpack.c.bf16 %v244, %v172
    %v269 = vpack.c.bf16 %v245, %v173
    %v270 = vpack.c.bf16 %v246, %v174
    %v271 = vld [vmem:[#allocation2] sm:$0xff]
    %v272 = vld [vmem:[#allocation2 + $0x8] sm:$0xff]
    %v273 = vld [vmem:[#allocation2 + $0x10] sm:$0xff]
    %v274 = vld [vmem:[#allocation2 + $0x18] sm:$0xff]
    %v275 = vld [vmem:[#allocation2 + $0x20] sm:$0xff]
    %v276 = vld [vmem:[#allocation2 + $0x28] sm:$0xff]
    %v277 = vld [vmem:[#allocation2 + $0x30] sm:$0xff]
    %v278 = vld [vmem:[#allocation2 + $0x38] sm:$0xff]
    %v279 = vld [vmem:[#allocation2 + $0x40] sm:$0xff]
    %v280 = vld [vmem:[#allocation2 + $0x48] sm:$0xff]
    %v281 = vld [vmem:[#allocation2 + $0x50] sm:$0xff]
    %v282 = vld [vmem:[#allocation2 + $0x58] sm:$0xff]
    %v283 = vld [vmem:[#allocation2 + $0x60] sm:$0xff]
    %v284 = vld [vmem:[#allocation2 + $0x68] sm:$0xff]
    %v285 = vld [vmem:[#allocation2 + $0x70] sm:$0xff]
    %v286 = vld [vmem:[#allocation2 + $0x78] sm:$0xff]
    %v287 = vld [vmem:[#allocation2 + $0x80] sm:$0xff]
    %v288 = vld [vmem:[#allocation2 + $0x88] sm:$0xff]
    %v289 = vld [vmem:[#allocation2 + $0x90] sm:$0xff]
    %v290 = vld [vmem:[#allocation2 + $0x98] sm:$0xff]
    %v291 = vld [vmem:[#allocation2 + $0xa0] sm:$0xff]
    %v292 = vld [vmem:[#allocation2 + $0xa8] sm:$0xff]
    %v293 = vld [vmem:[#allocation2 + $0xb0] sm:$0xff]
    %v294 = vld [vmem:[#allocation2 + $0xb8] sm:$0xff]
    %v295 = vld [vmem:[#allocation2 + $0xc0] sm:$0xff]
    %v296 = vld [vmem:[#allocation2 + $0xc8] sm:$0xff]
    %v297 = vld [vmem:[#allocation2 + $0xd0] sm:$0xff]
    %v298 = vld [vmem:[#allocation2 + $0xd8] sm:$0xff]
    %v299 = vld [vmem:[#allocation2 + $0xe0] sm:$0xff]
    %v300 = vld [vmem:[#allocation2 + $0xe8] sm:$0xff]
    %v301 = vld [vmem:[#allocation2 + $0xf0] sm:$0xff]
    %v302 = vld [vmem:[#allocation2 + $0xf8] sm:$0xff]
    %v303 = vld [vmem:[#allocation2 + $0x100] sm:$0xff]
    %v304 = vld [vmem:[#allocation2 + $0x108] sm:$0xff]
    %v305 = vld [vmem:[#allocation2 + $0x110] sm:$0xff]
    %v306 = vld [vmem:[#allocation2 + $0x118] sm:$0xff]
    %v307 = vld [vmem:[#allocation2 + $0x120] sm:$0xff]
    %v308 = vld [vmem:[#allocation2 + $0x128] sm:$0xff]
    %v309 = vld [vmem:[#allocation2 + $0x130] sm:$0xff]
    %v310 = vld [vmem:[#allocation2 + $0x138] sm:$0xff]
    %v311 = vld [vmem:[#allocation2 + $0x140] sm:$0xff]
    %v312 = vld [vmem:[#allocation2 + $0x148] sm:$0xff]
    %v313 = vld [vmem:[#allocation2 + $0x150] sm:$0xff]
    %v314 = vld [vmem:[#allocation2 + $0x158] sm:$0xff]
    %v315 = vld [vmem:[#allocation2 + $0x160] sm:$0xff]
    %v316 = vld [vmem:[#allocation2 + $0x168] sm:$0xff]
    %v317 = vld [vmem:[#allocation2 + $0x170] sm:$0xff]
    %v318 = vld [vmem:[#allocation2 + $0x178] sm:$0xff]
    %v319 = vld [vmem:[#allocation2 + $0x180] sm:$0xff]
    %v320 = vld [vmem:[#allocation2 + $0x188] sm:$0xff]
    %v321 = vld [vmem:[#allocation2 + $0x190] sm:$0xff]
    %v322 = vld [vmem:[#allocation2 + $0x198] sm:$0xff]
    %v323 = vld [vmem:[#allocation2 + $0x1a0] sm:$0xff]
    %v324 = vld [vmem:[#allocation2 + $0x1a8] sm:$0xff]
    %v325 = vld [vmem:[#allocation2 + $0x1b0] sm:$0xff]
    %v326 = vld [vmem:[#allocation2 + $0x1b8] sm:$0xff]
    %v327 = vld [vmem:[#allocation2 + $0x1c0] sm:$0xff]
    %v328 = vld [vmem:[#allocation2 + $0x1c8] sm:$0xff]
    %v329 = vld [vmem:[#allocation2 + $0x1d0] sm:$0xff]
    %v330 = vld [vmem:[#allocation2 + $0x1d8] sm:$0xff]
    %v331 = vld [vmem:[#allocation2 + $0x1e0] sm:$0xff]
    %v332 = vld [vmem:[#allocation2 + $0x1e8] sm:$0xff]
    %v333 = vld [vmem:[#allocation2 + $0x1f0] sm:$0xff]
    %v334 = vld [vmem:[#allocation2 + $0x1f8] sm:$0xff]
    %v335 = vld [vmem:[#allocation2 + $0x200] sm:$0xff]
    %v336 = vld [vmem:[#allocation2 + $0x208] sm:$0xff]
    %v337 = vld [vmem:[#allocation2 + $0x210] sm:$0xff]
    %v338 = vld [vmem:[#allocation2 + $0x218] sm:$0xff]
    %v339 = vld [vmem:[#allocation2 + $0x220] sm:$0xff]
    %v340 = vld [vmem:[#allocation2 + $0x228] sm:$0xff]
    %v341 = vld [vmem:[#allocation2 + $0x230] sm:$0xff]
    %v342 = vld [vmem:[#allocation2 + $0x238] sm:$0xff]
    %v343 = vld [vmem:[#allocation2 + $0x240] sm:$0xff]
    %v344 = vld [vmem:[#allocation2 + $0x248] sm:$0xff]
    %v345 = vld [vmem:[#allocation2 + $0x250] sm:$0xff]
    %v346 = vld [vmem:[#allocation2 + $0x258] sm:$0xff]
    %v347 = vld [vmem:[#allocation2 + $0x260] sm:$0xff]
    %v348 = vld [vmem:[#allocation2 + $0x268] sm:$0xff]
    %v349 = vld [vmem:[#allocation2 + $0x270] sm:$0xff]
    %v350 = vld [vmem:[#allocation2 + $0x278] sm:$0xff]
    %v351 = vld [vmem:[#allocation2 + $0x280] sm:$0xff]
    %v352 = vld [vmem:[#allocation2 + $0x288] sm:$0xff]
    %v353 = vld [vmem:[#allocation2 + $0x290] sm:$0xff]
    %v354 = vld [vmem:[#allocation2 + $0x298] sm:$0xff]
    %v355 = vld [vmem:[#allocation2 + $0x2a0] sm:$0xff]
    %v356 = vld [vmem:[#allocation2 + $0x2a8] sm:$0xff]
    %v357 = vld [vmem:[#allocation2 + $0x2b0] sm:$0xff]
    %v358 = vld [vmem:[#allocation2 + $0x2b8] sm:$0xff]
    %v359 = vld [vmem:[#allocation2 + $0x2c0] sm:$0xff]
    %v360 = vld [vmem:[#allocation2 + $0x2c8] sm:$0xff]
    %v361 = vld [vmem:[#allocation2 + $0x2d0] sm:$0xff]
    %v362 = vld [vmem:[#allocation2 + $0x2d8] sm:$0xff]
    %v363 = vld [vmem:[#allocation2 + $0x2e0] sm:$0xff]
    %v364 = vld [vmem:[#allocation2 + $0x2e8] sm:$0xff]
    %v365 = vld [vmem:[#allocation2 + $0x2f0] sm:$0xff]
    %v366 = vld [vmem:[#allocation2 + $0x2f8] sm:$0xff]
    %v367 = vld [vmem:[#allocation2 + $0x300] sm:$0xff]
    %v368 = vld [vmem:[#allocation2 + $0x308] sm:$0xff]
    %v369 = vld [vmem:[#allocation2 + $0x310] sm:$0xff]
    %v370 = vld [vmem:[#allocation2 + $0x318] sm:$0xff]
    %v371 = vld [vmem:[#allocation2 + $0x320] sm:$0xff]
    %v372 = vld [vmem:[#allocation2 + $0x328] sm:$0xff]
    %v373 = vld [vmem:[#allocation2 + $0x330] sm:$0xff]
    %v374 = vld [vmem:[#allocation2 + $0x338] sm:$0xff]
    %v375 = vld [vmem:[#allocation2 + $0x340] sm:$0xff]
    %v376 = vld [vmem:[#allocation2 + $0x348] sm:$0xff]
    %v377 = vld [vmem:[#allocation2 + $0x350] sm:$0xff]
    %v378 = vld [vmem:[#allocation2 + $0x358] sm:$0xff]
    %v379 = vld [vmem:[#allocation2 + $0x360] sm:$0xff]
    %v380 = vld [vmem:[#allocation2 + $0x368] sm:$0xff]
    %v381 = vld [vmem:[#allocation2 + $0x370] sm:$0xff]
    %v382 = vld [vmem:[#allocation2 + $0x378] sm:$0xff]
    %v383 = vld [vmem:[#allocation2 + $0x380] sm:$0xff]
    %v384 = vld [vmem:[#allocation2 + $0x388] sm:$0xff]
    %v385 = vld [vmem:[#allocation2 + $0x390] sm:$0xff]
    %v386 = vld [vmem:[#allocation2 + $0x398] sm:$0xff]
    %v387 = vld [vmem:[#allocation2 + $0x3a0] sm:$0xff]
    %v388 = vld [vmem:[#allocation2 + $0x3a8] sm:$0xff]
    %v389 = vld [vmem:[#allocation2 + $0x3b0] sm:$0xff]
    %v390 = vld [vmem:[#allocation2 + $0x3b8] sm:$0xff]
    %v391 = vld [vmem:[#allocation2 + $0x3c0] sm:$0xff]
    %v392 = vld [vmem:[#allocation2 + $0x3c8] sm:$0xff]
    %v393 = vld [vmem:[#allocation2 + $0x3d0] sm:$0xff]
    %v394 = vld [vmem:[#allocation2 + $0x3d8] sm:$0xff]
    %v395 = vld [vmem:[#allocation2 + $0x3e0] sm:$0xff]
    %v396 = vld [vmem:[#allocation2 + $0x3e8] sm:$0xff]
    %v397 = vld [vmem:[#allocation2 + $0x3f0] sm:$0xff]
    %v398 = vld [vmem:[#allocation2 + $0x3f8] sm:$0xff]
    %v399 = vld [vmem:[#allocation2 + $0x400] sm:$0xff]
    %v400 = vld [vmem:[#allocation2 + $0x408] sm:$0xff]
    %v401 = vld [vmem:[#allocation2 + $0x410] sm:$0xff]
    %v402 = vld [vmem:[#allocation2 + $0x418] sm:$0xff]
    %v403 = vld [vmem:[#allocation2 + $0x420] sm:$0xff]
    %v404 = vld [vmem:[#allocation2 + $0x428] sm:$0xff]
    %v405 = vld [vmem:[#allocation2 + $0x430] sm:$0xff]
    %v406 = vld [vmem:[#allocation2 + $0x438] sm:$0xff]
    %v407 = vld [vmem:[#allocation2 + $0x440] sm:$0xff]
    %v408 = vld [vmem:[#allocation2 + $0x448] sm:$0xff]
    %v409 = vld [vmem:[#allocation2 + $0x450] sm:$0xff]
    %v410 = vld [vmem:[#allocation2 + $0x458] sm:$0xff]
    %v411 = vld [vmem:[#allocation2 + $0x460] sm:$0xff]
    %v412 = vld [vmem:[#allocation2 + $0x468] sm:$0xff]
    %v413 = vld [vmem:[#allocation2 + $0x470] sm:$0xff]
    %v414 = vld [vmem:[#allocation2 + $0x478] sm:$0xff]
    %v415 = vld [vmem:[#allocation2 + $0x480] sm:$0xff]
    %v416 = vld [vmem:[#allocation2 + $0x488] sm:$0xff]
    %v417 = vld [vmem:[#allocation2 + $0x490] sm:$0xff]
    %v418 = vld [vmem:[#allocation2 + $0x498] sm:$0xff]
    %v419 = vld [vmem:[#allocation2 + $0x4a0] sm:$0xff]
    %v420 = vld [vmem:[#allocation2 + $0x4a8] sm:$0xff]
    %v421 = vld [vmem:[#allocation2 + $0x4b0] sm:$0xff]
    %v422 = vld [vmem:[#allocation2 + $0x4b8] sm:$0xff]
    %v423 = vld [vmem:[#allocation2 + $0x4c0] sm:$0xff]
    %v424 = vld [vmem:[#allocation2 + $0x4c8] sm:$0xff]
    %v425 = vld [vmem:[#allocation2 + $0x4d0] sm:$0xff]
    %v426 = vld [vmem:[#allocation2 + $0x4d8] sm:$0xff]
    %v427 = vld [vmem:[#allocation2 + $0x4e0] sm:$0xff]
    %v428 = vld [vmem:[#allocation2 + $0x4e8] sm:$0xff]
    %v429 = vld [vmem:[#allocation2 + $0x4f0] sm:$0xff]
    %v430 = vld [vmem:[#allocation2 + $0x4f8] sm:$0xff]
    %v431 = vld [vmem:[#allocation2 + $0x500] sm:$0xff]
    %v432 = vld [vmem:[#allocation2 + $0x508] sm:$0xff]
    %v433 = vld [vmem:[#allocation2 + $0x510] sm:$0xff]
    %v434 = vld [vmem:[#allocation2 + $0x518] sm:$0xff]
    %v435 = vld [vmem:[#allocation2 + $0x520] sm:$0xff]
    %v436 = vld [vmem:[#allocation2 + $0x528] sm:$0xff]
    %v437 = vld [vmem:[#allocation2 + $0x530] sm:$0xff]
    %v438 = vld [vmem:[#allocation2 + $0x538] sm:$0xff]
    %v439 = vld [vmem:[#allocation2 + $0x540] sm:$0xff]
    %v440 = vld [vmem:[#allocation2 + $0x548] sm:$0xff]
    %v441 = vld [vmem:[#allocation2 + $0x550] sm:$0xff]
    %v442 = vld [vmem:[#allocation2 + $0x558] sm:$0xff]
    %v443 = vld [vmem:[#allocation2 + $0x560] sm:$0xff]
    %v444 = vld [vmem:[#allocation2 + $0x568] sm:$0xff]
    %v445 = vld [vmem:[#allocation2 + $0x570] sm:$0xff]
    %v446 = vld [vmem:[#allocation2 + $0x578] sm:$0xff]
    %v447 = vld [vmem:[#allocation2 + $0x580] sm:$0xff]
    %v448 = vld [vmem:[#allocation2 + $0x588] sm:$0xff]
    %v449 = vld [vmem:[#allocation2 + $0x590] sm:$0xff]
    %v450 = vld [vmem:[#allocation2 + $0x598] sm:$0xff]
    %v451 = vld [vmem:[#allocation2 + $0x5a0] sm:$0xff]
    %v452 = vld [vmem:[#allocation2 + $0x5a8] sm:$0xff]
    %v453 = vld [vmem:[#allocation2 + $0x5b0] sm:$0xff]
    %v454 = vld [vmem:[#allocation2 + $0x5b8] sm:$0xff]
    %v455 = vld [vmem:[#allocation2 + $0x5c0] sm:$0xff]
    %v456 = vld [vmem:[#allocation2 + $0x5c8] sm:$0xff]
    %v457 = vld [vmem:[#allocation2 + $0x5d0] sm:$0xff]
    %v458 = vld [vmem:[#allocation2 + $0x5d8] sm:$0xff]
    %v459 = vld [vmem:[#allocation2 + $0x5e0] sm:$0xff]
    %v460 = vld [vmem:[#allocation2 + $0x5e8] sm:$0xff]
    %v461 = vld [vmem:[#allocation2 + $0x5f0] sm:$0xff]
    %v462 = vld [vmem:[#allocation2 + $0x5f8] sm:$0xff]
    %v463 = vld [vmem:[#allocation2 + $0x600] sm:$0xff]
    %v464 = vld [vmem:[#allocation2 + $0x608] sm:$0xff]
    %v465 = vld [vmem:[#allocation2 + $0x610] sm:$0xff]
    %v466 = vld [vmem:[#allocation2 + $0x618] sm:$0xff]
    %v467 = vld [vmem:[#allocation2 + $0x620] sm:$0xff]
    %v468 = vld [vmem:[#allocation2 + $0x628] sm:$0xff]
    %v469 = vld [vmem:[#allocation2 + $0x630] sm:$0xff]
    %v470 = vld [vmem:[#allocation2 + $0x638] sm:$0xff]
    %v471 = vld [vmem:[#allocation2 + $0x640] sm:$0xff]
    %v472 = vld [vmem:[#allocation2 + $0x648] sm:$0xff]
    %v473 = vld [vmem:[#allocation2 + $0x650] sm:$0xff]
    %v474 = vld [vmem:[#allocation2 + $0x658] sm:$0xff]
    %v475 = vld [vmem:[#allocation2 + $0x660] sm:$0xff]
    %v476 = vld [vmem:[#allocation2 + $0x668] sm:$0xff]
    %v477 = vld [vmem:[#allocation2 + $0x670] sm:$0xff]
    %v478 = vld [vmem:[#allocation2 + $0x678] sm:$0xff]
    %v479 = vld [vmem:[#allocation2 + $0x680] sm:$0xff]
    %v480 = vld [vmem:[#allocation2 + $0x688] sm:$0xff]
    %v481 = vld [vmem:[#allocation2 + $0x690] sm:$0xff]
    %v482 = vld [vmem:[#allocation2 + $0x698] sm:$0xff]
    %v483 = vld [vmem:[#allocation2 + $0x6a0] sm:$0xff]
    %v484 = vld [vmem:[#allocation2 + $0x6a8] sm:$0xff]
    %v485 = vld [vmem:[#allocation2 + $0x6b0] sm:$0xff]
    %v486 = vld [vmem:[#allocation2 + $0x6b8] sm:$0xff]
    %v487 = vld [vmem:[#allocation2 + $0x6c0] sm:$0xff]
    %v488 = vld [vmem:[#allocation2 + $0x6c8] sm:$0xff]
    %v489 = vld [vmem:[#allocation2 + $0x6d0] sm:$0xff]
    %v490 = vld [vmem:[#allocation2 + $0x6d8] sm:$0xff]
    %v491 = vld [vmem:[#allocation2 + $0x6e0] sm:$0xff]
    %v492 = vld [vmem:[#allocation2 + $0x6e8] sm:$0xff]
    %v493 = vld [vmem:[#allocation2 + $0x6f0] sm:$0xff]
    %v494 = vld [vmem:[#allocation2 + $0x6f8] sm:$0xff]
    %v495 = vld [vmem:[#allocation2 + $0x700] sm:$0xff]
    %v496 = vld [vmem:[#allocation2 + $0x708] sm:$0xff]
    %v497 = vld [vmem:[#allocation2 + $0x710] sm:$0xff]
    %v498 = vld [vmem:[#allocation2 + $0x718] sm:$0xff]
    %v499 = vld [vmem:[#allocation2 + $0x720] sm:$0xff]
    %v500 = vld [vmem:[#allocation2 + $0x728] sm:$0xff]
    %v501 = vld [vmem:[#allocation2 + $0x730] sm:$0xff]
    %v502 = vld [vmem:[#allocation2 + $0x738] sm:$0xff]
    %v503 = vld [vmem:[#allocation2 + $0x740] sm:$0xff]
    %v504 = vld [vmem:[#allocation2 + $0x748] sm:$0xff]
    %v505 = vld [vmem:[#allocation2 + $0x750] sm:$0xff]
    %v506 = vld [vmem:[#allocation2 + $0x758] sm:$0xff]
    %v507 = vld [vmem:[#allocation2 + $0x760] sm:$0xff]
    %v508 = vld [vmem:[#allocation2 + $0x768] sm:$0xff]
    %v509 = vld [vmem:[#allocation2 + $0x770] sm:$0xff]
    %v510 = vld [vmem:[#allocation2 + $0x778] sm:$0xff]
    %v511 = vld [vmem:[#allocation2 + $0x780] sm:$0xff]
    %v512 = vld [vmem:[#allocation2 + $0x788] sm:$0xff]
    %v513 = vld [vmem:[#allocation2 + $0x790] sm:$0xff]
    %v514 = vld [vmem:[#allocation2 + $0x798] sm:$0xff]
    %v515 = vld [vmem:[#allocation2 + $0x7a0] sm:$0xff]
    %v516 = vld [vmem:[#allocation2 + $0x7a8] sm:$0xff]
    %v517 = vld [vmem:[#allocation2 + $0x7b0] sm:$0xff]
    %v518 = vld [vmem:[#allocation2 + $0x7b8] sm:$0xff]
    %v519 = vld [vmem:[#allocation2 + $0x7c0] sm:$0xff]
    %v520 = vld [vmem:[#allocation2 + $0x7c8] sm:$0xff]
    %v521 = vld [vmem:[#allocation2 + $0x7d0] sm:$0xff]
    %v522 = vld [vmem:[#allocation2 + $0x7d8] sm:$0xff]
    %v523 = vld [vmem:[#allocation2 + $0x7e0] sm:$0xff]
    %v524 = vld [vmem:[#allocation2 + $0x7e8] sm:$0xff]
    %v525 = vld [vmem:[#allocation2 + $0x7f0] sm:$0xff]
    %v526 = vld [vmem:[#allocation2 + $0x7f8] sm:$0xff]
    %v527 = vld [vmem:[%s1] sm:$0xff]
    %v528 = vld [vmem:[%s1 + $0x8] sm:$0xff]
    %v529 = vlaneseq
    %v530 = vand.u32 %v529, 127
    %531 = vset.pattern.permute.xlu0 0
    %532 = vperm.xlu0 %531, %v527
    %v533 = vpop.permute.xlu0 %532
    %534 = vset.pattern.permute.xlu0 0
    %535 = vperm.xlu0 %534, %v528
    %v536 = vpop.permute.xlu0 %535
    %vm537 = vcmp.eq.s32.totalorder %v533, %v530
    %vm538 = vcmp.eq.s32.totalorder %v536, %v530
    %v539 = vsel %vm537, 1, 0
    %v540 = vsel %vm538, 1, 0
    %v541 = vcvt.s32.f32 %v539
    %v542 = vcvt.s32.f32 %v540
    %v543 = vld [vmem:[#allocation4] sm:$0xff]
    %v544 = vld [vmem:[#allocation4 + $0x8] sm:$0xff]
    %v545 = vld [vmem:[#allocation4 + $0x10] sm:$0xff]
    %v546 = vld [vmem:[#allocation4 + $0x18] sm:$0xff]
    %v547 = vld [vmem:[#allocation4 + $0x20] sm:$0xff]
    %v548 = vld [vmem:[#allocation4 + $0x28] sm:$0xff]
    %v549 = vld [vmem:[#allocation4 + $0x30] sm:$0xff]
    %v550 = vld [vmem:[#allocation4 + $0x38] sm:$0xff]
    %vm551 = vcmask 130048
    %v553 = vsel %vm551, %v541, 0
    %v556 = vsel %vm551, %v542, 0
    %558 = vmatprep.subr.mxu0 0.0
    %559 = vmatpush1.msra.mxu0 0.0
    %560 = vmatprep.subr.mxu0 0.0
    %561 = vmatpush1.msra.mxu0 0.0
    %562 = vmatprep.subr.mxu0 0.0
    %563 = vmatpush1.msra.mxu0 0.0
    %564 = vmatprep.subr.mxu0 0.0
    %565 = vmatpush1.msra.mxu0 0.0
    %566 = vmatprep.subr.mxu0 0.0
    %567 = vmatpush1.msra.mxu0 0.0
    %568 = vmatprep.subr.mxu0 0.0
    %569 = vmatpush1.msra.mxu0 0.0
    %570 = vmatprep.subr.mxu0 0.0
    %571 = vmatpush1.msra.mxu0 0.0
    %572 = vmatprep.subr.mxu0 0.0
    %573 = vmatpush1.msra.mxu0 0.0
    %574 = vmatprep.subr.mxu0 0.0
    %575 = vmatpush1.msra.mxu0 0.0
    %576 = vmatprep.subr.mxu0 0.0
    %577 = vmatpush1.msra.mxu0 0.0
    %578 = vmatprep.subr.mxu0 0.0
    %579 = vmatpush1.msra.mxu0 0.0
    %580 = vmatprep.subr.mxu0 0.0
    %581 = vmatpush1.msra.mxu0 0.0
    %582 = vmatprep.subr.mxu0 0.0
    %583 = vmatpush1.msra.mxu0 0.0
    %584 = vmatprep.subr.mxu0 0.0
    %585 = vmatpush1.msra.mxu0 0.0
    %586 = vmatprep.subr.mxu0 %v548
    %587 = vmatpush1.msra.mxu0 %v547
    %588 = vmatprep.subr.mxu0 %v544
    %589 = vmatpush1.msra.mxu0 %v543
    %590 = vmatprep.subr.mxu0 0.0
    %591 = vmatpush2.msra.mxu0 0.0
    %592 = vmatprep.subr.mxu0 0.0
    %593 = vmatpush2.msra.mxu0 0.0
    %594 = vmatprep.subr.mxu0 0.0
    %595 = vmatpush2.msra.mxu0 0.0
    %596 = vmatprep.subr.mxu0 0.0
    %597 = vmatpush2.msra.mxu0 0.0
    %598 = vmatprep.subr.mxu0 0.0
    %599 = vmatpush2.msra.mxu0 0.0
    %600 = vmatprep.subr.mxu0 0.0
    %601 = vmatpush2.msra.mxu0 0.0
    %602 = vmatprep.subr.mxu0 0.0
    %603 = vmatpush2.msra.mxu0 0.0
    %604 = vmatprep.subr.mxu0 0.0
    %605 = vmatpush2.msra.mxu0 0.0
    %606 = vmatprep.subr.mxu0 0.0
    %607 = vmatpush2.msra.mxu0 0.0
    %608 = vmatprep.subr.mxu0 0.0
    %609 = vmatpush2.msra.mxu0 0.0
    %610 = vmatprep.subr.mxu0 0.0
    %611 = vmatpush2.msra.mxu0 0.0
    %612 = vmatprep.subr.mxu0 0.0
    %613 = vmatpush2.msra.mxu0 0.0
    %614 = vmatprep.subr.mxu0 0.0
    %615 = vmatpush2.msra.mxu0 0.0
    %616 = vmatprep.subr.mxu0 0.0
    %617 = vmatpush2.msra.mxu0 0.0
    %618 = vmatprep.subr.mxu0 0.0
    %619 = vmatpush2.msra.mxu0 0.0
    %620 = vmatprep.subr.mxu0 0.0
    %621 = vmatpush2.msra.mxu0 0.0
    %622 = vmatprep.mubr.f32.mxu0 0.0
    %623 = vmatmul.mubr.f32.gmra.mxu0 %v553
    %v624 = vpop.f32.mrf.mxu0
    %v625 = vadd.f32 0.0, %v624
    %v626 = vpop.f32.mrf.mxu0
    %v627 = vadd.f32 0.0, %v626
    %628 = vmatprep.mubr.f32.mxu0 0.0
    %629 = vmatmul.mubr.f32.gmra.mxu0 %v556
    %v630 = vpop.f32.mrf.mxu0
    %v631 = vadd.f32 0.0, %v630
    %v632 = vpop.f32.mrf.mxu0
    %v633 = vadd.f32 0.0, %v632
    %634 = vdwg.mxu0
    %635 = vmatprep.subr.mxu0 0.0
    %636 = vmatpush1.msra.mxu0 0.0
    %637 = vmatprep.subr.mxu0 0.0
    %638 = vmatpush1.msra.mxu0 0.0
    %639 = vmatprep.subr.mxu0 0.0
    %640 = vmatpush1.msra.mxu0 0.0
    %641 = vmatprep.subr.mxu0 0.0
    %642 = vmatpush1.msra.mxu0 0.0
    %643 = vmatprep.subr.mxu0 0.0
    %644 = vmatpush1.msra.mxu0 0.0
    %645 = vmatprep.subr.mxu0 0.0
    %646 = vmatpush1.msra.mxu0 0.0
    %647 = vmatprep.subr.mxu0 0.0
    %648 = vmatpush1.msra.mxu0 0.0
    %649 = vmatprep.subr.mxu0 0.0
    %650 = vmatpush1.msra.mxu0 0.0
    %651 = vmatprep.subr.mxu0 0.0
    %652 = vmatpush1.msra.mxu0 0.0
    %653 = vmatprep.subr.mxu0 0.0
    %654 = vmatpush1.msra.mxu0 0.0
    %655 = vmatprep.subr.mxu0 0.0
    %656 = vmatpush1.msra.mxu0 0.0
    %657 = vmatprep.subr.mxu0 0.0
    %658 = vmatpush1.msra.mxu0 0.0
    %659 = vmatprep.subr.mxu0 0.0
    %660 = vmatpush1.msra.mxu0 0.0
    %661 = vmatprep.subr.mxu0 0.0
    %662 = vmatpush1.msra.mxu0 0.0
    %663 = vmatprep.subr.mxu0 %v550
    %664 = vmatpush1.msra.mxu0 %v549
    %665 = vmatprep.subr.mxu0 %v546
    %666 = vmatpush1.msra.mxu0 %v545
    %667 = vmatprep.subr.mxu0 0.0
    %668 = vmatpush2.msra.mxu0 0.0
    %669 = vmatprep.subr.mxu0 0.0
    %670 = vmatpush2.msra.mxu0 0.0
    %671 = vmatprep.subr.mxu0 0.0
    %672 = vmatpush2.msra.mxu0 0.0
    %673 = vmatprep.subr.mxu0 0.0
    %674 = vmatpush2.msra.mxu0 0.0
    %675 = vmatprep.subr.mxu0 0.0
    %676 = vmatpush2.msra.mxu0 0.0
    %677 = vmatprep.subr.mxu0 0.0
    %678 = vmatpush2.msra.mxu0 0.0
    %679 = vmatprep.subr.mxu0 0.0
    %680 = vmatpush2.msra.mxu0 0.0
    %681 = vmatprep.subr.mxu0 0.0
    %682 = vmatpush2.msra.mxu0 0.0
    %683 = vmatprep.subr.mxu0 0.0
    %684 = vmatpush2.msra.mxu0 0.0
    %685 = vmatprep.subr.mxu0 0.0
    %686 = vmatpush2.msra.mxu0 0.0
    %687 = vmatprep.subr.mxu0 0.0
    %688 = vmatpush2.msra.mxu0 0.0
    %689 = vmatprep.subr.mxu0 0.0
    %690 = vmatpush2.msra.mxu0 0.0
    %691 = vmatprep.subr.mxu0 0.0
    %692 = vmatpush2.msra.mxu0 0.0
    %693 = vmatprep.subr.mxu0 0.0
    %694 = vmatpush2.msra.mxu0 0.0
    %695 = vmatprep.subr.mxu0 0.0
    %696 = vmatpush2.msra.mxu0 0.0
    %697 = vmatprep.subr.mxu0 0.0
    %698 = vmatpush2.msra.mxu0 0.0
    %699 = vmatprep.mubr.f32.mxu0 0.0
    %700 = vmatmul.mubr.f32.gmra.mxu0 %v553
    %v701 = vpop.f32.mrf.mxu0
    %v702 = vadd.f32 0.0, %v701
    %v703 = vpop.f32.mrf.mxu0
    %v704 = vadd.f32 0.0, %v703
    %705 = vmatprep.mubr.f32.mxu0 0.0
    %706 = vmatmul.mubr.f32.gmra.mxu0 %v556
    %v707 = vpop.f32.mrf.mxu0
    %v708 = vadd.f32 0.0, %v707
    %v709 = vpop.f32.mrf.mxu0
    %v710 = vadd.f32 0.0, %v709
    %711 = vdwg.mxu0
    %v968 = vunpack.c.l.b16 %v271
    %v969 = vunpack.c.h.b16 %v271
    %v970 = vunpack.c.l.b16 %v272
    %v971 = vunpack.c.h.b16 %v272
    %v972 = vunpack.c.l.b16 %v273
    %v973 = vunpack.c.h.b16 %v273
    %v974 = vunpack.c.l.b16 %v274
    %v975 = vunpack.c.h.b16 %v274
    %v976 = vunpack.c.l.b16 %v275
    %v977 = vunpack.c.h.b16 %v275
    %v978 = vunpack.c.l.b16 %v276
    %v979 = vunpack.c.h.b16 %v276
    %v980 = vunpack.c.l.b16 %v277
    %v981 = vunpack.c.h.b16 %v277
    %v982 = vunpack.c.l.b16 %v278
    %v983 = vunpack.c.h.b16 %v278
    %v984 = vunpack.c.l.b16 %v279
    %v985 = vunpack.c.h.b16 %v279
    %v986 = vunpack.c.l.b16 %v280
    %v987 = vunpack.c.h.b16 %v280
    %v988 = vunpack.c.l.b16 %v281
    %v989 = vunpack.c.h.b16 %v281
    %v990 = vunpack.c.l.b16 %v282
    %v991 = vunpack.c.h.b16 %v282
    %v992 = vunpack.c.l.b16 %v283
    %v993 = vunpack.c.h.b16 %v283
    %v994 = vunpack.c.l.b16 %v284
    %v995 = vunpack.c.h.b16 %v284
    %v996 = vunpack.c.l.b16 %v285
    %v997 = vunpack.c.h.b16 %v285
    %v998 = vunpack.c.l.b16 %v286
    %v999 = vunpack.c.h.b16 %v286
    %v1000 = vunpack.c.l.b16 %v287
    %v1001 = vunpack.c.h.b16 %v287
    %v1002 = vunpack.c.l.b16 %v288
    %v1003 = vunpack.c.h.b16 %v288
    %v1004 = vunpack.c.l.b16 %v289
    %v1005 = vunpack.c.h.b16 %v289
    %v1006 = vunpack.c.l.b16 %v290
    %v1007 = vunpack.c.h.b16 %v290
    %v1008 = vunpack.c.l.b16 %v291
    %v1009 = vunpack.c.h.b16 %v291
    %v1010 = vunpack.c.l.b16 %v292
    %v1011 = vunpack.c.h.b16 %v292
    %v1012 = vunpack.c.l.b16 %v293
    %v1013 = vunpack.c.h.b16 %v293
    %v1014 = vunpack.c.l.b16 %v294
    %v1015 = vunpack.c.h.b16 %v294
    %v1016 = vunpack.c.l.b16 %v295
    %v1017 = vunpack.c.h.b16 %v295
    %v1018 = vunpack.c.l.b16 %v296
    %v1019 = vunpack.c.h.b16 %v296
    %v1020 = vunpack.c.l.b16 %v297
    %v1021 = vunpack.c.h.b16 %v297
    %v1022 = vunpack.c.l.b16 %v298
    %v1023 = vunpack.c.h.b16 %v298
    %v1024 = vunpack.c.l.b16 %v299
    %v1025 = vunpack.c.h.b16 %v299
    %v1026 = vunpack.c.l.b16 %v300
    %v1027 = vunpack.c.h.b16 %v300
    %v1028 = vunpack.c.l.b16 %v301
    %v1029 = vunpack.c.h.b16 %v301
    %v1030 = vunpack.c.l.b16 %v302
    %v1031 = vunpack.c.h.b16 %v302
    %v1032 = vunpack.c.l.b16 %v303
    %v1033 = vunpack.c.h.b16 %v303
    %v1034 = vunpack.c.l.b16 %v304
    %v1035 = vunpack.c.h.b16 %v304
    %v1036 = vunpack.c.l.b16 %v305
    %v1037 = vunpack.c.h.b16 %v305
    %v1038 = vunpack.c.l.b16 %v306
    %v1039 = vunpack.c.h.b16 %v306
    %v1040 = vunpack.c.l.b16 %v307
    %v1041 = vunpack.c.h.b16 %v307
    %v1042 = vunpack.c.l.b16 %v308
    %v1043 = vunpack.c.h.b16 %v308
    %v1044 = vunpack.c.l.b16 %v309
    %v1045 = vunpack.c.h.b16 %v309
    %v1046 = vunpack.c.l.b16 %v310
    %v1047 = vunpack.c.h.b16 %v310
    %v1048 = vunpack.c.l.b16 %v311
    %v1049 = vunpack.c.h.b16 %v311
    %v1050 = vunpack.c.l.b16 %v312
    %v1051 = vunpack.c.h.b16 %v312
    %v1052 = vunpack.c.l.b16 %v313
    %v1053 = vunpack.c.h.b16 %v313
    %v1054 = vunpack.c.l.b16 %v314
    %v1055 = vunpack.c.h.b16 %v314
    %v1056 = vunpack.c.l.b16 %v315
    %v1057 = vunpack.c.h.b16 %v315
    %v1058 = vunpack.c.l.b16 %v316
    %v1059 = vunpack.c.h.b16 %v316
    %v1060 = vunpack.c.l.b16 %v317
    %v1061 = vunpack.c.h.b16 %v317
    %v1062 = vunpack.c.l.b16 %v318
    %v1063 = vunpack.c.h.b16 %v318
    %v1064 = vunpack.c.l.b16 %v319
    %v1065 = vunpack.c.h.b16 %v319
    %v1066 = vunpack.c.l.b16 %v320
    %v1067 = vunpack.c.h.b16 %v320
    %v1068 = vunpack.c.l.b16 %v321
    %v1069 = vunpack.c.h.b16 %v321
    %v1070 = vunpack.c.l.b16 %v322
    %v1071 = vunpack.c.h.b16 %v322
    %v1072 = vunpack.c.l.b16 %v323
    %v1073 = vunpack.c.h.b16 %v323
    %v1074 = vunpack.c.l.b16 %v324
    %v1075 = vunpack.c.h.b16 %v324
    %v1076 = vunpack.c.l.b16 %v325
    %v1077 = vunpack.c.h.b16 %v325
    %v1078 = vunpack.c.l.b16 %v326
    %v1079 = vunpack.c.h.b16 %v326
    %v1080 = vunpack.c.l.b16 %v327
    %v1081 = vunpack.c.h.b16 %v327
    %v1082 = vunpack.c.l.b16 %v328
    %v1083 = vunpack.c.h.b16 %v328
    %v1084 = vunpack.c.l.b16 %v329
    %v1085 = vunpack.c.h.b16 %v329
    %v1086 = vunpack.c.l.b16 %v330
    %v1087 = vunpack.c.h.b16 %v330
    %v1088 = vunpack.c.l.b16 %v331
    %v1089 = vunpack.c.h.b16 %v331
    %v1090 = vunpack.c.l.b16 %v332
    %v1091 = vunpack.c.h.b16 %v332
    %v1092 = vunpack.c.l.b16 %v333
    %v1093 = vunpack.c.h.b16 %v333
    %v1094 = vunpack.c.l.b16 %v334
    %v1095 = vunpack.c.h.b16 %v334
    %v1096 = vunpack.c.l.b16 %v335
    %v1097 = vunpack.c.h.b16 %v335
    %v1098 = vunpack.c.l.b16 %v336
    %v1099 = vunpack.c.h.b16 %v336
    %v1100 = vunpack.c.l.b16 %v337
    %v1101 = vunpack.c.h.b16 %v337
    %v1102 = vunpack.c.l.b16 %v338
    %v1103 = vunpack.c.h.b16 %v338
    %v1104 = vunpack.c.l.b16 %v339
    %v1105 = vunpack.c.h.b16 %v339
    %v1106 = vunpack.c.l.b16 %v340
    %v1107 = vunpack.c.h.b16 %v340
    %v1108 = vunpack.c.l.b16 %v341
    %v1109 = vunpack.c.h.b16 %v341
    %v1110 = vunpack.c.l.b16 %v342
    %v1111 = vunpack.c.h.b16 %v342
    %v1112 = vunpack.c.l.b16 %v343
    %v1113 = vunpack.c.h.b16 %v343
    %v1114 = vunpack.c.l.b16 %v344
    %v1115 = vunpack.c.h.b16 %v344
    %v1116 = vunpack.c.l.b16 %v345
    %v1117 = vunpack.c.h.b16 %v345
    %v1118 = vunpack.c.l.b16 %v346
    %v1119 = vunpack.c.h.b16 %v346
    %v1120 = vunpack.c.l.b16 %v347
    %v1121 = vunpack.c.h.b16 %v347
    %v1122 = vunpack.c.l.b16 %v348
    %v1123 = vunpack.c.h.b16 %v348
    %v1124 = vunpack.c.l.b16 %v349
    %v1125 = vunpack.c.h.b16 %v349
    %v1126 = vunpack.c.l.b16 %v350
    %v1127 = vunpack.c.h.b16 %v350
    %v1128 = vunpack.c.l.b16 %v351
    %v1129 = vunpack.c.h.b16 %v351
    %v1130 = vunpack.c.l.b16 %v352
    %v1131 = vunpack.c.h.b16 %v352
    %v1132 = vunpack.c.l.b16 %v353
    %v1133 = vunpack.c.h.b16 %v353
    %v1134 = vunpack.c.l.b16 %v354
    %v1135 = vunpack.c.h.b16 %v354
    %v1136 = vunpack.c.l.b16 %v355
    %v1137 = vunpack.c.h.b16 %v355
    %v1138 = vunpack.c.l.b16 %v356
    %v1139 = vunpack.c.h.b16 %v356
    %v1140 = vunpack.c.l.b16 %v357
    %v1141 = vunpack.c.h.b16 %v357
    %v1142 = vunpack.c.l.b16 %v358
    %v1143 = vunpack.c.h.b16 %v358
    %v1144 = vunpack.c.l.b16 %v359
    %v1145 = vunpack.c.h.b16 %v359
    %v1146 = vunpack.c.l.b16 %v360
    %v1147 = vunpack.c.h.b16 %v360
    %v1148 = vunpack.c.l.b16 %v361
    %v1149 = vunpack.c.h.b16 %v361
    %v1150 = vunpack.c.l.b16 %v362
    %v1151 = vunpack.c.h.b16 %v362
    %v1152 = vunpack.c.l.b16 %v363
    %v1153 = vunpack.c.h.b16 %v363
    %v1154 = vunpack.c.l.b16 %v364
    %v1155 = vunpack.c.h.b16 %v364
    %v1156 = vunpack.c.l.b16 %v365
    %v1157 = vunpack.c.h.b16 %v365
    %v1158 = vunpack.c.l.b16 %v366
    %v1159 = vunpack.c.h.b16 %v366
    %v1160 = vunpack.c.l.b16 %v367
    %v1161 = vunpack.c.h.b16 %v367
    %v1162 = vunpack.c.l.b16 %v368
    %v1163 = vunpack.c.h.b16 %v368
    %v1164 = vunpack.c.l.b16 %v369
    %v1165 = vunpack.c.h.b16 %v369
    %v1166 = vunpack.c.l.b16 %v370
    %v1167 = vunpack.c.h.b16 %v370
    %v1168 = vunpack.c.l.b16 %v371
    %v1169 = vunpack.c.h.b16 %v371
    %v1170 = vunpack.c.l.b16 %v372
    %v1171 = vunpack.c.h.b16 %v372
    %v1172 = vunpack.c.l.b16 %v373
    %v1173 = vunpack.c.h.b16 %v373
    %v1174 = vunpack.c.l.b16 %v374
    %v1175 = vunpack.c.h.b16 %v374
    %v1176 = vunpack.c.l.b16 %v375
    %v1177 = vunpack.c.h.b16 %v375
    %v1178 = vunpack.c.l.b16 %v376
    %v1179 = vunpack.c.h.b16 %v376
    %v1180 = vunpack.c.l.b16 %v377
    %v1181 = vunpack.c.h.b16 %v377
    %v1182 = vunpack.c.l.b16 %v378
    %v1183 = vunpack.c.h.b16 %v378
    %v1184 = vunpack.c.l.b16 %v379
    %v1185 = vunpack.c.h.b16 %v379
    %v1186 = vunpack.c.l.b16 %v380
    %v1187 = vunpack.c.h.b16 %v380
    %v1188 = vunpack.c.l.b16 %v381
    %v1189 = vunpack.c.h.b16 %v381
    %v1190 = vunpack.c.l.b16 %v382
    %v1191 = vunpack.c.h.b16 %v382
    %v1192 = vunpack.c.l.b16 %v383
    %v1193 = vunpack.c.h.b16 %v383
    %v1194 = vunpack.c.l.b16 %v384
    %v1195 = vunpack.c.h.b16 %v384
    %v1196 = vunpack.c.l.b16 %v385
    %v1197 = vunpack.c.h.b16 %v385
    %v1198 = vunpack.c.l.b16 %v386
    %v1199 = vunpack.c.h.b16 %v386
    %v1200 = vunpack.c.l.b16 %v387
    %v1201 = vunpack.c.h.b16 %v387
    %v1202 = vunpack.c.l.b16 %v388
    %v1203 = vunpack.c.h.b16 %v388
    %v1204 = vunpack.c.l.b16 %v389
    %v1205 = vunpack.c.h.b16 %v389
    %v1206 = vunpack.c.l.b16 %v390
    %v1207 = vunpack.c.h.b16 %v390
    %v1208 = vunpack.c.l.b16 %v391
    %v1209 = vunpack.c.h.b16 %v391
    %v1210 = vunpack.c.l.b16 %v392
    %v1211 = vunpack.c.h.b16 %v392
    %v1212 = vunpack.c.l.b16 %v393
    %v1213 = vunpack.c.h.b16 %v393
    %v1214 = vunpack.c.l.b16 %v394
    %v1215 = vunpack.c.h.b16 %v394
    %v1216 = vunpack.c.l.b16 %v395
    %v1217 = vunpack.c.h.b16 %v395
    %v1218 = vunpack.c.l.b16 %v396
    %v1219 = vunpack.c.h.b16 %v396
    %v1220 = vunpack.c.l.b16 %v397
    %v1221 = vunpack.c.h.b16 %v397
    %v1222 = vunpack.c.l.b16 %v398
    %v1223 = vunpack.c.h.b16 %v398
    %v1224 = vunpack.c.l.b16 %v399
    %v1225 = vunpack.c.h.b16 %v399
    %v1226 = vunpack.c.l.b16 %v400
    %v1227 = vunpack.c.h.b16 %v400
    %v1228 = vunpack.c.l.b16 %v401
    %v1229 = vunpack.c.h.b16 %v401
    %v1230 = vunpack.c.l.b16 %v402
    %v1231 = vunpack.c.h.b16 %v402
    %v1232 = vunpack.c.l.b16 %v403
    %v1233 = vunpack.c.h.b16 %v403
    %v1234 = vunpack.c.l.b16 %v404
    %v1235 = vunpack.c.h.b16 %v404
    %v1236 = vunpack.c.l.b16 %v405
    %v1237 = vunpack.c.h.b16 %v405
    %v1238 = vunpack.c.l.b16 %v406
    %v1239 = vunpack.c.h.b16 %v406
    %v1240 = vunpack.c.l.b16 %v407
    %v1241 = vunpack.c.h.b16 %v407
    %v1242 = vunpack.c.l.b16 %v408
    %v1243 = vunpack.c.h.b16 %v408
    %v1244 = vunpack.c.l.b16 %v409
    %v1245 = vunpack.c.h.b16 %v409
    %v1246 = vunpack.c.l.b16 %v410
    %v1247 = vunpack.c.h.b16 %v410
    %v1248 = vunpack.c.l.b16 %v411
    %v1249 = vunpack.c.h.b16 %v411
    %v1250 = vunpack.c.l.b16 %v412
    %v1251 = vunpack.c.h.b16 %v412
    %v1252 = vunpack.c.l.b16 %v413
    %v1253 = vunpack.c.h.b16 %v413
    %v1254 = vunpack.c.l.b16 %v414
    %v1255 = vunpack.c.h.b16 %v414
    %v1256 = vunpack.c.l.b16 %v415
    %v1257 = vunpack.c.h.b16 %v415
    %v1258 = vunpack.c.l.b16 %v416
    %v1259 = vunpack.c.h.b16 %v416
    %v1260 = vunpack.c.l.b16 %v417
    %v1261 = vunpack.c.h.b16 %v417
    %v1262 = vunpack.c.l.b16 %v418
    %v1263 = vunpack.c.h.b16 %v418
    %v1264 = vunpack.c.l.b16 %v419
    %v1265 = vunpack.c.h.b16 %v419
    %v1266 = vunpack.c.l.b16 %v420
    %v1267 = vunpack.c.h.b16 %v420
    %v1268 = vunpack.c.l.b16 %v421
    %v1269 = vunpack.c.h.b16 %v421
    %v1270 = vunpack.c.l.b16 %v422
    %v1271 = vunpack.c.h.b16 %v422
    %v1272 = vunpack.c.l.b16 %v423
    %v1273 = vunpack.c.h.b16 %v423
    %v1274 = vunpack.c.l.b16 %v424
    %v1275 = vunpack.c.h.b16 %v424
    %v1276 = vunpack.c.l.b16 %v425
    %v1277 = vunpack.c.h.b16 %v425
    %v1278 = vunpack.c.l.b16 %v426
    %v1279 = vunpack.c.h.b16 %v426
    %v1280 = vunpack.c.l.b16 %v427
    %v1281 = vunpack.c.h.b16 %v427
    %v1282 = vunpack.c.l.b16 %v428
    %v1283 = vunpack.c.h.b16 %v428
    %v1284 = vunpack.c.l.b16 %v429
    %v1285 = vunpack.c.h.b16 %v429
    %v1286 = vunpack.c.l.b16 %v430
    %v1287 = vunpack.c.h.b16 %v430
    %v1288 = vunpack.c.l.b16 %v431
    %v1289 = vunpack.c.h.b16 %v431
    %v1290 = vunpack.c.l.b16 %v432
    %v1291 = vunpack.c.h.b16 %v432
    %v1292 = vunpack.c.l.b16 %v433
    %v1293 = vunpack.c.h.b16 %v433
    %v1294 = vunpack.c.l.b16 %v434
    %v1295 = vunpack.c.h.b16 %v434
    %v1296 = vunpack.c.l.b16 %v435
    %v1297 = vunpack.c.h.b16 %v435
    %v1298 = vunpack.c.l.b16 %v436
    %v1299 = vunpack.c.h.b16 %v436
    %v1300 = vunpack.c.l.b16 %v437
    %v1301 = vunpack.c.h.b16 %v437
    %v1302 = vunpack.c.l.b16 %v438
    %v1303 = vunpack.c.h.b16 %v438
    %v1304 = vunpack.c.l.b16 %v439
    %v1305 = vunpack.c.h.b16 %v439
    %v1306 = vunpack.c.l.b16 %v440
    %v1307 = vunpack.c.h.b16 %v440
    %v1308 = vunpack.c.l.b16 %v441
    %v1309 = vunpack.c.h.b16 %v441
    %v1310 = vunpack.c.l.b16 %v442
    %v1311 = vunpack.c.h.b16 %v442
    %v1312 = vunpack.c.l.b16 %v443
    %v1313 = vunpack.c.h.b16 %v443
    %v1314 = vunpack.c.l.b16 %v444
    %v1315 = vunpack.c.h.b16 %v444
    %v1316 = vunpack.c.l.b16 %v445
    %v1317 = vunpack.c.h.b16 %v445
    %v1318 = vunpack.c.l.b16 %v446
    %v1319 = vunpack.c.h.b16 %v446
    %v1320 = vunpack.c.l.b16 %v447
    %v1321 = vunpack.c.h.b16 %v447
    %v1322 = vunpack.c.l.b16 %v448
    %v1323 = vunpack.c.h.b16 %v448
    %v1324 = vunpack.c.l.b16 %v449
    %v1325 = vunpack.c.h.b16 %v449
    %v1326 = vunpack.c.l.b16 %v450
    %v1327 = vunpack.c.h.b16 %v450
    %v1328 = vunpack.c.l.b16 %v451
    %v1329 = vunpack.c.h.b16 %v451
    %v1330 = vunpack.c.l.b16 %v452
    %v1331 = vunpack.c.h.b16 %v452
    %v1332 = vunpack.c.l.b16 %v453
    %v1333 = vunpack.c.h.b16 %v453
    %v1334 = vunpack.c.l.b16 %v454
    %v1335 = vunpack.c.h.b16 %v454
    %v1336 = vunpack.c.l.b16 %v455
    %v1337 = vunpack.c.h.b16 %v455
    %v1338 = vunpack.c.l.b16 %v456
    %v1339 = vunpack.c.h.b16 %v456
    %v1340 = vunpack.c.l.b16 %v457
    %v1341 = vunpack.c.h.b16 %v457
    %v1342 = vunpack.c.l.b16 %v458
    %v1343 = vunpack.c.h.b16 %v458
    %v1344 = vunpack.c.l.b16 %v459
    %v1345 = vunpack.c.h.b16 %v459
    %v1346 = vunpack.c.l.b16 %v460
    %v1347 = vunpack.c.h.b16 %v460
    %v1348 = vunpack.c.l.b16 %v461
    %v1349 = vunpack.c.h.b16 %v461
    %v1350 = vunpack.c.l.b16 %v462
    %v1351 = vunpack.c.h.b16 %v462
    %v1352 = vunpack.c.l.b16 %v463
    %v1353 = vunpack.c.h.b16 %v463
    %v1354 = vunpack.c.l.b16 %v464
    %v1355 = vunpack.c.h.b16 %v464
    %v1356 = vunpack.c.l.b16 %v465
    %v1357 = vunpack.c.h.b16 %v465
    %v1358 = vunpack.c.l.b16 %v466
    %v1359 = vunpack.c.h.b16 %v466
    %v1360 = vunpack.c.l.b16 %v467
    %v1361 = vunpack.c.h.b16 %v467
    %v1362 = vunpack.c.l.b16 %v468
    %v1363 = vunpack.c.h.b16 %v468
    %v1364 = vunpack.c.l.b16 %v469
    %v1365 = vunpack.c.h.b16 %v469
    %v1366 = vunpack.c.l.b16 %v470
    %v1367 = vunpack.c.h.b16 %v470
    %v1368 = vunpack.c.l.b16 %v471
    %v1369 = vunpack.c.h.b16 %v471
    %v1370 = vunpack.c.l.b16 %v472
    %v1371 = vunpack.c.h.b16 %v472
    %v1372 = vunpack.c.l.b16 %v473
    %v1373 = vunpack.c.h.b16 %v473
    %v1374 = vunpack.c.l.b16 %v474
    %v1375 = vunpack.c.h.b16 %v474
    %v1376 = vunpack.c.l.b16 %v475
    %v1377 = vunpack.c.h.b16 %v475
    %v1378 = vunpack.c.l.b16 %v476
    %v1379 = vunpack.c.h.b16 %v476
    %v1380 = vunpack.c.l.b16 %v477
    %v1381 = vunpack.c.h.b16 %v477
    %v1382 = vunpack.c.l.b16 %v478
    %v1383 = vunpack.c.h.b16 %v478
    %v1384 = vunpack.c.l.b16 %v479
    %v1385 = vunpack.c.h.b16 %v479
    %v1386 = vunpack.c.l.b16 %v480
    %v1387 = vunpack.c.h.b16 %v480
    %v1388 = vunpack.c.l.b16 %v481
    %v1389 = vunpack.c.h.b16 %v481
    %v1390 = vunpack.c.l.b16 %v482
    %v1391 = vunpack.c.h.b16 %v482
    %v1392 = vunpack.c.l.b16 %v483
    %v1393 = vunpack.c.h.b16 %v483
    %v1394 = vunpack.c.l.b16 %v484
    %v1395 = vunpack.c.h.b16 %v484
    %v1396 = vunpack.c.l.b16 %v485
    %v1397 = vunpack.c.h.b16 %v485
    %v1398 = vunpack.c.l.b16 %v486
    %v1399 = vunpack.c.h.b16 %v486
    %v1400 = vunpack.c.l.b16 %v487
    %v1401 = vunpack.c.h.b16 %v487
    %v1402 = vunpack.c.l.b16 %v488
    %v1403 = vunpack.c.h.b16 %v488
    %v1404 = vunpack.c.l.b16 %v489
    %v1405 = vunpack.c.h.b16 %v489
    %v1406 = vunpack.c.l.b16 %v490
    %v1407 = vunpack.c.h.b16 %v490
    %v1408 = vunpack.c.l.b16 %v491
    %v1409 = vunpack.c.h.b16 %v491
    %v1410 = vunpack.c.l.b16 %v492
    %v1411 = vunpack.c.h.b16 %v492
    %v1412 = vunpack.c.l.b16 %v493
    %v1413 = vunpack.c.h.b16 %v493
    %v1414 = vunpack.c.l.b16 %v494
    %v1415 = vunpack.c.h.b16 %v494
    %v1416 = vunpack.c.l.b16 %v495
    %v1417 = vunpack.c.h.b16 %v495
    %v1418 = vunpack.c.l.b16 %v496
    %v1419 = vunpack.c.h.b16 %v496
    %v1420 = vunpack.c.l.b16 %v497
    %v1421 = vunpack.c.h.b16 %v497
    %v1422 = vunpack.c.l.b16 %v498
    %v1423 = vunpack.c.h.b16 %v498
    %v1424 = vunpack.c.l.b16 %v499
    %v1425 = vunpack.c.h.b16 %v499
    %v1426 = vunpack.c.l.b16 %v500
    %v1427 = vunpack.c.h.b16 %v500
    %v1428 = vunpack.c.l.b16 %v501
    %v1429 = vunpack.c.h.b16 %v501
    %v1430 = vunpack.c.l.b16 %v502
    %v1431 = vunpack.c.h.b16 %v502
    %v1432 = vunpack.c.l.b16 %v503
    %v1433 = vunpack.c.h.b16 %v503
    %v1434 = vunpack.c.l.b16 %v504
    %v1435 = vunpack.c.h.b16 %v504
    %v1436 = vunpack.c.l.b16 %v505
    %v1437 = vunpack.c.h.b16 %v505
    %v1438 = vunpack.c.l.b16 %v506
    %v1439 = vunpack.c.h.b16 %v506
    %v1440 = vunpack.c.l.b16 %v507
    %v1441 = vunpack.c.h.b16 %v507
    %v1442 = vunpack.c.l.b16 %v508
    %v1443 = vunpack.c.h.b16 %v508
    %v1444 = vunpack.c.l.b16 %v509
    %v1445 = vunpack.c.h.b16 %v509
    %v1446 = vunpack.c.l.b16 %v510
    %v1447 = vunpack.c.h.b16 %v510
    %v1448 = vunpack.c.l.b16 %v511
    %v1449 = vunpack.c.h.b16 %v511
    %v1450 = vunpack.c.l.b16 %v512
    %v1451 = vunpack.c.h.b16 %v512
    %v1452 = vunpack.c.l.b16 %v513
    %v1453 = vunpack.c.h.b16 %v513
    %v1454 = vunpack.c.l.b16 %v514
    %v1455 = vunpack.c.h.b16 %v514
    %v1456 = vunpack.c.l.b16 %v515
    %v1457 = vunpack.c.h.b16 %v515
    %v1458 = vunpack.c.l.b16 %v516
    %v1459 = vunpack.c.h.b16 %v516
    %v1460 = vunpack.c.l.b16 %v517
    %v1461 = vunpack.c.h.b16 %v517
    %v1462 = vunpack.c.l.b16 %v518
    %v1463 = vunpack.c.h.b16 %v518
    %v1464 = vunpack.c.l.b16 %v519
    %v1465 = vunpack.c.h.b16 %v519
    %v1466 = vunpack.c.l.b16 %v520
    %v1467 = vunpack.c.h.b16 %v520
    %v1468 = vunpack.c.l.b16 %v521
    %v1469 = vunpack.c.h.b16 %v521
    %v1470 = vunpack.c.l.b16 %v522
    %v1471 = vunpack.c.h.b16 %v522
    %v1472 = vunpack.c.l.b16 %v523
    %v1473 = vunpack.c.h.b16 %v523
    %v1474 = vunpack.c.l.b16 %v524
    %v1475 = vunpack.c.h.b16 %v524
    %v1476 = vunpack.c.l.b16 %v525
    %v1477 = vunpack.c.h.b16 %v525
    %v1478 = vunpack.c.l.b16 %v526
    %v1479 = vunpack.c.h.b16 %v526
    %v1480 = vpack.c.b16 %v972, %v968
    %v1481 = vpack.c.b16 %v973, %v969
    %v1482 = vpack.c.b16 %v974, %v970
    %v1483 = vpack.c.b16 %v975, %v971
    %v1484 = vpack.c.b16 %v980, %v976
    %v1485 = vpack.c.b16 %v981, %v977
    %v1486 = vpack.c.b16 %v982, %v978
    %v1487 = vpack.c.b16 %v983, %v979
    %v1488 = vpack.c.b16 %v988, %v984
    %v1489 = vpack.c.b16 %v989, %v985
    %v1490 = vpack.c.b16 %v990, %v986
    %v1491 = vpack.c.b16 %v991, %v987
    %v1492 = vpack.c.b16 %v996, %v992
    %v1493 = vpack.c.b16 %v997, %v993
    %v1494 = vpack.c.b16 %v998, %v994
    %v1495 = vpack.c.b16 %v999, %v995
    %v1496 = vpack.c.b16 %v1004, %v1000
    %v1497 = vpack.c.b16 %v1005, %v1001
    %v1498 = vpack.c.b16 %v1006, %v1002
    %v1499 = vpack.c.b16 %v1007, %v1003
    %v1500 = vpack.c.b16 %v1012, %v1008
    %v1501 = vpack.c.b16 %v1013, %v1009
    %v1502 = vpack.c.b16 %v1014, %v1010
    %v1503 = vpack.c.b16 %v1015, %v1011
    %v1504 = vpack.c.b16 %v1020, %v1016
    %v1505 = vpack.c.b16 %v1021, %v1017
    %v1506 = vpack.c.b16 %v1022, %v1018
    %v1507 = vpack.c.b16 %v1023, %v1019
    %v1508 = vpack.c.b16 %v1028, %v1024
    %v1509 = vpack.c.b16 %v1029, %v1025
    %v1510 = vpack.c.b16 %v1030, %v1026
    %v1511 = vpack.c.b16 %v1031, %v1027
    %v1512 = vpack.c.b16 %v1036, %v1032
    %v1513 = vpack.c.b16 %v1037, %v1033
    %v1514 = vpack.c.b16 %v1038, %v1034
    %v1515 = vpack.c.b16 %v1039, %v1035
    %v1516 = vpack.c.b16 %v1044, %v1040
    %v1517 = vpack.c.b16 %v1045, %v1041
    %v1518 = vpack.c.b16 %v1046, %v1042
    %v1519 = vpack.c.b16 %v1047, %v1043
    %v1520 = vpack.c.b16 %v1052, %v1048
    %v1521 = vpack.c.b16 %v1053, %v1049
    %v1522 = vpack.c.b16 %v1054, %v1050
    %v1523 = vpack.c.b16 %v1055, %v1051
    %v1524 = vpack.c.b16 %v1060, %v1056
    %v1525 = vpack.c.b16 %v1061, %v1057
    %v1526 = vpack.c.b16 %v1062, %v1058
    %v1527 = vpack.c.b16 %v1063, %v1059
    %v1528 = vpack.c.b16 %v1068, %v1064
    %v1529 = vpack.c.b16 %v1069, %v1065
    %v1530 = vpack.c.b16 %v1070, %v1066
    %v1531 = vpack.c.b16 %v1071, %v1067
    %v1532 = vpack.c.b16 %v1076, %v1072
    %v1533 = vpack.c.b16 %v1077, %v1073
    %v1534 = vpack.c.b16 %v1078, %v1074
    %v1535 = vpack.c.b16 %v1079, %v1075
    %v1536 = vpack.c.b16 %v1084, %v1080
    %v1537 = vpack.c.b16 %v1085, %v1081
    %v1538 = vpack.c.b16 %v1086, %v1082
    %v1539 = vpack.c.b16 %v1087, %v1083
    %v1540 = vpack.c.b16 %v1092, %v1088
    %v1541 = vpack.c.b16 %v1093, %v1089
    %v1542 = vpack.c.b16 %v1094, %v1090
    %v1543 = vpack.c.b16 %v1095, %v1091
    %v1544 = vpack.c.b16 %v1100, %v1096
    %v1545 = vpack.c.b16 %v1101, %v1097
    %v1546 = vpack.c.b16 %v1102, %v1098
    %v1547 = vpack.c.b16 %v1103, %v1099
    %v1548 = vpack.c.b16 %v1108, %v1104
    %v1549 = vpack.c.b16 %v1109, %v1105
    %v1550 = vpack.c.b16 %v1110, %v1106
    %v1551 = vpack.c.b16 %v1111, %v1107
    %v1552 = vpack.c.b16 %v1116, %v1112
    %v1553 = vpack.c.b16 %v1117, %v1113
    %v1554 = vpack.c.b16 %v1118, %v1114
    %v1555 = vpack.c.b16 %v1119, %v1115
    %v1556 = vpack.c.b16 %v1124, %v1120
    %v1557 = vpack.c.b16 %v1125, %v1121
    %v1558 = vpack.c.b16 %v1126, %v1122
    %v1559 = vpack.c.b16 %v1127, %v1123
    %v1560 = vpack.c.b16 %v1132, %v1128
    %v1561 = vpack.c.b16 %v1133, %v1129
    %v1562 = vpack.c.b16 %v1134, %v1130
    %v1563 = vpack.c.b16 %v1135, %v1131
    %v1564 = vpack.c.b16 %v1140, %v1136
    %v1565 = vpack.c.b16 %v1141, %v1137
    %v1566 = vpack.c.b16 %v1142, %v1138
    %v1567 = vpack.c.b16 %v1143, %v1139
    %v1568 = vpack.c.b16 %v1148, %v1144
    %v1569 = vpack.c.b16 %v1149, %v1145
    %v1570 = vpack.c.b16 %v1150, %v1146
    %v1571 = vpack.c.b16 %v1151, %v1147
    %v1572 = vpack.c.b16 %v1156, %v1152
    %v1573 = vpack.c.b16 %v1157, %v1153
    %v1574 = vpack.c.b16 %v1158, %v1154
    %v1575 = vpack.c.b16 %v1159, %v1155
    %v1576 = vpack.c.b16 %v1164, %v1160
    %v1577 = vpack.c.b16 %v1165, %v1161
    %v1578 = vpack.c.b16 %v1166, %v1162
    %v1579 = vpack.c.b16 %v1167, %v1163
    %v1580 = vpack.c.b16 %v1172, %v1168
    %v1581 = vpack.c.b16 %v1173, %v1169
    %v1582 = vpack.c.b16 %v1174, %v1170
    %v1583 = vpack.c.b16 %v1175, %v1171
    %v1584 = vpack.c.b16 %v1180, %v1176
    %v1585 = vpack.c.b16 %v1181, %v1177
    %v1586 = vpack.c.b16 %v1182, %v1178
    %v1587 = vpack.c.b16 %v1183, %v1179
    %v1588 = vpack.c.b16 %v1188, %v1184
    %v1589 = vpack.c.b16 %v1189, %v1185
    %v1590 = vpack.c.b16 %v1190, %v1186
    %v1591 = vpack.c.b16 %v1191, %v1187
    %v1592 = vpack.c.b16 %v1196, %v1192
    %v1593 = vpack.c.b16 %v1197, %v1193
    %v1594 = vpack.c.b16 %v1198, %v1194
    %v1595 = vpack.c.b16 %v1199, %v1195
    %v1596 = vpack.c.b16 %v1204, %v1200
    %v1597 = vpack.c.b16 %v1205, %v1201
    %v1598 = vpack.c.b16 %v1206, %v1202
    %v1599 = vpack.c.b16 %v1207, %v1203
    %v1600 = vpack.c.b16 %v1212, %v1208
    %v1601 = vpack.c.b16 %v1213, %v1209
    %v1602 = vpack.c.b16 %v1214, %v1210
    %v1603 = vpack.c.b16 %v1215, %v1211
    %v1604 = vpack.c.b16 %v1220, %v1216
    %v1605 = vpack.c.b16 %v1221, %v1217
    %v1606 = vpack.c.b16 %v1222, %v1218
    %v1607 = vpack.c.b16 %v1223, %v1219
    %v1608 = vpack.c.b16 %v1228, %v1224
    %v1609 = vpack.c.b16 %v1229, %v1225
    %v1610 = vpack.c.b16 %v1230, %v1226
    %v1611 = vpack.c.b16 %v1231, %v1227
    %v1612 = vpack.c.b16 %v1236, %v1232
    %v1613 = vpack.c.b16 %v1237, %v1233
    %v1614 = vpack.c.b16 %v1238, %v1234
    %v1615 = vpack.c.b16 %v1239, %v1235
    %v1616 = vpack.c.b16 %v1244, %v1240
    %v1617 = vpack.c.b16 %v1245, %v1241
    %v1618 = vpack.c.b16 %v1246, %v1242
    %v1619 = vpack.c.b16 %v1247, %v1243
    %v1620 = vpack.c.b16 %v1252, %v1248
    %v1621 = vpack.c.b16 %v1253, %v1249
    %v1622 = vpack.c.b16 %v1254, %v1250
    %v1623 = vpack.c.b16 %v1255, %v1251
    %v1624 = vpack.c.b16 %v1260, %v1256
    %v1625 = vpack.c.b16 %v1261, %v1257
    %v1626 = vpack.c.b16 %v1262, %v1258
    %v1627 = vpack.c.b16 %v1263, %v1259
    %v1628 = vpack.c.b16 %v1268, %v1264
    %v1629 = vpack.c.b16 %v1269, %v1265
    %v1630 = vpack.c.b16 %v1270, %v1266
    %v1631 = vpack.c.b16 %v1271, %v1267
    %v1632 = vpack.c.b16 %v1276, %v1272
    %v1633 = vpack.c.b16 %v1277, %v1273
    %v1634 = vpack.c.b16 %v1278, %v1274
    %v1635 = vpack.c.b16 %v1279, %v1275
    %v1636 = vpack.c.b16 %v1284, %v1280
    %v1637 = vpack.c.b16 %v1285, %v1281
    %v1638 = vpack.c.b16 %v1286, %v1282
    %v1639 = vpack.c.b16 %v1287, %v1283
    %v1640 = vpack.c.b16 %v1292, %v1288
    %v1641 = vpack.c.b16 %v1293, %v1289
    %v1642 = vpack.c.b16 %v1294, %v1290
    %v1643 = vpack.c.b16 %v1295, %v1291
    %v1644 = vpack.c.b16 %v1300, %v1296
    %v1645 = vpack.c.b16 %v1301, %v1297
    %v1646 = vpack.c.b16 %v1302, %v1298
    %v1647 = vpack.c.b16 %v1303, %v1299
    %v1648 = vpack.c.b16 %v1308, %v1304
    %v1649 = vpack.c.b16 %v1309, %v1305
    %v1650 = vpack.c.b16 %v1310, %v1306
    %v1651 = vpack.c.b16 %v1311, %v1307
    %v1652 = vpack.c.b16 %v1316, %v1312
    %v1653 = vpack.c.b16 %v1317, %v1313
    %v1654 = vpack.c.b16 %v1318, %v1314
    %v1655 = vpack.c.b16 %v1319, %v1315
    %v1656 = vpack.c.b16 %v1324, %v1320
    %v1657 = vpack.c.b16 %v1325, %v1321
    %v1658 = vpack.c.b16 %v1326, %v1322
    %v1659 = vpack.c.b16 %v1327, %v1323
    %v1660 = vpack.c.b16 %v1332, %v1328
    %v1661 = vpack.c.b16 %v1333, %v1329
    %v1662 = vpack.c.b16 %v1334, %v1330
    %v1663 = vpack.c.b16 %v1335, %v1331
    %v1664 = vpack.c.b16 %v1340, %v1336
    %v1665 = vpack.c.b16 %v1341, %v1337
    %v1666 = vpack.c.b16 %v1342, %v1338
    %v1667 = vpack.c.b16 %v1343, %v1339
    %v1668 = vpack.c.b16 %v1348, %v1344
    %v1669 = vpack.c.b16 %v1349, %v1345
    %v1670 = vpack.c.b16 %v1350, %v1346
    %v1671 = vpack.c.b16 %v1351, %v1347
    %v1672 = vpack.c.b16 %v1356, %v1352
    %v1673 = vpack.c.b16 %v1357, %v1353
    %v1674 = vpack.c.b16 %v1358, %v1354
    %v1675 = vpack.c.b16 %v1359, %v1355
    %v1676 = vpack.c.b16 %v1364, %v1360
    %v1677 = vpack.c.b16 %v1365, %v1361
    %v1678 = vpack.c.b16 %v1366, %v1362
    %v1679 = vpack.c.b16 %v1367, %v1363
    %v1680 = vpack.c.b16 %v1372, %v1368
    %v1681 = vpack.c.b16 %v1373, %v1369
    %v1682 = vpack.c.b16 %v1374, %v1370
    %v1683 = vpack.c.b16 %v1375, %v1371
    %v1684 = vpack.c.b16 %v1380, %v1376
    %v1685 = vpack.c.b16 %v1381, %v1377
    %v1686 = vpack.c.b16 %v1382, %v1378
    %v1687 = vpack.c.b16 %v1383, %v1379
    %v1688 = vpack.c.b16 %v1388, %v1384
    %v1689 = vpack.c.b16 %v1389, %v1385
    %v1690 = vpack.c.b16 %v1390, %v1386
    %v1691 = vpack.c.b16 %v1391, %v1387
    %v1692 = vpack.c.b16 %v1396, %v1392
    %v1693 = vpack.c.b16 %v1397, %v1393
    %v1694 = vpack.c.b16 %v1398, %v1394
    %v1695 = vpack.c.b16 %v1399, %v1395
    %v1696 = vpack.c.b16 %v1404, %v1400
    %v1697 = vpack.c.b16 %v1405, %v1401
    %v1698 = vpack.c.b16 %v1406, %v1402
    %v1699 = vpack.c.b16 %v1407, %v1403
    %v1700 = vpack.c.b16 %v1412, %v1408
    %v1701 = vpack.c.b16 %v1413, %v1409
    %v1702 = vpack.c.b16 %v1414, %v1410
    %v1703 = vpack.c.b16 %v1415, %v1411
    %v1704 = vpack.c.b16 %v1420, %v1416
    %v1705 = vpack.c.b16 %v1421, %v1417
    %v1706 = vpack.c.b16 %v1422, %v1418
    %v1707 = vpack.c.b16 %v1423, %v1419
    %v1708 = vpack.c.b16 %v1428, %v1424
    %v1709 = vpack.c.b16 %v1429, %v1425
    %v1710 = vpack.c.b16 %v1430, %v1426
    %v1711 = vpack.c.b16 %v1431, %v1427
    %v1712 = vpack.c.b16 %v1436, %v1432
    %v1713 = vpack.c.b16 %v1437, %v1433
    %v1714 = vpack.c.b16 %v1438, %v1434
    %v1715 = vpack.c.b16 %v1439, %v1435
    %v1716 = vpack.c.b16 %v1444, %v1440
    %v1717 = vpack.c.b16 %v1445, %v1441
    %v1718 = vpack.c.b16 %v1446, %v1442
    %v1719 = vpack.c.b16 %v1447, %v1443
    %v1720 = vpack.c.b16 %v1452, %v1448
    %v1721 = vpack.c.b16 %v1453, %v1449
    %v1722 = vpack.c.b16 %v1454, %v1450
    %v1723 = vpack.c.b16 %v1455, %v1451
    %v1724 = vpack.c.b16 %v1460, %v1456
    %v1725 = vpack.c.b16 %v1461, %v1457
    %v1726 = vpack.c.b16 %v1462, %v1458
    %v1727 = vpack.c.b16 %v1463, %v1459
    %v1728 = vpack.c.b16 %v1468, %v1464
    %v1729 = vpack.c.b16 %v1469, %v1465
    %v1730 = vpack.c.b16 %v1470, %v1466
    %v1731 = vpack.c.b16 %v1471, %v1467
    %v1732 = vpack.c.b16 %v1476, %v1472
    %v1733 = vpack.c.b16 %v1477, %v1473
    %v1734 = vpack.c.b16 %v1478, %v1474
    %v1735 = vpack.c.b16 %v1479, %v1475
    %1992 = vmatprep.subr.bf16.mxu0 %v1509
    %1993 = vmatpush1.bf16.msra.mxu0 %v1508
    %1994 = vmatprep.subr.bf16.mxu0 %v1505
    %1995 = vmatpush1.bf16.msra.mxu0 %v1504
    %1996 = vmatprep.subr.bf16.mxu0 %v1501
    %1997 = vmatpush1.bf16.msra.mxu0 %v1500
    %1998 = vmatprep.subr.bf16.mxu0 %v1497
    %1999 = vmatpush1.bf16.msra.mxu0 %v1496
    %2000 = vmatprep.subr.bf16.mxu0 %v1493
    %2001 = vmatpush1.bf16.msra.mxu0 %v1492
    %2002 = vmatprep.subr.bf16.mxu0 %v1489
    %2003 = vmatpush1.bf16.msra.mxu0 %v1488
    %2004 = vmatprep.subr.bf16.mxu0 %v1485
    %2005 = vmatpush1.bf16.msra.mxu0 %v1484
    %2006 = vmatprep.subr.bf16.mxu0 %v1481
    %2007 = vmatpush1.bf16.msra.mxu0 %v1480
    %2008 = vmatprep.subr.bf16.mxu0 %v1541
    %2009 = vmatpush2.bf16.msra.mxu0 %v1540
    %2010 = vmatprep.subr.bf16.mxu0 %v1537
    %2011 = vmatpush2.bf16.msra.mxu0 %v1536
    %2012 = vmatprep.subr.bf16.mxu0 %v1533
    %2013 = vmatpush2.bf16.msra.mxu0 %v1532
    %2014 = vmatprep.subr.bf16.mxu0 %v1529
    %2015 = vmatpush2.bf16.msra.mxu0 %v1528
    %2016 = vmatprep.subr.bf16.mxu0 %v1525
    %2017 = vmatpush2.bf16.msra.mxu0 %v1524
    %2018 = vmatprep.subr.bf16.mxu0 %v1521
    %2019 = vmatpush2.bf16.msra.mxu0 %v1520
    %2020 = vmatprep.subr.bf16.mxu0 %v1517
    %2021 = vmatpush2.bf16.msra.mxu0 %v1516
    %2022 = vmatprep.subr.bf16.mxu0 %v1513
    %2023 = vmatpush2.bf16.msra.mxu0 %v1512
    %2024 = vmatprep.mubr.bf16.mxu0 %v264
    %2025 = vmatmul.mubr.bf16.gmra.mxu0 %v263
    %v2026 = vpop.f32.mrf.mxu0
    %v2027 = vadd.f32 %v625, %v2026
    %v2028 = vpop.f32.mrf.mxu0
    %v2029 = vadd.f32 %v627, %v2028
    %v2030 = vpop.f32.mrf.mxu0
    %v2031 = vadd.f32 %v631, %v2030
    %v2032 = vpop.f32.mrf.mxu0
    %v2033 = vadd.f32 %v633, %v2032
    %2034 = vdwg.mxu0
    %2035 = vmatprep.subr.bf16.mxu0 %v1573
    %2036 = vmatpush1.bf16.msra.mxu0 %v1572
    %2037 = vmatprep.subr.bf16.mxu0 %v1569
    %2038 = vmatpush1.bf16.msra.mxu0 %v1568
    %2039 = vmatprep.subr.bf16.mxu0 %v1565
    %2040 = vmatpush1.bf16.msra.mxu0 %v1564
    %2041 = vmatprep.subr.bf16.mxu0 %v1561
    %2042 = vmatpush1.bf16.msra.mxu0 %v1560
    %2043 = vmatprep.subr.bf16.mxu0 %v1557
    %2044 = vmatpush1.bf16.msra.mxu0 %v1556
    %2045 = vmatprep.subr.bf16.mxu0 %v1553
    %2046 = vmatpush1.bf16.msra.mxu0 %v1552
    %2047 = vmatprep.subr.bf16.mxu0 %v1549
    %2048 = vmatpush1.bf16.msra.mxu0 %v1548
    %2049 = vmatprep.subr.bf16.mxu0 %v1545
    %2050 = vmatpush1.bf16.msra.mxu0 %v1544
    %2051 = vmatprep.subr.bf16.mxu0 %v1605
    %2052 = vmatpush2.bf16.msra.mxu0 %v1604
    %2053 = vmatprep.subr.bf16.mxu0 %v1601
    %2054 = vmatpush2.bf16.msra.mxu0 %v1600
    %2055 = vmatprep.subr.bf16.mxu0 %v1597
    %2056 = vmatpush2.bf16.msra.mxu0 %v1596
    %2057 = vmatprep.subr.bf16.mxu0 %v1593
    %2058 = vmatpush2.bf16.msra.mxu0 %v1592
    %2059 = vmatprep.subr.bf16.mxu0 %v1589
    %2060 = vmatpush2.bf16.msra.mxu0 %v1588
    %2061 = vmatprep.subr.bf16.mxu0 %v1585
    %2062 = vmatpush2.bf16.msra.mxu0 %v1584
    %2063 = vmatprep.subr.bf16.mxu0 %v1581
    %2064 = vmatpush2.bf16.msra.mxu0 %v1580
    %2065 = vmatprep.subr.bf16.mxu0 %v1577
    %2066 = vmatpush2.bf16.msra.mxu0 %v1576
    %2067 = vmatprep.mubr.bf16.mxu0 %v266
    %2068 = vmatmul.mubr.bf16.gmra.mxu0 %v265
    %v2069 = vpop.f32.mrf.mxu0
    %v2070 = vadd.f32 %v2027, %v2069
    %v2071 = vpop.f32.mrf.mxu0
    %v2072 = vadd.f32 %v2029, %v2071
    %v2073 = vpop.f32.mrf.mxu0
    %v2074 = vadd.f32 %v2031, %v2073
    %v2075 = vpop.f32.mrf.mxu0
    %v2076 = vadd.f32 %v2033, %v2075
    %2077 = vdwg.mxu0
    %2078 = vmatprep.subr.bf16.mxu0 %v1637
    %2079 = vmatpush1.bf16.msra.mxu0 %v1636
    %2080 = vmatprep.subr.bf16.mxu0 %v1633
    %2081 = vmatpush1.bf16.msra.mxu0 %v1632
    %2082 = vmatprep.subr.bf16.mxu0 %v1629
    %2083 = vmatpush1.bf16.msra.mxu0 %v1628
    %2084 = vmatprep.subr.bf16.mxu0 %v1625
    %2085 = vmatpush1.bf16.msra.mxu0 %v1624
    %2086 = vmatprep.subr.bf16.mxu0 %v1621
    %2087 = vmatpush1.bf16.msra.mxu0 %v1620
    %2088 = vmatprep.subr.bf16.mxu0 %v1617
    %2089 = vmatpush1.bf16.msra.mxu0 %v1616
    %2090 = vmatprep.subr.bf16.mxu0 %v1613
    %2091 = vmatpush1.bf16.msra.mxu0 %v1612
    %2092 = vmatprep.subr.bf16.mxu0 %v1609
    %2093 = vmatpush1.bf16.msra.mxu0 %v1608
    %2094 = vmatprep.subr.bf16.mxu0 %v1669
    %2095 = vmatpush2.bf16.msra.mxu0 %v1668
    %2096 = vmatprep.subr.bf16.mxu0 %v1665
    %2097 = vmatpush2.bf16.msra.mxu0 %v1664
    %2098 = vmatprep.subr.bf16.mxu0 %v1661
    %2099 = vmatpush2.bf16.msra.mxu0 %v1660
    %2100 = vmatprep.subr.bf16.mxu0 %v1657
    %2101 = vmatpush2.bf16.msra.mxu0 %v1656
    %2102 = vmatprep.subr.bf16.mxu0 %v1653
    %2103 = vmatpush2.bf16.msra.mxu0 %v1652
    %2104 = vmatprep.subr.bf16.mxu0 %v1649
    %2105 = vmatpush2.bf16.msra.mxu0 %v1648
    %2106 = vmatprep.subr.bf16.mxu0 %v1645
    %2107 = vmatpush2.bf16.msra.mxu0 %v1644
    %2108 = vmatprep.subr.bf16.mxu0 %v1641
    %2109 = vmatpush2.bf16.msra.mxu0 %v1640
    %2110 = vmatprep.mubr.bf16.mxu0 %v268
    %2111 = vmatmul.mubr.bf16.gmra.mxu0 %v267
    %v2112 = vpop.f32.mrf.mxu0
    %v2113 = vadd.f32 %v2070, %v2112
    %v2114 = vpop.f32.mrf.mxu0
    %v2115 = vadd.f32 %v2072, %v2114
    %v2116 = vpop.f32.mrf.mxu0
    %v2117 = vadd.f32 %v2074, %v2116
    %v2118 = vpop.f32.mrf.mxu0
    %v2119 = vadd.f32 %v2076, %v2118
    %2120 = vdwg.mxu0
    %2121 = vmatprep.subr.bf16.mxu0 %v1701
    %2122 = vmatpush1.bf16.msra.mxu0 %v1700
    %2123 = vmatprep.subr.bf16.mxu0 %v1697
    %2124 = vmatpush1.bf16.msra.mxu0 %v1696
    %2125 = vmatprep.subr.bf16.mxu0 %v1693
    %2126 = vmatpush1.bf16.msra.mxu0 %v1692
    %2127 = vmatprep.subr.bf16.mxu0 %v1689
    %2128 = vmatpush1.bf16.msra.mxu0 %v1688
    %2129 = vmatprep.subr.bf16.mxu0 %v1685
    %2130 = vmatpush1.bf16.msra.mxu0 %v1684
    %2131 = vmatprep.subr.bf16.mxu0 %v1681
    %2132 = vmatpush1.bf16.msra.mxu0 %v1680
    %2133 = vmatprep.subr.bf16.mxu0 %v1677
    %2134 = vmatpush1.bf16.msra.mxu0 %v1676
    %2135 = vmatprep.subr.bf16.mxu0 %v1673
    %2136 = vmatpush1.bf16.msra.mxu0 %v1672
    %2137 = vmatprep.subr.bf16.mxu0 %v1733
    %2138 = vmatpush2.bf16.msra.mxu0 %v1732
    %2139 = vmatprep.subr.bf16.mxu0 %v1729
    %2140 = vmatpush2.bf16.msra.mxu0 %v1728
    %2141 = vmatprep.subr.bf16.mxu0 %v1725
    %2142 = vmatpush2.bf16.msra.mxu0 %v1724
    %2143 = vmatprep.subr.bf16.mxu0 %v1721
    %2144 = vmatpush2.bf16.msra.mxu0 %v1720
    %2145 = vmatprep.subr.bf16.mxu0 %v1717
    %2146 = vmatpush2.bf16.msra.mxu0 %v1716
    %2147 = vmatprep.subr.bf16.mxu0 %v1713
    %2148 = vmatpush2.bf16.msra.mxu0 %v1712
    %2149 = vmatprep.subr.bf16.mxu0 %v1709
    %2150 = vmatpush2.bf16.msra.mxu0 %v1708
    %2151 = vmatprep.subr.bf16.mxu0 %v1705
    %2152 = vmatpush2.bf16.msra.mxu0 %v1704
    %2153 = vmatprep.mubr.bf16.mxu0 %v270
    %2154 = vmatmul.mubr.bf16.gmra.mxu0 %v269
    %v2155 = vpop.f32.mrf.mxu0
    %v2156 = vadd.f32 %v2113, %v2155
    %v2157 = vpop.f32.mrf.mxu0
    %v2158 = vadd.f32 %v2115, %v2157
    %v2159 = vpop.f32.mrf.mxu0
    %v2160 = vadd.f32 %v2117, %v2159
    %v2161 = vpop.f32.mrf.mxu0
    %v2162 = vadd.f32 %v2119, %v2161
    %2163 = vdwg.mxu0
    %2164 = vmatprep.subr.bf16.mxu0 %v1511
    %2165 = vmatpush1.bf16.msra.mxu0 %v1510
    %2166 = vmatprep.subr.bf16.mxu0 %v1507
    %2167 = vmatpush1.bf16.msra.mxu0 %v1506
    %2168 = vmatprep.subr.bf16.mxu0 %v1503
    %2169 = vmatpush1.bf16.msra.mxu0 %v1502
    %2170 = vmatprep.subr.bf16.mxu0 %v1499
    %2171 = vmatpush1.bf16.msra.mxu0 %v1498
    %2172 = vmatprep.subr.bf16.mxu0 %v1495
    %2173 = vmatpush1.bf16.msra.mxu0 %v1494
    %2174 = vmatprep.subr.bf16.mxu0 %v1491
    %2175 = vmatpush1.bf16.msra.mxu0 %v1490
    %2176 = vmatprep.subr.bf16.mxu0 %v1487
    %2177 = vmatpush1.bf16.msra.mxu0 %v1486
    %2178 = vmatprep.subr.bf16.mxu0 %v1483
    %2179 = vmatpush1.bf16.msra.mxu0 %v1482
    %2180 = vmatprep.subr.bf16.mxu0 %v1543
    %2181 = vmatpush2.bf16.msra.mxu0 %v1542
    %2182 = vmatprep.subr.bf16.mxu0 %v1539
    %2183 = vmatpush2.bf16.msra.mxu0 %v1538
    %2184 = vmatprep.subr.bf16.mxu0 %v1535
    %2185 = vmatpush2.bf16.msra.mxu0 %v1534
    %2186 = vmatprep.subr.bf16.mxu0 %v1531
    %2187 = vmatpush2.bf16.msra.mxu0 %v1530
    %2188 = vmatprep.subr.bf16.mxu0 %v1527
    %2189 = vmatpush2.bf16.msra.mxu0 %v1526
    %2190 = vmatprep.subr.bf16.mxu0 %v1523
    %2191 = vmatpush2.bf16.msra.mxu0 %v1522
    %2192 = vmatprep.subr.bf16.mxu0 %v1519
    %2193 = vmatpush2.bf16.msra.mxu0 %v1518
    %2194 = vmatprep.subr.bf16.mxu0 %v1515
    %2195 = vmatpush2.bf16.msra.mxu0 %v1514
    %2196 = vmatprep.mubr.bf16.mxu0 %v264
    %2197 = vmatmul.mubr.bf16.gmra.mxu0 %v263
    %v2198 = vpop.f32.mrf.mxu0
    %v2199 = vadd.f32 %v702, %v2198
    %v2200 = vpop.f32.mrf.mxu0
    %v2201 = vadd.f32 %v704, %v2200
    %v2202 = vpop.f32.mrf.mxu0
    %v2203 = vadd.f32 %v708, %v2202
    %v2204 = vpop.f32.mrf.mxu0
    %v2205 = vadd.f32 %v710, %v2204
    %2206 = vdwg.mxu0
    %2207 = vmatprep.subr.bf16.mxu0 %v1575
    %2208 = vmatpush1.bf16.msra.mxu0 %v1574
    %2209 = vmatprep.subr.bf16.mxu0 %v1571
    %2210 = vmatpush1.bf16.msra.mxu0 %v1570
    %2211 = vmatprep.subr.bf16.mxu0 %v1567
    %2212 = vmatpush1.bf16.msra.mxu0 %v1566
    %2213 = vmatprep.subr.bf16.mxu0 %v1563
    %2214 = vmatpush1.bf16.msra.mxu0 %v1562
    %2215 = vmatprep.subr.bf16.mxu0 %v1559
    %2216 = vmatpush1.bf16.msra.mxu0 %v1558
    %2217 = vmatprep.subr.bf16.mxu0 %v1555
    %2218 = vmatpush1.bf16.msra.mxu0 %v1554
    %2219 = vmatprep.subr.bf16.mxu0 %v1551
    %2220 = vmatpush1.bf16.msra.mxu0 %v1550
    %2221 = vmatprep.subr.bf16.mxu0 %v1547
    %2222 = vmatpush1.bf16.msra.mxu0 %v1546
    %2223 = vmatprep.subr.bf16.mxu0 %v1607
    %2224 = vmatpush2.bf16.msra.mxu0 %v1606
    %2225 = vmatprep.subr.bf16.mxu0 %v1603
    %2226 = vmatpush2.bf16.msra.mxu0 %v1602
    %2227 = vmatprep.subr.bf16.mxu0 %v1599
    %2228 = vmatpush2.bf16.msra.mxu0 %v1598
    %2229 = vmatprep.subr.bf16.mxu0 %v1595
    %2230 = vmatpush2.bf16.msra.mxu0 %v1594
    %2231 = vmatprep.subr.bf16.mxu0 %v1591
    %2232 = vmatpush2.bf16.msra.mxu0 %v1590
    %2233 = vmatprep.subr.bf16.mxu0 %v1587
    %2234 = vmatpush2.bf16.msra.mxu0 %v1586
    %2235 = vmatprep.subr.bf16.mxu0 %v1583
    %2236 = vmatpush2.bf16.msra.mxu0 %v1582
    %2237 = vmatprep.subr.bf16.mxu0 %v1579
    %2238 = vmatpush2.bf16.msra.mxu0 %v1578
    %2239 = vmatprep.mubr.bf16.mxu0 %v266
    %2240 = vmatmul.mubr.bf16.gmra.mxu0 %v265
    %v2241 = vpop.f32.mrf.mxu0
    %v2242 = vadd.f32 %v2199, %v2241
    %v2243 = vpop.f32.mrf.mxu0
    %v2244 = vadd.f32 %v2201, %v2243
    %v2245 = vpop.f32.mrf.mxu0
    %v2246 = vadd.f32 %v2203, %v2245
    %v2247 = vpop.f32.mrf.mxu0
    %v2248 = vadd.f32 %v2205, %v2247
    %2249 = vdwg.mxu0
    %2250 = vmatprep.subr.bf16.mxu0 %v1639
    %2251 = vmatpush1.bf16.msra.mxu0 %v1638
    %2252 = vmatprep.subr.bf16.mxu0 %v1635
    %2253 = vmatpush1.bf16.msra.mxu0 %v1634
    %2254 = vmatprep.subr.bf16.mxu0 %v1631
    %2255 = vmatpush1.bf16.msra.mxu0 %v1630
    %2256 = vmatprep.subr.bf16.mxu0 %v1627
    %2257 = vmatpush1.bf16.msra.mxu0 %v1626
    %2258 = vmatprep.subr.bf16.mxu0 %v1623
    %2259 = vmatpush1.bf16.msra.mxu0 %v1622
    %2260 = vmatprep.subr.bf16.mxu0 %v1619
    %2261 = vmatpush1.bf16.msra.mxu0 %v1618
    %2262 = vmatprep.subr.bf16.mxu0 %v1615
    %2263 = vmatpush1.bf16.msra.mxu0 %v1614
    %2264 = vmatprep.subr.bf16.mxu0 %v1611
    %2265 = vmatpush1.bf16.msra.mxu0 %v1610
    %2266 = vmatprep.subr.bf16.mxu0 %v1671
    %2267 = vmatpush2.bf16.msra.mxu0 %v1670
    %2268 = vmatprep.subr.bf16.mxu0 %v1667
    %2269 = vmatpush2.bf16.msra.mxu0 %v1666
    %2270 = vmatprep.subr.bf16.mxu0 %v1663
    %2271 = vmatpush2.bf16.msra.mxu0 %v1662
    %2272 = vmatprep.subr.bf16.mxu0 %v1659
    %2273 = vmatpush2.bf16.msra.mxu0 %v1658
    %2274 = vmatprep.subr.bf16.mxu0 %v1655
    %2275 = vmatpush2.bf16.msra.mxu0 %v1654
    %2276 = vmatprep.subr.bf16.mxu0 %v1651
    %2277 = vmatpush2.bf16.msra.mxu0 %v1650
    %2278 = vmatprep.subr.bf16.mxu0 %v1647
    %2279 = vmatpush2.bf16.msra.mxu0 %v1646
    %2280 = vmatprep.subr.bf16.mxu0 %v1643
    %2281 = vmatpush2.bf16.msra.mxu0 %v1642
    %2282 = vmatprep.mubr.bf16.mxu0 %v268
    %2283 = vmatmul.mubr.bf16.gmra.mxu0 %v267
    %v2284 = vpop.f32.mrf.mxu0
    %v2285 = vadd.f32 %v2242, %v2284
    %v2286 = vpop.f32.mrf.mxu0
    %v2287 = vadd.f32 %v2244, %v2286
    %v2288 = vpop.f32.mrf.mxu0
    %v2289 = vadd.f32 %v2246, %v2288
    %v2290 = vpop.f32.mrf.mxu0
    %v2291 = vadd.f32 %v2248, %v2290
    %2292 = vdwg.mxu0
    %2293 = vmatprep.subr.bf16.mxu0 %v1703
    %2294 = vmatpush1.bf16.msra.mxu0 %v1702
    %2295 = vmatprep.subr.bf16.mxu0 %v1699
    %2296 = vmatpush1.bf16.msra.mxu0 %v1698
    %2297 = vmatprep.subr.bf16.mxu0 %v1695
    %2298 = vmatpush1.bf16.msra.mxu0 %v1694
    %2299 = vmatprep.subr.bf16.mxu0 %v1691
    %2300 = vmatpush1.bf16.msra.mxu0 %v1690
    %2301 = vmatprep.subr.bf16.mxu0 %v1687
    %2302 = vmatpush1.bf16.msra.mxu0 %v1686
    %2303 = vmatprep.subr.bf16.mxu0 %v1683
    %2304 = vmatpush1.bf16.msra.mxu0 %v1682
    %2305 = vmatprep.subr.bf16.mxu0 %v1679
    %2306 = vmatpush1.bf16.msra.mxu0 %v1678
    %2307 = vmatprep.subr.bf16.mxu0 %v1675
    %2308 = vmatpush1.bf16.msra.mxu0 %v1674
    %2309 = vmatprep.subr.bf16.mxu0 %v1735
    %2310 = vmatpush2.bf16.msra.mxu0 %v1734
    %2311 = vmatprep.subr.bf16.mxu0 %v1731
    %2312 = vmatpush2.bf16.msra.mxu0 %v1730
    %2313 = vmatprep.subr.bf16.mxu0 %v1727
    %2314 = vmatpush2.bf16.msra.mxu0 %v1726
    %2315 = vmatprep.subr.bf16.mxu0 %v1723
    %2316 = vmatpush2.bf16.msra.mxu0 %v1722
    %2317 = vmatprep.subr.bf16.mxu0 %v1719
    %2318 = vmatpush2.bf16.msra.mxu0 %v1718
    %2319 = vmatprep.subr.bf16.mxu0 %v1715
    %2320 = vmatpush2.bf16.msra.mxu0 %v1714
    %2321 = vmatprep.subr.bf16.mxu0 %v1711
    %2322 = vmatpush2.bf16.msra.mxu0 %v1710
    %2323 = vmatprep.subr.bf16.mxu0 %v1707
    %2324 = vmatpush2.bf16.msra.mxu0 %v1706
    %2325 = vmatprep.mubr.bf16.mxu0 %v270
    %2326 = vmatmul.mubr.bf16.gmra.mxu0 %v269
    %v2327 = vpop.f32.mrf.mxu0
    %v2328 = vadd.f32 %v2285, %v2327
    %v2329 = vpop.f32.mrf.mxu0
    %v2330 = vadd.f32 %v2287, %v2329
    %v2331 = vpop.f32.mrf.mxu0
    %v2332 = vadd.f32 %v2289, %v2331
    %v2333 = vpop.f32.mrf.mxu0
    %v2334 = vadd.f32 %v2291, %v2333
    %2335 = vdwg.mxu0
    %v2336 = vmul.f32 %v2156, 0.2
    %v2337 = vmul.f32 %v2158, 0.2
    %v2338 = vmul.f32 %v2328, 0.2
    %v2339 = vmul.f32 %v2330, 0.2
    %v2340 = vmul.f32 %v2160, 0.2
    %v2341 = vmul.f32 %v2162, 0.2
    %v2342 = vmul.f32 %v2332, 0.2
    %v2343 = vmul.f32 %v2334, 0.2
    %v2344 = vmax.f32 %v2156, %v2336
    %v2345 = vmax.f32 %v2158, %v2337
    %v2346 = vmax.f32 %v2328, %v2338
    %v2347 = vmax.f32 %v2330, %v2339
    %v2348 = vmax.f32 %v2160, %v2340
    %v2349 = vmax.f32 %v2162, %v2341
    %v2350 = vmax.f32 %v2332, %v2342
    %v2351 = vmax.f32 %v2334, %v2343
    %v2352 = vpack.c.bf16 %v2348, %v2344
    %v2353 = vpack.c.bf16 %v2349, %v2345
    %v2354 = vpack.c.bf16 %v2350, %v2346
    %v2355 = vpack.c.bf16 %v2351, %v2347
    %v2356 = vld [vmem:[#allocation6] sm:$0xff]
    %v2357 = vld [vmem:[#allocation6 + $0x8] sm:$0xff]
    %v2358 = vld [vmem:[#allocation6 + $0x10] sm:$0xff]
    %v2359 = vld [vmem:[#allocation6 + $0x18] sm:$0xff]
    %v2360 = vld [vmem:[#allocation6 + $0x20] sm:$0xff]
    %v2361 = vld [vmem:[#allocation6 + $0x28] sm:$0xff]
    %v2362 = vld [vmem:[#allocation6 + $0x30] sm:$0xff]
    %v2363 = vld [vmem:[#allocation6 + $0x38] sm:$0xff]
    %v2364 = vld [vmem:[#allocation6 + $0x40] sm:$0xff]
    %v2365 = vld [vmem:[#allocation6 + $0x48] sm:$0xff]
    %v2366 = vld [vmem:[#allocation6 + $0x50] sm:$0xff]
    %v2367 = vld [vmem:[#allocation6 + $0x58] sm:$0xff]
    %v2368 = vld [vmem:[#allocation6 + $0x60] sm:$0xff]
    %v2369 = vld [vmem:[#allocation6 + $0x68] sm:$0xff]
    %v2370 = vld [vmem:[#allocation6 + $0x70] sm:$0xff]
    %v2371 = vld [vmem:[#allocation6 + $0x78] sm:$0xff]
    %v2372 = vld [vmem:[#allocation6 + $0x80] sm:$0xff]
    %v2373 = vld [vmem:[#allocation6 + $0x88] sm:$0xff]
    %v2374 = vld [vmem:[#allocation6 + $0x90] sm:$0xff]
    %v2375 = vld [vmem:[#allocation6 + $0x98] sm:$0xff]
    %v2376 = vld [vmem:[#allocation6 + $0xa0] sm:$0xff]
    %v2377 = vld [vmem:[#allocation6 + $0xa8] sm:$0xff]
    %v2378 = vld [vmem:[#allocation6 + $0xb0] sm:$0xff]
    %v2379 = vld [vmem:[#allocation6 + $0xb8] sm:$0xff]
    %v2380 = vld [vmem:[#allocation6 + $0xc0] sm:$0xff]
    %v2381 = vld [vmem:[#allocation6 + $0xc8] sm:$0xff]
    %v2382 = vld [vmem:[#allocation6 + $0xd0] sm:$0xff]
    %v2383 = vld [vmem:[#allocation6 + $0xd8] sm:$0xff]
    %v2384 = vld [vmem:[#allocation6 + $0xe0] sm:$0xff]
    %v2385 = vld [vmem:[#allocation6 + $0xe8] sm:$0xff]
    %v2386 = vld [vmem:[#allocation6 + $0xf0] sm:$0xff]
    %v2387 = vld [vmem:[#allocation6 + $0xf8] sm:$0xff]
    %v2388 = vld [vmem:[#allocation6 + $0x100] sm:$0xff]
    %v2389 = vld [vmem:[#allocation6 + $0x108] sm:$0xff]
    %v2390 = vld [vmem:[#allocation6 + $0x110] sm:$0xff]
    %v2391 = vld [vmem:[#allocation6 + $0x118] sm:$0xff]
    %v2392 = vld [vmem:[#allocation6 + $0x120] sm:$0xff]
    %v2393 = vld [vmem:[#allocation6 + $0x128] sm:$0xff]
    %v2394 = vld [vmem:[#allocation6 + $0x130] sm:$0xff]
    %v2395 = vld [vmem:[#allocation6 + $0x138] sm:$0xff]
    %v2396 = vld [vmem:[#allocation6 + $0x140] sm:$0xff]
    %v2397 = vld [vmem:[#allocation6 + $0x148] sm:$0xff]
    %v2398 = vld [vmem:[#allocation6 + $0x150] sm:$0xff]
    %v2399 = vld [vmem:[#allocation6 + $0x158] sm:$0xff]
    %v2400 = vld [vmem:[#allocation6 + $0x160] sm:$0xff]
    %v2401 = vld [vmem:[#allocation6 + $0x168] sm:$0xff]
    %v2402 = vld [vmem:[#allocation6 + $0x170] sm:$0xff]
    %v2403 = vld [vmem:[#allocation6 + $0x178] sm:$0xff]
    %v2404 = vld [vmem:[#allocation6 + $0x180] sm:$0xff]
    %v2405 = vld [vmem:[#allocation6 + $0x188] sm:$0xff]
    %v2406 = vld [vmem:[#allocation6 + $0x190] sm:$0xff]
    %v2407 = vld [vmem:[#allocation6 + $0x198] sm:$0xff]
    %v2408 = vld [vmem:[#allocation6 + $0x1a0] sm:$0xff]
    %v2409 = vld [vmem:[#allocation6 + $0x1a8] sm:$0xff]
    %v2410 = vld [vmem:[#allocation6 + $0x1b0] sm:$0xff]
    %v2411 = vld [vmem:[#allocation6 + $0x1b8] sm:$0xff]
    %v2412 = vld [vmem:[#allocation6 + $0x1c0] sm:$0xff]
    %v2413 = vld [vmem:[#allocation6 + $0x1c8] sm:$0xff]
    %v2414 = vld [vmem:[#allocation6 + $0x1d0] sm:$0xff]
    %v2415 = vld [vmem:[#allocation6 + $0x1d8] sm:$0xff]
    %v2416 = vld [vmem:[#allocation6 + $0x1e0] sm:$0xff]
    %v2417 = vld [vmem:[#allocation6 + $0x1e8] sm:$0xff]
    %v2418 = vld [vmem:[#allocation6 + $0x1f0] sm:$0xff]
    %v2419 = vld [vmem:[#allocation6 + $0x1f8] sm:$0xff]
    %v2420 = vld [vmem:[%s5] sm:$0x3]
    %v2422 = vlaneseq
    %v2423 = vshrl.u32 %v2422, 7
    %v2424 = vsub.s32 0, %v2423
    %v2425 = vrot.slane %v2420, %v2424
    %v2426 = vlaneseq
    %v2427 = vshrl.u32 %v2426, 7
    %v2428 = vsub.s32 1, %v2427
    %v2429 = vrot.slane %v2420, %v2428
    %v2496 = vunpack.c.l.b16 %v2356
    %v2497 = vunpack.c.h.b16 %v2356
    %v2498 = vunpack.c.l.b16 %v2357
    %v2499 = vunpack.c.h.b16 %v2357
    %v2500 = vunpack.c.l.b16 %v2358
    %v2501 = vunpack.c.h.b16 %v2358
    %v2502 = vunpack.c.l.b16 %v2359
    %v2503 = vunpack.c.h.b16 %v2359
    %v2504 = vunpack.c.l.b16 %v2360
    %v2505 = vunpack.c.h.b16 %v2360
    %v2506 = vunpack.c.l.b16 %v2361
    %v2507 = vunpack.c.h.b16 %v2361
    %v2508 = vunpack.c.l.b16 %v2362
    %v2509 = vunpack.c.h.b16 %v2362
    %v2510 = vunpack.c.l.b16 %v2363
    %v2511 = vunpack.c.h.b16 %v2363
    %v2512 = vunpack.c.l.b16 %v2364
    %v2513 = vunpack.c.h.b16 %v2364
    %v2514 = vunpack.c.l.b16 %v2365
    %v2515 = vunpack.c.h.b16 %v2365
    %v2516 = vunpack.c.l.b16 %v2366
    %v2517 = vunpack.c.h.b16 %v2366
    %v2518 = vunpack.c.l.b16 %v2367
    %v2519 = vunpack.c.h.b16 %v2367
    %v2520 = vunpack.c.l.b16 %v2368
    %v2521 = vunpack.c.h.b16 %v2368
    %v2522 = vunpack.c.l.b16 %v2369
    %v2523 = vunpack.c.h.b16 %v2369
    %v2524 = vunpack.c.l.b16 %v2370
    %v2525 = vunpack.c.h.b16 %v2370
    %v2526 = vunpack.c.l.b16 %v2371
    %v2527 = vunpack.c.h.b16 %v2371
    %v2528 = vunpack.c.l.b16 %v2372
    %v2529 = vunpack.c.h.b16 %v2372
    %v2530 = vunpack.c.l.b16 %v2373
    %v2531 = vunpack.c.h.b16 %v2373
    %v2532 = vunpack.c.l.b16 %v2374
    %v2533 = vunpack.c.h.b16 %v2374
    %v2534 = vunpack.c.l.b16 %v2375
    %v2535 = vunpack.c.h.b16 %v2375
    %v2536 = vunpack.c.l.b16 %v2376
    %v2537 = vunpack.c.h.b16 %v2376
    %v2538 = vunpack.c.l.b16 %v2377
    %v2539 = vunpack.c.h.b16 %v2377
    %v2540 = vunpack.c.l.b16 %v2378
    %v2541 = vunpack.c.h.b16 %v2378
    %v2542 = vunpack.c.l.b16 %v2379
    %v2543 = vunpack.c.h.b16 %v2379
    %v2544 = vunpack.c.l.b16 %v2380
    %v2545 = vunpack.c.h.b16 %v2380
    %v2546 = vunpack.c.l.b16 %v2381
    %v2547 = vunpack.c.h.b16 %v2381
    %v2548 = vunpack.c.l.b16 %v2382
    %v2549 = vunpack.c.h.b16 %v2382
    %v2550 = vunpack.c.l.b16 %v2383
    %v2551 = vunpack.c.h.b16 %v2383
    %v2552 = vunpack.c.l.b16 %v2384
    %v2553 = vunpack.c.h.b16 %v2384
    %v2554 = vunpack.c.l.b16 %v2385
    %v2555 = vunpack.c.h.b16 %v2385
    %v2556 = vunpack.c.l.b16 %v2386
    %v2557 = vunpack.c.h.b16 %v2386
    %v2558 = vunpack.c.l.b16 %v2387
    %v2559 = vunpack.c.h.b16 %v2387
    %v2560 = vunpack.c.l.b16 %v2388
    %v2561 = vunpack.c.h.b16 %v2388
    %v2562 = vunpack.c.l.b16 %v2389
    %v2563 = vunpack.c.h.b16 %v2389
    %v2564 = vunpack.c.l.b16 %v2390
    %v2565 = vunpack.c.h.b16 %v2390
    %v2566 = vunpack.c.l.b16 %v2391
    %v2567 = vunpack.c.h.b16 %v2391
    %v2568 = vunpack.c.l.b16 %v2392
    %v2569 = vunpack.c.h.b16 %v2392
    %v2570 = vunpack.c.l.b16 %v2393
    %v2571 = vunpack.c.h.b16 %v2393
    %v2572 = vunpack.c.l.b16 %v2394
    %v2573 = vunpack.c.h.b16 %v2394
    %v2574 = vunpack.c.l.b16 %v2395
    %v2575 = vunpack.c.h.b16 %v2395
    %v2576 = vunpack.c.l.b16 %v2396
    %v2577 = vunpack.c.h.b16 %v2396
    %v2578 = vunpack.c.l.b16 %v2397
    %v2579 = vunpack.c.h.b16 %v2397
    %v2580 = vunpack.c.l.b16 %v2398
    %v2581 = vunpack.c.h.b16 %v2398
    %v2582 = vunpack.c.l.b16 %v2399
    %v2583 = vunpack.c.h.b16 %v2399
    %v2584 = vunpack.c.l.b16 %v2400
    %v2585 = vunpack.c.h.b16 %v2400
    %v2586 = vunpack.c.l.b16 %v2401
    %v2587 = vunpack.c.h.b16 %v2401
    %v2588 = vunpack.c.l.b16 %v2402
    %v2589 = vunpack.c.h.b16 %v2402
    %v2590 = vunpack.c.l.b16 %v2403
    %v2591 = vunpack.c.h.b16 %v2403
    %v2592 = vunpack.c.l.b16 %v2404
    %v2593 = vunpack.c.h.b16 %v2404
    %v2594 = vunpack.c.l.b16 %v2405
    %v2595 = vunpack.c.h.b16 %v2405
    %v2596 = vunpack.c.l.b16 %v2406
    %v2597 = vunpack.c.h.b16 %v2406
    %v2598 = vunpack.c.l.b16 %v2407
    %v2599 = vunpack.c.h.b16 %v2407
    %v2600 = vunpack.c.l.b16 %v2408
    %v2601 = vunpack.c.h.b16 %v2408
    %v2602 = vunpack.c.l.b16 %v2409
    %v2603 = vunpack.c.h.b16 %v2409
    %v2604 = vunpack.c.l.b16 %v2410
    %v2605 = vunpack.c.h.b16 %v2410
    %v2606 = vunpack.c.l.b16 %v2411
    %v2607 = vunpack.c.h.b16 %v2411
    %v2608 = vunpack.c.l.b16 %v2412
    %v2609 = vunpack.c.h.b16 %v2412
    %v2610 = vunpack.c.l.b16 %v2413
    %v2611 = vunpack.c.h.b16 %v2413
    %v2612 = vunpack.c.l.b16 %v2414
    %v2613 = vunpack.c.h.b16 %v2414
    %v2614 = vunpack.c.l.b16 %v2415
    %v2615 = vunpack.c.h.b16 %v2415
    %v2616 = vunpack.c.l.b16 %v2416
    %v2617 = vunpack.c.h.b16 %v2416
    %v2618 = vunpack.c.l.b16 %v2417
    %v2619 = vunpack.c.h.b16 %v2417
    %v2620 = vunpack.c.l.b16 %v2418
    %v2621 = vunpack.c.h.b16 %v2418
    %v2622 = vunpack.c.l.b16 %v2419
    %v2623 = vunpack.c.h.b16 %v2419
    %v2624 = vpack.c.b16 %v2498, %v2496
    %v2625 = vpack.c.b16 %v2499, %v2497
    %v2626 = vpack.c.b16 %v2502, %v2500
    %v2627 = vpack.c.b16 %v2503, %v2501
    %v2628 = vpack.c.b16 %v2506, %v2504
    %v2629 = vpack.c.b16 %v2507, %v2505
    %v2630 = vpack.c.b16 %v2510, %v2508
    %v2631 = vpack.c.b16 %v2511, %v2509
    %v2632 = vpack.c.b16 %v2514, %v2512
    %v2633 = vpack.c.b16 %v2515, %v2513
    %v2634 = vpack.c.b16 %v2518, %v2516
    %v2635 = vpack.c.b16 %v2519, %v2517
    %v2636 = vpack.c.b16 %v2522, %v2520
    %v2637 = vpack.c.b16 %v2523, %v2521
    %v2638 = vpack.c.b16 %v2526, %v2524
    %v2639 = vpack.c.b16 %v2527, %v2525
    %v2640 = vpack.c.b16 %v2530, %v2528
    %v2641 = vpack.c.b16 %v2531, %v2529
    %v2642 = vpack.c.b16 %v2534, %v2532
    %v2643 = vpack.c.b16 %v2535, %v2533
    %v2644 = vpack.c.b16 %v2538, %v2536
    %v2645 = vpack.c.b16 %v2539, %v2537
    %v2646 = vpack.c.b16 %v2542, %v2540
    %v2647 = vpack.c.b16 %v2543, %v2541
    %v2648 = vpack.c.b16 %v2546, %v2544
    %v2649 = vpack.c.b16 %v2547, %v2545
    %v2650 = vpack.c.b16 %v2550, %v2548
    %v2651 = vpack.c.b16 %v2551, %v2549
    %v2652 = vpack.c.b16 %v2554, %v2552
    %v2653 = vpack.c.b16 %v2555, %v2553
    %v2654 = vpack.c.b16 %v2558, %v2556
    %v2655 = vpack.c.b16 %v2559, %v2557
    %v2656 = vpack.c.b16 %v2562, %v2560
    %v2657 = vpack.c.b16 %v2563, %v2561
    %v2658 = vpack.c.b16 %v2566, %v2564
    %v2659 = vpack.c.b16 %v2567, %v2565
    %v2660 = vpack.c.b16 %v2570, %v2568
    %v2661 = vpack.c.b16 %v2571, %v2569
    %v2662 = vpack.c.b16 %v2574, %v2572
    %v2663 = vpack.c.b16 %v2575, %v2573
    %v2664 = vpack.c.b16 %v2578, %v2576
    %v2665 = vpack.c.b16 %v2579, %v2577
    %v2666 = vpack.c.b16 %v2582, %v2580
    %v2667 = vpack.c.b16 %v2583, %v2581
    %v2668 = vpack.c.b16 %v2586, %v2584
    %v2669 = vpack.c.b16 %v2587, %v2585
    %v2670 = vpack.c.b16 %v2590, %v2588
    %v2671 = vpack.c.b16 %v2591, %v2589
    %v2672 = vpack.c.b16 %v2594, %v2592
    %v2673 = vpack.c.b16 %v2595, %v2593
    %v2674 = vpack.c.b16 %v2598, %v2596
    %v2675 = vpack.c.b16 %v2599, %v2597
    %v2676 = vpack.c.b16 %v2602, %v2600
    %v2677 = vpack.c.b16 %v2603, %v2601
    %v2678 = vpack.c.b16 %v2606, %v2604
    %v2679 = vpack.c.b16 %v2607, %v2605
    %v2680 = vpack.c.b16 %v2610, %v2608
    %v2681 = vpack.c.b16 %v2611, %v2609
    %v2682 = vpack.c.b16 %v2614, %v2612
    %v2683 = vpack.c.b16 %v2615, %v2613
    %v2684 = vpack.c.b16 %v2618, %v2616
    %v2685 = vpack.c.b16 %v2619, %v2617
    %v2686 = vpack.c.b16 %v2622, %v2620
    %v2687 = vpack.c.b16 %v2623, %v2621
    %2752 = vmatprep.subr.bf16.mxu0 %v2639
    %2753 = vmatpush1.bf16.msra.mxu0 %v2638
    %2754 = vmatprep.subr.bf16.mxu0 %v2637
    %2755 = vmatpush1.bf16.msra.mxu0 %v2636
    %2756 = vmatprep.subr.bf16.mxu0 %v2635
    %2757 = vmatpush1.bf16.msra.mxu0 %v2634
    %2758 = vmatprep.subr.bf16.mxu0 %v2633
    %2759 = vmatpush1.bf16.msra.mxu0 %v2632
    %2760 = vmatprep.subr.bf16.mxu0 %v2631
    %2761 = vmatpush1.bf16.msra.mxu0 %v2630
    %2762 = vmatprep.subr.bf16.mxu0 %v2629
    %2763 = vmatpush1.bf16.msra.mxu0 %v2628
    %2764 = vmatprep.subr.bf16.mxu0 %v2627
    %2765 = vmatpush1.bf16.msra.mxu0 %v2626
    %2766 = vmatprep.subr.bf16.mxu0 %v2625
    %2767 = vmatpush1.bf16.msra.mxu0 %v2624
    %2768 = vmatprep.subr.bf16.mxu0 %v2655
    %2769 = vmatpush2.bf16.msra.mxu0 %v2654
    %2770 = vmatprep.subr.bf16.mxu0 %v2653
    %2771 = vmatpush2.bf16.msra.mxu0 %v2652
    %2772 = vmatprep.subr.bf16.mxu0 %v2651
    %2773 = vmatpush2.bf16.msra.mxu0 %v2650
    %2774 = vmatprep.subr.bf16.mxu0 %v2649
    %2775 = vmatpush2.bf16.msra.mxu0 %v2648
    %2776 = vmatprep.subr.bf16.mxu0 %v2647
    %2777 = vmatpush2.bf16.msra.mxu0 %v2646
    %2778 = vmatprep.subr.bf16.mxu0 %v2645
    %2779 = vmatpush2.bf16.msra.mxu0 %v2644
    %2780 = vmatprep.subr.bf16.mxu0 %v2643
    %2781 = vmatpush2.bf16.msra.mxu0 %v2642
    %2782 = vmatprep.subr.bf16.mxu0 %v2641
    %2783 = vmatpush2.bf16.msra.mxu0 %v2640
    %2784 = vmatprep.mubr.bf16.mxu0 %v2353
    %2785 = vmatmul.mubr.bf16.gmra.mxu0 %v2352
    %v2786 = vpop.f32.mrf.mxu0
    %v2787 = vadd.f32 %v2425, %v2786
    %v2788 = vpop.f32.mrf.mxu0
    %v2789 = vadd.f32 %v2429, %v2788
    %v2790 = vpop.f32.mrf.mxu0
    %v2791 = vadd.f32 %v2425, %v2790
    %v2792 = vpop.f32.mrf.mxu0
    %v2793 = vadd.f32 %v2429, %v2792
    %2794 = vdwg.mxu0
    %2795 = vmatprep.subr.bf16.mxu0 %v2671
    %2796 = vmatpush1.bf16.msra.mxu0 %v2670
    %2797 = vmatprep.subr.bf16.mxu0 %v2669
    %2798 = vmatpush1.bf16.msra.mxu0 %v2668
    %2799 = vmatprep.subr.bf16.mxu0 %v2667
    %2800 = vmatpush1.bf16.msra.mxu0 %v2666
    %2801 = vmatprep.subr.bf16.mxu0 %v2665
    %2802 = vmatpush1.bf16.msra.mxu0 %v2664
    %2803 = vmatprep.subr.bf16.mxu0 %v2663
    %2804 = vmatpush1.bf16.msra.mxu0 %v2662
    %2805 = vmatprep.subr.bf16.mxu0 %v2661
    %2806 = vmatpush1.bf16.msra.mxu0 %v2660
    %2807 = vmatprep.subr.bf16.mxu0 %v2659
    %2808 = vmatpush1.bf16.msra.mxu0 %v2658
    %2809 = vmatprep.subr.bf16.mxu0 %v2657
    %2810 = vmatpush1.bf16.msra.mxu0 %v2656
    %2811 = vmatprep.subr.bf16.mxu0 %v2687
    %2812 = vmatpush2.bf16.msra.mxu0 %v2686
    %2813 = vmatprep.subr.bf16.mxu0 %v2685
    %2814 = vmatpush2.bf16.msra.mxu0 %v2684
    %2815 = vmatprep.subr.bf16.mxu0 %v2683
    %2816 = vmatpush2.bf16.msra.mxu0 %v2682
    %2817 = vmatprep.subr.bf16.mxu0 %v2681
    %2818 = vmatpush2.bf16.msra.mxu0 %v2680
    %2819 = vmatprep.subr.bf16.mxu0 %v2679
    %2820 = vmatpush2.bf16.msra.mxu0 %v2678
    %2821 = vmatprep.subr.bf16.mxu0 %v2677
    %2822 = vmatpush2.bf16.msra.mxu0 %v2676
    %2823 = vmatprep.subr.bf16.mxu0 %v2675
    %2824 = vmatpush2.bf16.msra.mxu0 %v2674
    %2825 = vmatprep.subr.bf16.mxu0 %v2673
    %2826 = vmatpush2.bf16.msra.mxu0 %v2672
    %2827 = vmatprep.mubr.bf16.mxu0 %v2355
    %2828 = vmatmul.mubr.bf16.gmra.mxu0 %v2354
    %v2829 = vpop.f32.mrf.mxu0
    %v2830 = vadd.f32 %v2787, %v2829
    %v2831 = vpop.f32.mrf.mxu0
    %v2832 = vadd.f32 %v2789, %v2831
    %v2833 = vpop.f32.mrf.mxu0
    %v2834 = vadd.f32 %v2791, %v2833
    %v2835 = vpop.f32.mrf.mxu0
    %v2836 = vadd.f32 %v2793, %v2835
    %2837 = vdwg.mxu0
    %v2838 = vmul.f32 %v2830, 0.2
    %v2839 = vmul.f32 %v2832, 0.2
    %v2840 = vmul.f32 %v2834, 0.2
    %v2841 = vmul.f32 %v2836, 0.2
    %v2842 = vmax.f32 %v2830, %v2838
    %v2843 = vmax.f32 %v2832, %v2839
    %v2844 = vmax.f32 %v2834, %v2840
    %v2845 = vmax.f32 %v2836, %v2841
    %v2846 = vpack.c.bf16 %v2844, %v2842
    %v2847 = vpack.c.bf16 %v2845, %v2843
    %v2848 = vld [vmem:[%s6] sm:$0xf]
    %v2849 = vld [vmem:[%s6 + $0x4] sm:$0xf]
    %v2850 = vld [vmem:[%s6 + $0x8] sm:$0xf]
    %v2851 = vld [vmem:[%s6 + $0xc] sm:$0xf]
    %v2852 = vld [vmem:[%s6 + $0x10] sm:$0xf]
    %v2853 = vld [vmem:[%s6 + $0x14] sm:$0xf]
    %v2854 = vld [vmem:[%s6 + $0x18] sm:$0xf]
    %v2855 = vld [vmem:[%s6 + $0x1c] sm:$0xf]
    %v2856 = vld [vmem:[%s6 + $0x20] sm:$0xf]
    %v2857 = vld [vmem:[%s6 + $0x24] sm:$0xf]
    %v2858 = vld [vmem:[%s6 + $0x28] sm:$0xf]
    %v2859 = vld [vmem:[%s6 + $0x2c] sm:$0xf]
    %v2860 = vld [vmem:[%s6 + $0x30] sm:$0xf]
    %v2861 = vld [vmem:[%s6 + $0x34] sm:$0xf]
    %v2862 = vld [vmem:[%s6 + $0x38] sm:$0xf]
    %v2863 = vld [vmem:[%s6 + $0x3c] sm:$0xf]
    %v2864 = vld [vmem:[%s6 + $0x40] sm:$0xf]
    %v2865 = vld [vmem:[%s6 + $0x44] sm:$0xf]
    %v2866 = vld [vmem:[%s6 + $0x48] sm:$0xf]
    %v2867 = vld [vmem:[%s6 + $0x4c] sm:$0xf]
    %v2868 = vld [vmem:[%s6 + $0x50] sm:$0xf]
    %v2869 = vld [vmem:[%s6 + $0x54] sm:$0xf]
    %v2870 = vld [vmem:[%s6 + $0x58] sm:$0xf]
    %v2871 = vld [vmem:[%s6 + $0x5c] sm:$0xf]
    %v2872 = vld [vmem:[%s6 + $0x60] sm:$0xf]
    %v2873 = vld [vmem:[%s6 + $0x64] sm:$0xf]
    %v2874 = vld [vmem:[%s6 + $0x68] sm:$0xf]
    %v2875 = vld [vmem:[%s6 + $0x6c] sm:$0xf]
    %v2876 = vld [vmem:[%s6 + $0x70] sm:$0xf]
    %v2877 = vld [vmem:[%s6 + $0x74] sm:$0xf]
    %v2878 = vld [vmem:[%s6 + $0x78] sm:$0xf]
    %v2879 = vld [vmem:[%s6 + $0x7c] sm:$0xf]
    %v2880 = vld [vmem:[%s7] sm:$0x1]
    %v2882 = vlaneseq
    %v2883 = vshrl.u32 %v2882, 7
    %v2884 = vsub.s32 0, %v2883
    %v2885 = vrot.slane %v2880, %v2884
    %v2919 = vunpack.c.l.b16 %v2848
    %v2920 = vunpack.c.l.b16 %v2849
    %v2921 = vunpack.c.l.b16 %v2850
    %v2922 = vunpack.c.l.b16 %v2851
    %v2923 = vunpack.c.l.b16 %v2852
    %v2924 = vunpack.c.l.b16 %v2853
    %v2925 = vunpack.c.l.b16 %v2854
    %v2926 = vunpack.c.l.b16 %v2855
    %v2927 = vunpack.c.l.b16 %v2856
    %v2928 = vunpack.c.l.b16 %v2857
    %v2929 = vunpack.c.l.b16 %v2858
    %v2930 = vunpack.c.l.b16 %v2859
    %v2931 = vunpack.c.l.b16 %v2860
    %v2932 = vunpack.c.l.b16 %v2861
    %v2933 = vunpack.c.l.b16 %v2862
    %v2934 = vunpack.c.l.b16 %v2863
    %v2935 = vunpack.c.l.b16 %v2864
    %v2936 = vunpack.c.l.b16 %v2865
    %v2937 = vunpack.c.l.b16 %v2866
    %v2938 = vunpack.c.l.b16 %v2867
    %v2939 = vunpack.c.l.b16 %v2868
    %v2940 = vunpack.c.l.b16 %v2869
    %v2941 = vunpack.c.l.b16 %v2870
    %v2942 = vunpack.c.l.b16 %v2871
    %v2943 = vunpack.c.l.b16 %v2872
    %v2944 = vunpack.c.l.b16 %v2873
    %v2945 = vunpack.c.l.b16 %v2874
    %v2946 = vunpack.c.l.b16 %v2875
    %v2947 = vunpack.c.l.b16 %v2876
    %v2948 = vunpack.c.l.b16 %v2877
    %v2949 = vunpack.c.l.b16 %v2878
    %v2950 = vunpack.c.l.b16 %v2879
    %v2951 = vpack.c.b16 %v2920, %v2919
    %v2952 = vpack.c.b16 %v2922, %v2921
    %v2953 = vpack.c.b16 %v2924, %v2923
    %v2954 = vpack.c.b16 %v2926, %v2925
    %v2955 = vpack.c.b16 %v2928, %v2927
    %v2956 = vpack.c.b16 %v2930, %v2929
    %v2957 = vpack.c.b16 %v2932, %v2931
    %v2958 = vpack.c.b16 %v2934, %v2933
    %v2959 = vpack.c.b16 %v2936, %v2935
    %v2960 = vpack.c.b16 %v2938, %v2937
    %v2961 = vpack.c.b16 %v2940, %v2939
    %v2962 = vpack.c.b16 %v2942, %v2941
    %v2963 = vpack.c.b16 %v2944, %v2943
    %v2964 = vpack.c.b16 %v2946, %v2945
    %v2965 = vpack.c.b16 %v2948, %v2947
    %v2966 = vpack.c.b16 %v2950, %v2949
    %2983 = vmatprep.subr.bf16.mxu0 0
    %2984 = vmatpush1.bf16.msra.mxu0 %v2958
    %2985 = vmatprep.subr.bf16.mxu0 0
    %2986 = vmatpush1.bf16.msra.mxu0 %v2957
    %2987 = vmatprep.subr.bf16.mxu0 0
    %2988 = vmatpush1.bf16.msra.mxu0 %v2956
    %2989 = vmatprep.subr.bf16.mxu0 0
    %2990 = vmatpush1.bf16.msra.mxu0 %v2955
    %2991 = vmatprep.subr.bf16.mxu0 0
    %2992 = vmatpush1.bf16.msra.mxu0 %v2954
    %2993 = vmatprep.subr.bf16.mxu0 0
    %2994 = vmatpush1.bf16.msra.mxu0 %v2953
    %2995 = vmatprep.subr.bf16.mxu0 0
    %2996 = vmatpush1.bf16.msra.mxu0 %v2952
    %2997 = vmatprep.subr.bf16.mxu0 0
    %2998 = vmatpush1.bf16.msra.mxu0 %v2951
    %2999 = vmatprep.subr.bf16.mxu0 0
    %3000 = vmatpush2.bf16.msra.mxu0 %v2966
    %3001 = vmatprep.subr.bf16.mxu0 0
    %3002 = vmatpush2.bf16.msra.mxu0 %v2965
    %3003 = vmatprep.subr.bf16.mxu0 0
    %3004 = vmatpush2.bf16.msra.mxu0 %v2964
    %3005 = vmatprep.subr.bf16.mxu0 0
    %3006 = vmatpush2.bf16.msra.mxu0 %v2963
    %3007 = vmatprep.subr.bf16.mxu0 0
    %3008 = vmatpush2.bf16.msra.mxu0 %v2962
    %3009 = vmatprep.subr.bf16.mxu0 0
    %3010 = vmatpush2.bf16.msra.mxu0 %v2961
    %3011 = vmatprep.subr.bf16.mxu0 0
    %3012 = vmatpush2.bf16.msra.mxu0 %v2960
    %3013 = vmatprep.subr.bf16.mxu0 0
    %3014 = vmatpush2.bf16.msra.mxu0 %v2959
    %3015 = vmatprep.mubr.bf16.mxu0 %v2847
    %3016 = vmatmul.mubr.bf16.gmra.mxu0 %v2846
    %v3017 = vpop.f32.mrf.mxu0
    %v3018 = vadd.f32 %v2885, %v3017
    %v3019 = vpop.f32.mrf.mxu0
    %v3020 = vpop.f32.mrf.mxu0
    %v3021 = vadd.f32 %v2885, %v3020
    %v3022 = vpop.f32.mrf.mxu0
    %3023 = vdwg.mxu0
    %v3024 = vxor.u32 %v3018, 2147483648
    %v3025 = vxor.u32 %v3021, 2147483648
    %v3026 = vmul.f32 %v3024, 1.442695
    %v3027 = vpow.pop %v3026
    %v3028 = vmul.f32 %v3025, 1.442695
    %v3029 = vpow.pop %v3028
    %v3030 = vadd.f32 %v3027, 1.0
    %v3031 = vadd.f32 %v3029, 1.0
    %v3032 = vrcp.pop %v3030
    %v3033 = vmul.f32 1.0, %v3032
    %v3034 = vrcp.pop %v3031
    %v3035 = vmul.f32 1.0, %v3034
    %v3036 = vpack.c.bf16 %v3035, %v3033
    %v3038 = vcombine.high %v3036, %v3036
    %v3040 = vunpack.c.l.s4 1966171168
    %v3041 = vunpack.c.0.s8 %v3040
    %v3042 = vlaneseq
    %v3043 = vshrl.u32 %v3042, 7
    %v3044 = vsub.s32 %v3041, %v3043
    %v3045 = vrot.slane %v3036, %v3044
    %v3047 = vunpack.c.l.s4 1966171168
    %v3048 = vunpack.c.0.s8 %v3047
    %v3049 = vlaneseq
    %v3050 = vshrl.u32 %v3049, 7
    %v3051 = vsub.s32 %v3048, %v3050
    %v3052 = vrot.slane %v3038, %v3051
    %v3053 = vcombine.high %v3045, %v3045
    %v3054 = vcombine.high %v3052, %v3052
    %v3056 = vunpack.c.l.s4 1966171168
    %v3057 = vunpack.c.0.s8 %v3056
    %v3058 = vlaneseq
    %v3059 = vshrl.u32 %v3058, 7
    %v3060 = vsub.s32 %v3057, %v3059
    %v3061 = vrot.slane %v3045, %v3060
    %v3063 = vunpack.c.l.s4 1966171168
    %v3064 = vunpack.c.0.s8 %v3063
    %v3065 = vlaneseq
    %v3066 = vshrl.u32 %v3065, 7
    %v3067 = vsub.s32 %v3064, %v3066
    %v3068 = vrot.slane %v3052, %v3067
    %v3070 = vunpack.c.l.s4 1966171168
    %v3071 = vunpack.c.0.s8 %v3070
    %v3072 = vlaneseq
    %v3073 = vshrl.u32 %v3072, 7
    %v3074 = vsub.s32 %v3071, %v3073
    %v3075 = vrot.slane %v3053, %v3074
    %v3077 = vunpack.c.l.s4 1966171168
    %v3078 = vunpack.c.0.s8 %v3077
    %v3079 = vlaneseq
    %v3080 = vshrl.u32 %v3079, 7
    %v3081 = vsub.s32 %v3078, %v3080
    %v3082 = vrot.slane %v3054, %v3081
    %v3083 = vcombine.high %v3061, %v3061
    %v3084 = vcombine.high %v3068, %v3068
    %v3085 = vcombine.high %v3075, %v3075
    %v3086 = vcombine.high %v3082, %v3082
    %3095 = vst [vmem:[#allocation7] sm:$0x1] %v3061
    %3096 = vst [vmem:[#allocation7 + $0x1] sm:$0x1] %v3075
    %3097 = vst [vmem:[#allocation7 + $0x2] sm:$0x1] %v3083
    %3098 = vst [vmem:[#allocation7 + $0x3] sm:$0x1] %v3085
    %3099 = vst [vmem:[#allocation7 + $0x4] sm:$0x1] %v3068
    %3100 = vst [vmem:[#allocation7 + $0x5] sm:$0x1] %v3082
    %3101 = vst [vmem:[#allocation7 + $0x6] sm:$0x1] %v3084
    %3102 = vst [vmem:[#allocation7 + $0x7] sm:$0x1] %v3086
    // Predicated region
    $region46: #{_forward_impl.1} parent=1 // pred_check
      _
    $region47: #{_forward_impl.1} parent=1 // pred_check_branch
      %3104 = sbr.rel (0) target = $region49
    $region48: #{_forward_impl.1} parent=1 // pred_region
      // Predicated region
      $region50: #{_forward_impl.1} parent=48 // pred_check
        _
      $region51: #{_forward_impl.1} parent=48 // pred_check_branch
        %3106 = sbr.rel (0) target = $region53
      $region52: #{_forward_impl.1} parent=48 // pred_region
        // Predicated region
        $region54: #{_forward_impl.1} parent=52 // pred_check
          _
        $region55: #{_forward_impl.1} parent=52 // pred_check_branch
          %3108 = sbr.rel target = $region57
        $region56: #{_forward_impl.1} parent=52 // pred_region
          // Predicated region
          $region69: #{_forward_impl.1} parent=56 // pred_check
            _
          $region70: #{_forward_impl.1} parent=56 // pred_check_branch
            %3124 = sbr.rel (0) target = $region72
          $region71: #{_forward_impl.1} parent=56 // pred_region
            %s3126 = ssub.s32 2, 1
            loop: start=0, step=1, limit=1
            $region73: #{_forward_impl.1} parent=71 // loop_pre_header
              _
            $region74: #{_forward_impl.1} parent=71 // loop_header
              %s3128 = sphi 0, %s3132
              %p3129 = scmp.ge.s32.totalorder %s3128, 1
              %s3133 = sphi [#allocation7], [#allocation7]
              %s3134 = sphi %s8, %s8
            $region75: #{_forward_impl.1} parent=71 // loop_header_branch
              %3131 = sbr.rel (%p3129) target = $region79
            $region76: #{_forward_impl.1} parent=71 // loop_body
              %v3135 = vld [vmem:[%s3133] sm:%s3126]
              %3136 = vst [vmem:[%s3134] sm:%s3126] %v3135
            $region77: #{_forward_impl.1} parent=71 // loop_footer
              %s3132 = sadd.s32 1, %s3128
            $region78: #{_forward_impl.1} parent=71 // loop_footer_branch
              %3127 = sbr.rel target = $region74
            $region79: #{_forward_impl.1} parent=71 // loop_exit
              _
          $region72: #{_forward_impl.1} parent=56 // pred_fallthru
            _
        $region57: #{_forward_impl.1} parent=52 // pred_fallthru
          _
        // Predicated region
        $region58: #{_forward_impl.1} parent=52 // pred_check
          _
        $region59: #{_forward_impl.1} parent=52 // pred_check_branch
          %3110 = sbr.rel (0) target = $region61
        $region60: #{_forward_impl.1} parent=52 // pred_region
          %s3112 = ssub.s32 2, 1
          loop: start=0, step=1, limit=1
          $region62: #{_forward_impl.1} parent=60 // loop_pre_header
            _
          $region63: #{_forward_impl.1} parent=60 // loop_header
            %s3114 = sphi 0, %s3118
            %p3115 = scmp.ge.s32.totalorder %s3114, 1
            %s3119 = sphi [#allocation7], [#allocation7]
            %s3120 = sphi %s8, %s8
          $region64: #{_forward_impl.1} parent=60 // loop_header_branch
            %3117 = sbr.rel (%p3115) target = $region68
          $region65: #{_forward_impl.1} parent=60 // loop_body
            %v3121 = vld [vmem:[%s3119] sm:%s3112]
            %3122 = vst [vmem:[%s3120] sm:%s3112] %v3121
          $region66: #{_forward_impl.1} parent=60 // loop_footer
            %s3118 = sadd.s32 1, %s3114
          $region67: #{_forward_impl.1} parent=60 // loop_footer_branch
            %3113 = sbr.rel target = $region63
          $region68: #{_forward_impl.1} parent=60 // loop_exit
            _
        $region61: #{_forward_impl.1} parent=52 // pred_fallthru
          _
      $region53: #{_forward_impl.1} parent=48 // pred_fallthru
        _
      %3137 = vnop
    $region49: #{_forward_impl.1} parent=1 // pred_fallthru
      _
    // Predicated region
    $region80: #{_forward_impl.1} parent=1 // pred_check
      _
    $region81: #{_forward_impl.1} parent=1 // pred_check_branch
      %3139 = sbr.rel (0) target = $region83
    $region82: #{_forward_impl.1} parent=1 // pred_region
      _
    $region83: #{_forward_impl.1} parent=1 // pred_fallthru
      _
    %3140 = vsyncpa [#allocation3], 1
    %3141 = vsyncpa [#allocation5], 1

</llo_original>
